<compile_context>
chip_gen: v5e
topology: v5e:2x2
jax: 0.10.0
libtpu: 0.0.40
codegen_flags: <defaults>
</compile_context>

<pallas_src>
from functools import partial

import jax
import jax.numpy as jnp
from jax.experimental import pallas as pl
from jax.experimental.pallas import tpu as pltpu

NEG_SLOPE = 0.01           # torch.nn.functional.leaky_relu default
LANE = 128                 # vreg lane width
N_ALIGN = 256              # MXU fill target (256 on v6e/v7x, multiple of 128 for v5e)


def _round_up(v, m):
    return (v + m - 1) // m * m


def _leaky_relu(x):
    return jnp.where(x >= 0, x, NEG_SLOPE * x)


def _pad_cols(m, width):
    return jnp.pad(m, ((0, 0), (0, width - m.shape[1])))


def _pad_rows(m, height):
    return jnp.pad(m, ((0, height - m.shape[0]), (0, 0)))


# -----------------------------------------------------------------------------
# Fused kernel: all EGConv('symnorm') layers + leaky_relu + JK('cat')
#               + 'add' pooling + problemType concat + fc1/fc2/fcLast MLP
# -----------------------------------------------------------------------------
def fused_egc_kernel(*refs, num_layers, num_bases, mod_pad, f_pad, should_jump):
    x_ref, a_ref = refs[0], refs[1]
    layer_refs = [refs[2 + 3 * l: 5 + 3 * l] for l in range(num_layers)]
    (oh_ref, pt_ref, w1_ref, w1p_ref, b1_ref,
     w2_ref, b2_ref, w3_ref, b3_ref, o_ref, jump_ref) = refs[2 + 3 * num_layers:]

    a_bf = a_ref[...]                     # [Np, Np] bf16 — read once, VMEM-resident
    bm = num_bases * mod_pad

    h_bf = x_ref[...]                     # [Np, f_pad] bf16 (pre-cast in wrapper)
    if should_jump:
        jump_ref[:, 0:f_pad] = h_bf       # JK('cat') slab 0: 128-aligned, lane-dense
    off = f_pad

    for wf_ref, bce_ref, bias_ref in layer_refs:
        # One fused MXU pass over h: columns = [bases_expanded | weightings_expanded].
        fused = jnp.dot(h_bf, wf_ref[...],
                        preferred_element_type=jnp.float32)          # [Np, 2*B*mp]
        bases_exp = fused[:, :bm]                                     # [Np, B*mp]
        w_exp = fused[:, bm:] + bce_ref[...]                          # [Np, B*mp]
        # 'symnorm' propagate (GCN-normalized adjacency) on the expanded bases.
        agg_exp = jnp.dot(a_bf, bases_exp.astype(jnp.bfloat16),
                          preferred_element_type=jnp.float32)         # [Np, B*mp]
        # Head/base combine.  mod_pad is a multiple of 128, so every slab is a
        # whole number of vregs: pure VALU multiplies + adds, no XLU slicing.
        prod = w_exp * agg_exp
        out = prod[:, 0:mod_pad]
        for b in range(1, num_bases):
            out = out + prod[:, b * mod_pad:(b + 1) * mod_pad]
        h = _leaky_relu(out + bias_ref[...])                          # EGConv + act
        h_bf = h.astype(jnp.bfloat16)
        if should_jump:
            jump_ref[:, off:off + mod_pad] = h_bf                     # next JK slab
            off += mod_pad

    x_jump = jump_ref[...] if should_jump else h_bf                   # [Np, Dj_pad]

    # 'add' graph pooling as a one-hot matmul (0/1 entries are exact in bf16).
    pooled = jnp.dot(oh_ref[...], x_jump,
                     preferred_element_type=jnp.float32)              # [G, Dj_pad]

    # fc1 (problemType column folded in as a rank-1 term) -> fc2 -> fcLast.
    hfc = (jnp.dot(pooled.astype(jnp.bfloat16), w1_ref[...],
                   preferred_element_type=jnp.float32)
           + pt_ref[...] * w1p_ref[...] + b1_ref[...])
    hfc = _leaky_relu(hfc)
    hfc = _leaky_relu(jnp.dot(hfc.astype(jnp.bfloat16), w2_ref[...],
                              preferred_element_type=jnp.float32) + b2_ref[...])
    # Output is padded to 128 lanes -> unmasked lane-dense store; wrapper slices.
    o_ref[...] = (jnp.dot(hfc.astype(jnp.bfloat16), w3_ref[...],
                          preferred_element_type=jnp.float32) + b3_ref[...])


# -----------------------------------------------------------------------------
# Glue: exact weight expansion + padding, graph preprocessing, params, forward
# -----------------------------------------------------------------------------
def _expand_layer(layer, num_heads, num_bases, fin_pad, mod_pad):
    """Pre-fuse W_bases / W_comb by exact column duplication, zero-padded so
    every base slab is a whole 128-lane block.  Bit-exact rewrite of EGConv's
    head/base combine into an elementwise multiply."""
    wb, wc, bc, bias = layer["W_bases"], layer["W_comb"], layer["b_comb"], layer["bias"]
    mod = bias.shape[1]
    fh = mod // num_heads
    wb_exp, wc_exp, bc_exp = [], [], []
    for b in range(num_bases):
        # bases block b replicated across heads: col h*fh+f <- wb[:, b*fh+f]
        wb_exp.append(_pad_cols(jnp.tile(wb[:, b * fh:(b + 1) * fh], (1, num_heads)),
                                mod_pad))
        # weighting col for (h, b) replicated across fh: col h*fh+f <- wc[:, h*B+b]
        wc_exp.append(_pad_cols(jnp.repeat(wc[:, b::num_bases], fh, axis=1), mod_pad))
        bc_exp.append(_pad_cols(jnp.repeat(bc[:, b::num_bases], fh, axis=1), mod_pad))
    w_fused = _pad_rows(jnp.concatenate(wb_exp + wc_exp, axis=1), fin_pad)
    b_comb_exp = jnp.concatenate(bc_exp, axis=1)          # [1, B*mod_pad]
    bias_pad = _pad_cols(bias, mod_pad)                   # [1, mod_pad]
    return w_fused, b_comb_exp, bias_pad                  # [fin_pad, 2*B*mod_pad], ...


def build_sym_norm_adj(edge_index, num_nodes):
    """Dense D^{-1/2} (A + I) D^{-1/2} (gcn_norm with self loops, undirected)."""
    src, dst = edge_index[0], edge_index[1]
    a = jnp.zeros((num_nodes, num_nodes), jnp.float32)
    a = a.at[dst, src].set(1.0)
    a = a.at[src, dst].set(1.0)
    a = a + jnp.eye(num_nodes, dtype=jnp.float32)
    deg = a.sum(axis=1)
    dinv = 1.0 / jnp.sqrt(deg)
    return a * dinv[:, None] * dinv[None, :]


def init_params(key, passes, input_size, output_size, num_pools,
                num_heads=8, num_bases=4, should_jump=True):
    mod = input_size - input_size % num_heads
    fh = mod // num_heads
    keys = iter(jax.random.split(key, passes * 4 + 8))

    def rnd(shape, scale=0.1):
        return scale * jax.random.normal(next(keys), shape, dtype=jnp.float32)

    egcs = []
    for i in range(passes):
        fin = input_size if i == 0 else mod
        egcs.append(dict(
            W_bases=rnd((fin, num_bases * fh)),
            W_comb=rnd((fin, num_heads * num_bases)),
            b_comb=rnd((1, num_heads * num_bases)),
            bias=rnd((1, mod)),
        ))

    jump_dim = passes * mod + input_size if should_jump else mod
    fc_in = jump_dim * num_pools + 1
    hid = fc_in // 2
    mlp = dict(
        W1x=rnd((jump_dim * num_pools, hid)),   # fc1 weight, node-feature part
        W1p=rnd((1, hid)),                      # fc1 weight, problemType column
        b1=rnd((1, hid)),
        W2=rnd((hid, hid)), b2=rnd((1, hid)),
        W3=rnd((hid, output_size)), b3=rnd((1, output_size)),
    )
    return dict(egcs=egcs, mlp=mlp, should_jump=should_jump,
                num_heads=num_heads, num_bases=num_bases)


def egc_forward(params, x, a_norm, onehot, problem_type):
    # TODO(synk): only EGConv('symnorm') + a single 'add' pool are implemented;
    # other aggregators / MultiAggregation from build_aggregators are not.
    egcs, mlp = params["egcs"], params["mlp"]
    num_heads, num_bases = params["num_heads"], params["num_bases"]
    should_jump = params["should_jump"]
    passes = len(egcs)
    mod = egcs[0]["bias"].shape[1]
    n, input_size = x.shape
    g = onehot.shape[0]
    hid = mlp["b1"].shape[1]
    out_dim = mlp["b3"].shape[1]

    # --- generation-friendly padding (all exact: zero rows/cols/lanes) -------
    n_pad = _round_up(n, N_ALIGN)          # MXU fill for the A @ bases propagate
    f_pad = _round_up(input_size, LANE)
    mod_pad = _round_up(mod, LANE)
    hid_pad = _round_up(hid, LANE)
    out_pad = _round_up(out_dim, LANE)

    x_pad = jnp.pad(x, ((0, n_pad - n), (0, f_pad - input_size))).astype(jnp.bfloat16)
    a_pad = jnp.pad(a_norm, ((0, n_pad - n), (0, n_pad - n))).astype(jnp.bfloat16)
    oh_pad = jnp.pad(onehot, ((0, 0), (0, n_pad - n))).astype(jnp.bfloat16)
    pt = problem_type[:, None].astype(jnp.float32)

    # fc1 weight: scatter real rows into the padded JK('cat') lane layout.
    segs_real = ([input_size] + [mod] * passes) if should_jump else [mod]
    segs_pad = ([f_pad] + [mod_pad] * passes) if should_jump else [mod_pad]
    w1_blocks, off = [], 0
    for r, p in zip(segs_real, segs_pad):
        blk = mlp["W1x"][off:off + r]
        w1_blocks.append(jnp.pad(blk, ((0, p - r), (0, hid_pad - hid))))
        off += r
    w1_pad = jnp.concatenate(w1_blocks, axis=0)           # [jump_dim_pad, hid_pad]
    jump_dim_pad = sum(segs_pad)

    args = [x_pad, a_pad]
    for i, layer in enumerate(egcs):
        fin_pad = f_pad if i == 0 else mod_pad
        w_fused, b_comb_exp, bias_pad = _expand_layer(layer, num_heads, num_bases,
                                                      fin_pad, mod_pad)
        args += [w_fused.astype(jnp.bfloat16), b_comb_exp, bias_pad]
    args += [oh_pad, pt,
             w1_pad.astype(jnp.bfloat16),
             _pad_cols(mlp["W1p"], hid_pad),
             _pad_cols(mlp["b1"], hid_pad),
             jnp.pad(mlp["W2"], ((0, hid_pad - hid), (0, hid_pad - hid))).astype(jnp.bfloat16),
             _pad_cols(mlp["b2"], hid_pad),
             jnp.pad(mlp["W3"], ((0, hid_pad - hid), (0, out_pad - out_dim))).astype(jnp.bfloat16),
             _pad_cols(mlp["b3"], out_pad)]

    # --- advisory cost + explicit VMEM budget ---------------------------------
    bm = num_bases * mod_pad
    flops = 0
    for i in range(passes):
        fin_pad = f_pad if i == 0 else mod_pad
        flops += 2 * n_pad * fin_pad * (2 * bm)      # fused weight matmul
        flops += 2 * n_pad * n_pad * bm              # symnorm propagate
        flops += 3 * n_pad * bm                      # combine + bias + leaky_relu
    flops += 2 * g * n_pad * jump_dim_pad            # 'add' pooling
    flops += 2 * g * (jump_dim_pad * hid_pad + hid_pad * hid_pad + hid_pad * out_pad)

    def nbytes(a):
        return int(a.size) * a.dtype.itemsize

    out_bytes = g * out_pad * 4
    scratch_bytes = n_pad * jump_dim_pad * 2
    resident = sum(nbytes(a) for a in args) + out_bytes + scratch_bytes
    # Single-buffered (grid-less) residency + headroom for f32 intermediates;
    # capped at 64 MiB so the same setting is valid on v7x.
    vmem_limit = int(min(64 * 2**20, max(16 * 2**20, 4 * resident)))

    vmem_spec = pl.BlockSpec(memory_space=pltpu.MemorySpace.VMEM)
    kernel = partial(fused_egc_kernel, num_layers=passes, num_bases=num_bases,
                     mod_pad=mod_pad, f_pad=f_pad, should_jump=should_jump)
    out_padded = pl.pallas_call(
        kernel,
        in_specs=[vmem_spec] * len(args),
        out_specs=vmem_spec,
        out_shape=jax.ShapeDtypeStruct((g, out_pad), jnp.float32),
        scratch_shapes=[pltpu.VMEM((n_pad, jump_dim_pad), jnp.bfloat16)],
        compiler_params=pltpu.CompilerParams(vmem_limit_bytes=vmem_limit),
        cost_estimate=pl.CostEstimate(flops=int(flops), transcendentals=0,
                                      bytes_accessed=int(resident)),
    )(*args)
    return out_padded[:, :out_dim]


if __name__ == "__main__":
    # Small, module-consistent shapes.
    PASSES = 2
    INPUT_SIZE = 16          # node feature dim
    OUTPUT_SIZE = 4
    NUM_HEADS, NUM_BASES = 8, 4
    POOL = ["add"]           # single 'add' pooling
    N_PER_GRAPH, NUM_GRAPHS = 16, 2
    N = N_PER_GRAPH * NUM_GRAPHS

    key = jax.random.PRNGKey(0)
    k_x, k_p = jax.random.split(key, 2)

    # Node features, ring graph per component, batch assignment, problem type.
    x = jax.random.normal(k_x, (N, INPUT_SIZE), dtype=jnp.float32)
    src = jnp.arange(N, dtype=jnp.int32)
    dst = (src % N_PER_GRAPH + 1) % N_PER_GRAPH + (src // N_PER_GRAPH) * N_PER_GRAPH
    edge_index = jnp.stack([src, dst])                     # [2, N] ring edges
    batch = jnp.repeat(jnp.arange(NUM_GRAPHS, dtype=jnp.int32), N_PER_GRAPH)
    problem_type = jnp.ones((NUM_GRAPHS,), jnp.float32)    # problemType per graph

    # Densified graph structure (glue).
    a_norm = build_sym_norm_adj(edge_index, N)
    onehot = (batch[None, :] == jnp.arange(NUM_GRAPHS)[:, None]).astype(jnp.float32)

    params = init_params(k_p, PASSES, INPUT_SIZE, OUTPUT_SIZE,
                         num_pools=len(POOL), num_heads=NUM_HEADS,
                         num_bases=NUM_BASES, should_jump=True)

    out = egc_forward(params, x, a_norm, onehot, problem_type)
    out = jax.block_until_ready(out)
    assert out.shape == (NUM_GRAPHS, OUTPUT_SIZE)
    print("KERNEL_OK")
</pallas_src>

<mosaic_0001>
module attributes {stable_mosaic.version = 11 : i64} {
  func.func @fused_egc_kernel(%arg0: memref<256x128xbf16, #tpu.memory_space<vmem>>, %arg1: memref<256x256xbf16, #tpu.memory_space<vmem>>, %arg2: memref<128x1024xbf16, #tpu.memory_space<vmem>>, %arg3: memref<1x512xf32, #tpu.memory_space<vmem>>, %arg4: memref<1x128xf32, #tpu.memory_space<vmem>>, %arg5: memref<128x1024xbf16, #tpu.memory_space<vmem>>, %arg6: memref<1x512xf32, #tpu.memory_space<vmem>>, %arg7: memref<1x128xf32, #tpu.memory_space<vmem>>, %arg8: memref<2x256xbf16, #tpu.memory_space<vmem>>, %arg9: memref<2x1xf32, #tpu.memory_space<vmem>>, %arg10: memref<384x128xbf16, #tpu.memory_space<vmem>>, %arg11: memref<1x128xf32, #tpu.memory_space<vmem>>, %arg12: memref<1x128xf32, #tpu.memory_space<vmem>>, %arg13: memref<128x128xbf16, #tpu.memory_space<vmem>>, %arg14: memref<1x128xf32, #tpu.memory_space<vmem>>, %arg15: memref<128x128xbf16, #tpu.memory_space<vmem>>, %arg16: memref<1x128xf32, #tpu.memory_space<vmem>>, %arg17: memref<2x128xf32, #tpu.memory_space<vmem>>, %arg18: memref<256x384xbf16, #tpu.memory_space<vmem>>) attributes {dimension_semantics = [], scalar_prefetch = 0 : i64, scratch_operands = 1 : i64, tpu.core_type = #tpu.core_type<tc>} {
    %c0 = arith.constant 0 : index
    %c0_0 = arith.constant 0 : index
    %0 = vector.load %arg1[%c0, %c0_0] : memref<256x256xbf16, #tpu.memory_space<vmem>>, vector<256x256xbf16>
    %c0_1 = arith.constant 0 : index
    %c0_2 = arith.constant 0 : index
    %1 = vector.load %arg0[%c0_1, %c0_2] : memref<256x128xbf16, #tpu.memory_space<vmem>>, vector<256x128xbf16>
    %c0_3 = arith.constant 0 : index
    %c0_4 = arith.constant 0 : index
    %2 = vector.load %arg18[%c0_3, %c0_4] : memref<256x384xbf16, #tpu.memory_space<vmem>>, vector<256x128xbf16>
    tpu.vector_store %arg18[%c0_3, %c0_4], %1 {strides = array<i32>} : memref<256x384xbf16, #tpu.memory_space<vmem>>, vector<256x128xbf16>,
    %c0_5 = arith.constant 0 : index
    %c0_6 = arith.constant 0 : index
    %3 = vector.load %arg2[%c0_5, %c0_6] : memref<128x1024xbf16, #tpu.memory_space<vmem>>, vector<128x1024xbf16>
    %cst = arith.constant dense<0.000000e+00> : vector<256x1024xf32>
    %4 = tpu.matmul %1, %3, %cst {dimension_numbers = #tpu.dot_dimension_numbers<[1], [0], [0], [1], [0, 0, 1, 1], [], []>} : vector<256x128xbf16>, vector<128x1024xbf16>, vector<256x1024xf32> -> vector<256x1024xf32>
    %5 = vector.extract_strided_slice %4 {offsets = [0, 0], sizes = [256, 512], strides = [1, 1]} : vector<256x1024xf32> to vector<256x512xf32>
    %6 = vector.extract_strided_slice %4 {offsets = [0, 512], sizes = [256, 512], strides = [1, 1]} : vector<256x1024xf32> to vector<256x512xf32>
    %c0_7 = arith.constant 0 : index
    %c0_8 = arith.constant 0 : index
    %7 = vector.load %arg3[%c0_7, %c0_8] : memref<1x512xf32, #tpu.memory_space<vmem>>, vector<1x512xf32>
    %8 = vector.broadcast %7 : vector<1x512xf32> to vector<256x512xf32>
    %9 = arith.addf %6, %8 : vector<256x512xf32>
    %10 = arith.truncf %5 : vector<256x512xf32> to vector<256x512xbf16>
    %cst_9 = arith.constant dense<0.000000e+00> : vector<256x512xf32>
    %11 = tpu.matmul %0, %10, %cst_9 {dimension_numbers = #tpu.dot_dimension_numbers<[1], [0], [0], [1], [0, 0, 1, 1], [], []>} : vector<256x256xbf16>, vector<256x512xbf16>, vector<256x512xf32> -> vector<256x512xf32>
    %12 = arith.mulf %9, %11 : vector<256x512xf32>
    %13 = vector.extract_strided_slice %12 {offsets = [0, 0], sizes = [256, 128], strides = [1, 1]} : vector<256x512xf32> to vector<256x128xf32>
    %14 = vector.extract_strided_slice %12 {offsets = [0, 128], sizes = [256, 128], strides = [1, 1]} : vector<256x512xf32> to vector<256x128xf32>
    %15 = arith.addf %13, %14 : vector<256x128xf32>
    %16 = vector.extract_strided_slice %12 {offsets = [0, 256], sizes = [256, 128], strides = [1, 1]} : vector<256x512xf32> to vector<256x128xf32>
    %17 = arith.addf %15, %16 : vector<256x128xf32>
    %18 = vector.extract_strided_slice %12 {offsets = [0, 384], sizes = [256, 128], strides = [1, 1]} : vector<256x512xf32> to vector<256x128xf32>
    %19 = arith.addf %17, %18 : vector<256x128xf32>
    %c0_10 = arith.constant 0 : index
    %c0_11 = arith.constant 0 : index
    %20 = vector.load %arg4[%c0_10, %c0_11] : memref<1x128xf32, #tpu.memory_space<vmem>>, vector<1x128xf32>
    %21 = vector.broadcast %20 : vector<1x128xf32> to vector<256x128xf32>
    %22 = arith.addf %19, %21 : vector<256x128xf32>
    %cst_12 = arith.constant 0.000000e+00 : f32
    %23 = vector.broadcast %cst_12 : f32 to vector<256x128xf32>
    %24 = arith.cmpf oge, %22, %23 : vector<256x128xf32>
    %cst_13 = arith.constant 0.00999999977 : f32
    %25 = vector.broadcast %cst_13 : f32 to vector<256x128xf32>
    %26 = arith.mulf %25, %22 : vector<256x128xf32>
    %27 = arith.select %24, %22, %26 : vector<256x128xi1>, vector<256x128xf32>
    %28 = arith.truncf %27 : vector<256x128xf32> to vector<256x128xbf16>
    %c0_14 = arith.constant 0 : index
    %c128 = arith.constant 128 : index
    %29 = vector.load %arg18[%c0_14, %c128] : memref<256x384xbf16, #tpu.memory_space<vmem>>, vector<256x128xbf16>
    tpu.vector_store %arg18[%c0_14, %c128], %28 {strides = array<i32>} : memref<256x384xbf16, #tpu.memory_space<vmem>>, vector<256x128xbf16>,
    %c0_15 = arith.constant 0 : index
    %c0_16 = arith.constant 0 : index
    %30 = vector.load %arg5[%c0_15, %c0_16] : memref<128x1024xbf16, #tpu.memory_space<vmem>>, vector<128x1024xbf16>
    %cst_17 = arith.constant dense<0.000000e+00> : vector<256x1024xf32>
    %31 = tpu.matmul %28, %30, %cst_17 {dimension_numbers = #tpu.dot_dimension_numbers<[1], [0], [0], [1], [0, 0, 1, 1], [], []>} : vector<256x128xbf16>, vector<128x1024xbf16>, vector<256x1024xf32> -> vector<256x1024xf32>
    %32 = vector.extract_strided_slice %31 {offsets = [0, 0], sizes = [256, 512], strides = [1, 1]} : vector<256x1024xf32> to vector<256x512xf32>
    %33 = vector.extract_strided_slice %31 {offsets = [0, 512], sizes = [256, 512], strides = [1, 1]} : vector<256x1024xf32> to vector<256x512xf32>
    %c0_18 = arith.constant 0 : index
    %c0_19 = arith.constant 0 : index
    %34 = vector.load %arg6[%c0_18, %c0_19] : memref<1x512xf32, #tpu.memory_space<vmem>>, vector<1x512xf32>
    %35 = vector.broadcast %34 : vector<1x512xf32> to vector<256x512xf32>
    %36 = arith.addf %33, %35 : vector<256x512xf32>
    %37 = arith.truncf %32 : vector<256x512xf32> to vector<256x512xbf16>
    %cst_20 = arith.constant dense<0.000000e+00> : vector<256x512xf32>
    %38 = tpu.matmul %0, %37, %cst_20 {dimension_numbers = #tpu.dot_dimension_numbers<[1], [0], [0], [1], [0, 0, 1, 1], [], []>} : vector<256x256xbf16>, vector<256x512xbf16>, vector<256x512xf32> -> vector<256x512xf32>
    %39 = arith.mulf %36, %38 : vector<256x512xf32>
    %40 = vector.extract_strided_slice %39 {offsets = [0, 0], sizes = [256, 128], strides = [1, 1]} : vector<256x512xf32> to vector<256x128xf32>
    %41 = vector.extract_strided_slice %39 {offsets = [0, 128], sizes = [256, 128], strides = [1, 1]} : vector<256x512xf32> to vector<256x128xf32>
    %42 = arith.addf %40, %41 : vector<256x128xf32>
    %43 = vector.extract_strided_slice %39 {offsets = [0, 256], sizes = [256, 128], strides = [1, 1]} : vector<256x512xf32> to vector<256x128xf32>
    %44 = arith.addf %42, %43 : vector<256x128xf32>
    %45 = vector.extract_strided_slice %39 {offsets = [0, 384], sizes = [256, 128], strides = [1, 1]} : vector<256x512xf32> to vector<256x128xf32>
    %46 = arith.addf %44, %45 : vector<256x128xf32>
    %c0_21 = arith.constant 0 : index
    %c0_22 = arith.constant 0 : index
    %47 = vector.load %arg7[%c0_21, %c0_22] : memref<1x128xf32, #tpu.memory_space<vmem>>, vector<1x128xf32>
    %48 = vector.broadcast %47 : vector<1x128xf32> to vector<256x128xf32>
    %49 = arith.addf %46, %48 : vector<256x128xf32>
    %cst_23 = arith.constant 0.000000e+00 : f32
    %50 = vector.broadcast %cst_23 : f32 to vector<256x128xf32>
    %51 = arith.cmpf oge, %49, %50 : vector<256x128xf32>
    %cst_24 = arith.constant 0.00999999977 : f32
    %52 = vector.broadcast %cst_24 : f32 to vector<256x128xf32>
    %53 = arith.mulf %52, %49 : vector<256x128xf32>
    %54 = arith.select %51, %49, %53 : vector<256x128xi1>, vector<256x128xf32>
    %55 = arith.truncf %54 : vector<256x128xf32> to vector<256x128xbf16>
    %c0_25 = arith.constant 0 : index
    %c256 = arith.constant 256 : index
    %56 = vector.load %arg18[%c0_25, %c256] : memref<256x384xbf16, #tpu.memory_space<vmem>>, vector<256x128xbf16>
    tpu.vector_store %arg18[%c0_25, %c256], %55 {strides = array<i32>} : memref<256x384xbf16, #tpu.memory_space<vmem>>, vector<256x128xbf16>,
    %c0_26 = arith.constant 0 : index
    %c0_27 = arith.constant 0 : index
    %57 = vector.load %arg18[%c0_26, %c0_27] : memref<256x384xbf16, #tpu.memory_space<vmem>>, vector<256x384xbf16>
    %c0_28 = arith.constant 0 : index
    %c0_29 = arith.constant 0 : index
    %58 = vector.load %arg8[%c0_28, %c0_29] : memref<2x256xbf16, #tpu.memory_space<vmem>>, vector<2x256xbf16>
    %cst_30 = arith.constant dense<0.000000e+00> : vector<2x384xf32>
    %59 = tpu.matmul %58, %57, %cst_30 {dimension_numbers = #tpu.dot_dimension_numbers<[1], [0], [0], [1], [0, 0, 1, 1], [], []>} : vector<2x256xbf16>, vector<256x384xbf16>, vector<2x384xf32> -> vector<2x384xf32>
    %60 = arith.truncf %59 : vector<2x384xf32> to vector<2x384xbf16>
    %c0_31 = arith.constant 0 : index
    %c0_32 = arith.constant 0 : index
    %61 = vector.load %arg10[%c0_31, %c0_32] : memref<384x128xbf16, #tpu.memory_space<vmem>>, vector<384x128xbf16>
    %cst_33 = arith.constant dense<0.000000e+00> : vector<2x128xf32>
    %62 = tpu.matmul %60, %61, %cst_33 {dimension_numbers = #tpu.dot_dimension_numbers<[1], [0], [0], [1], [0, 0, 1, 1], [], []>} : vector<2x384xbf16>, vector<384x128xbf16>, vector<2x128xf32> -> vector<2x128xf32>
    %c0_34 = arith.constant 0 : index
    %c0_35 = arith.constant 0 : index
    %63 = vector.load %arg9[%c0_34, %c0_35] : memref<2x1xf32, #tpu.memory_space<vmem>>, vector<2x1xf32>
    %c0_36 = arith.constant 0 : index
    %c0_37 = arith.constant 0 : index
    %64 = vector.load %arg11[%c0_36, %c0_37] : memref<1x128xf32, #tpu.memory_space<vmem>>, vector<1x128xf32>
    %65 = vector.broadcast %63 : vector<2x1xf32> to vector<2x128xf32>
    %66 = vector.broadcast %64 : vector<1x128xf32> to vector<2x128xf32>
    %67 = arith.mulf %65, %66 : vector<2x128xf32>
    %68 = arith.addf %62, %67 : vector<2x128xf32>
    %c0_38 = arith.constant 0 : index
    %c0_39 = arith.constant 0 : index
    %69 = vector.load %arg12[%c0_38, %c0_39] : memref<1x128xf32, #tpu.memory_space<vmem>>, vector<1x128xf32>
    %70 = vector.broadcast %69 : vector<1x128xf32> to vector<2x128xf32>
    %71 = arith.addf %68, %70 : vector<2x128xf32>
    %cst_40 = arith.constant 0.000000e+00 : f32
    %72 = vector.broadcast %cst_40 : f32 to vector<2x128xf32>
    %73 = arith.cmpf oge, %71, %72 : vector<2x128xf32>
    %cst_41 = arith.constant 0.00999999977 : f32
    %74 = vector.broadcast %cst_41 : f32 to vector<2x128xf32>
    %75 = arith.mulf %74, %71 : vector<2x128xf32>
    %76 = arith.select %73, %71, %75 : vector<2x128xi1>, vector<2x128xf32>
    %77 = arith.truncf %76 : vector<2x128xf32> to vector<2x128xbf16>
    %c0_42 = arith.constant 0 : index
    %c0_43 = arith.constant 0 : index
    %78 = vector.load %arg13[%c0_42, %c0_43] : memref<128x128xbf16, #tpu.memory_space<vmem>>, vector<128x128xbf16>
    %cst_44 = arith.constant dense<0.000000e+00> : vector<2x128xf32>
    %79 = tpu.matmul %77, %78, %cst_44 {dimension_numbers = #tpu.dot_dimension_numbers<[1], [0], [0], [1], [0, 0, 1, 1], [], []>} : vector<2x128xbf16>, vector<128x128xbf16>, vector<2x128xf32> -> vector<2x128xf32>
    %c0_45 = arith.constant 0 : index
    %c0_46 = arith.constant 0 : index
    %80 = vector.load %arg14[%c0_45, %c0_46] : memref<1x128xf32, #tpu.memory_space<vmem>>, vector<1x128xf32>
    %81 = vector.broadcast %80 : vector<1x128xf32> to vector<2x128xf32>
    %82 = arith.addf %79, %81 : vector<2x128xf32>
    %cst_47 = arith.constant 0.000000e+00 : f32
    %83 = vector.broadcast %cst_47 : f32 to vector<2x128xf32>
    %84 = arith.cmpf oge, %82, %83 : vector<2x128xf32>
    %cst_48 = arith.constant 0.00999999977 : f32
    %85 = vector.broadcast %cst_48 : f32 to vector<2x128xf32>
    %86 = arith.mulf %85, %82 : vector<2x128xf32>
    %87 = arith.select %84, %82, %86 : vector<2x128xi1>, vector<2x128xf32>
    %88 = arith.truncf %87 : vector<2x128xf32> to vector<2x128xbf16>
    %c0_49 = arith.constant 0 : index
    %c0_50 = arith.constant 0 : index
    %89 = vector.load %arg15[%c0_49, %c0_50] : memref<128x128xbf16, #tpu.memory_space<vmem>>, vector<128x128xbf16>
    %cst_51 = arith.constant dense<0.000000e+00> : vector<2x128xf32>
    %90 = tpu.matmul %88, %89, %cst_51 {dimension_numbers = #tpu.dot_dimension_numbers<[1], [0], [0], [1], [0, 0, 1, 1], [], []>} : vector<2x128xbf16>, vector<128x128xbf16>, vector<2x128xf32> -> vector<2x128xf32>
    %c0_52 = arith.constant 0 : index
    %c0_53 = arith.constant 0 : index
    %91 = vector.load %arg16[%c0_52, %c0_53] : memref<1x128xf32, #tpu.memory_space<vmem>>, vector<1x128xf32>
    %92 = vector.broadcast %91 : vector<1x128xf32> to vector<2x128xf32>
    %93 = arith.addf %90, %92 : vector<2x128xf32>
    %c0_54 = arith.constant 0 : index
    %c0_55 = arith.constant 0 : index
    %94 = vector.load %arg17[%c0_54, %c0_55] : memref<2x128xf32, #tpu.memory_space<vmem>>, vector<2x128xf32>
    tpu.vector_store %arg17[%c0_54, %c0_55], %93 {strides = array<i32>} : memref<2x128xf32, #tpu.memory_space<vmem>>, vector<2x128xf32>,
    return
  }
}

</mosaic_0001>

<llo_original>
// kernel: tpu_custom_call.1
$region0: #{tpu_custom_call.1}
  #allocation0 [shape = 'u32[]', space=smem, size = 0x4, offset = 0x4, fixed_abs, tag = 'smem constant byte address 0x4 - core index']
  #allocation1 [shape = 'u32[72,128]{1,0:T(1,128)}', space=vmem, size = 0x9000, scoped, tag = 'internal scratch']
  #allocation2 [shape = 'bf16[256,384]{1,0:T(8,128)(2,1)}', space=vmem, size = 0x30000, scoped, tag = 'scratch operand']
  %s0 = inlined_call_operand.hbm [shape: bf16[256,128], index: 0, kind: input, shape index: {}]
  %s1 = inlined_call_operand.hbm [shape: bf16[256,256], index: 1, kind: input, shape index: {}]
  %s2 = inlined_call_operand.hbm [shape: bf16[128,1024], index: 2, kind: input, shape index: {}]
  %s3 = inlined_call_operand.vmem [shape: f32[1,512], index: 3, kind: input, shape index: {}]
  %s4 = inlined_call_operand.hbm [shape: f32[1,128], index: 4, kind: input, shape index: {}]
  %s5 = inlined_call_operand.hbm [shape: bf16[128,1024], index: 5, kind: input, shape index: {}]
  %s6 = inlined_call_operand.vmem [shape: f32[1,512], index: 6, kind: input, shape index: {}]
  %s7 = inlined_call_operand.hbm [shape: f32[1,128], index: 7, kind: input, shape index: {}]
  %s8 = inlined_call_operand.vmem [shape: bf16[2,256], index: 8, kind: input, shape index: {}]
  %s9 = inlined_call_operand.vmem [shape: f32[2,1], index: 9, kind: input, shape index: {}]
  %s10 = inlined_call_operand.hbm [shape: bf16[384,128], index: 10, kind: input, shape index: {}]
  %s11 = inlined_call_operand.vmem [shape: f32[1,128], index: 11, kind: input, shape index: {}]
  %s12 = inlined_call_operand.vmem [shape: f32[1,128], index: 12, kind: input, shape index: {}]
  %s13 = inlined_call_operand.hbm [shape: bf16[128,128], index: 13, kind: input, shape index: {}]
  %s14 = inlined_call_operand.vmem [shape: f32[1,128], index: 14, kind: input, shape index: {}]
  %s15 = inlined_call_operand.hbm [shape: bf16[128,128], index: 15, kind: input, shape index: {}]
  %s16 = inlined_call_operand.vmem [shape: f32[1,128], index: 16, kind: input, shape index: {}]
  %s17 = inlined_call_operand.hbm [shape: f32[2,128], index: 17, kind: output, shape index: {}]
  %s18 = sld [smem:[#allocation0]]
  $region114: #{tpu_custom_call.1} parent=0
    _
  %s20 = ssub.s32 1, %s18
  %s21 = scalar_select 0, %s20, %s18
  $region1: #{tpu_custom_call.1} parent=0
    #allocation3 [shape = 'u8[65536]{0}', space=vmem, size = 0x10000, scoped, tag = 'input window, operand 0, single buffered']
    #allocation4 [shape = 's32[1]{0}', space=sflag, size = 0x4, scoped, tag = 'scoped memory for tpu_custom_call.1']
    #allocation5 [shape = 's32[1]{0}', space=sflag, size = 0x4, scoped, tag = 'scoped memory for tpu_custom_call.1']
    #allocation6 [shape = 'u8[131072]{0}', space=vmem, size = 0x20000, scoped, tag = 'input window, operand 1, single buffered']
    #allocation7 [shape = 's32[1]{0}', space=sflag, size = 0x4, scoped, tag = 'scoped memory for tpu_custom_call.1']
    #allocation8 [shape = 'u8[262144]{0}', space=vmem, size = 0x40000, scoped, tag = 'input window, operand 2, single buffered']
    #allocation9 [shape = 'u8[512]{0}', space=vmem, size = 0x400, scoped, tag = 'input window, operand 4, single buffered']
    #allocation10 [shape = 's32[1]{0}', space=sflag, size = 0x4, scoped, tag = 'scoped memory for tpu_custom_call.1']
    #allocation11 [shape = 'u8[262144]{0}', space=vmem, size = 0x40000, scoped, tag = 'input window, operand 5, single buffered']
    #allocation12 [shape = 'u8[512]{0}', space=vmem, size = 0x400, scoped, tag = 'input window, operand 7, single buffered']
    #allocation13 [shape = 's32[1]{0}', space=sflag, size = 0x4, scoped, tag = 'scoped memory for tpu_custom_call.1']
    #allocation14 [shape = 'u8[98304]{0}', space=vmem, size = 0x18000, scoped, tag = 'input window, operand 10, single buffered']
    #allocation15 [shape = 'u8[32768]{0}', space=vmem, size = 0x8000, scoped, tag = 'input window, operand 13, single buffered']
    #allocation16 [shape = 's32[1]{0}', space=sflag, size = 0x4, scoped, tag = 'scoped memory for tpu_custom_call.1']
    #allocation17 [shape = 'u8[32768]{0}', space=vmem, size = 0x8000, scoped, tag = 'input window, operand 15, single buffered']
    #allocation18 [shape = 'u8[1024]{0}', space=vmem, size = 0x400, scoped, tag = 'output window, operand 0, single buffered']
    %22 = vsyncpa [#allocation4], 0
    %23 = vsyncpa [#allocation7], 0
    %24 = vsyncpa [#allocation10], 0
    %25 = vsyncpa [#allocation13], 0
    %26 = vsyncpa [#allocation16], 0
    %27 = vsyncpa [#allocation5], 0
    // Predicated region
    $region2: #{tpu_custom_call.1} parent=1 // pred_check
      _
    $region3: #{tpu_custom_call.1} parent=1 // pred_check_branch
      %29 = sbr.rel (0) target = $region5
    $region4: #{tpu_custom_call.1} parent=1 // pred_region
      %31 = vsyncadd [#allocation4], 0
      %s32 = sshll.u32 %s0, 4
      %s33 = int_to_ptr.hbm [resolvable:$true] %s32
      %s34 = sshll.u32 [#allocation3], 4
      %s35 = int_to_ptr.vmem [resolvable:$true] %s34
      %40 = dma.hbm_to_vmem [thread:$0]  %s33, 2048, %s35, [#allocation4], 64, 64, 4
    $region5: #{tpu_custom_call.1} parent=1 // pred_fallthru
      _
    // Predicated region
    $region6: #{tpu_custom_call.1} parent=1 // pred_check
      _
    $region7: #{tpu_custom_call.1} parent=1 // pred_check_branch
      %42 = sbr.rel (0) target = $region9
    $region8: #{tpu_custom_call.1} parent=1 // pred_region
      %44 = vsyncadd [#allocation7], 0
      %s45 = sshll.u32 %s1, 4
      %s46 = int_to_ptr.hbm [resolvable:$true] %s45
      %s47 = sshll.u32 [#allocation6], 4
      %s48 = int_to_ptr.vmem [resolvable:$true] %s47
      %53 = dma.hbm_to_vmem [thread:$0]  %s46, 4096, %s48, [#allocation7], 128, 128, 8
    $region9: #{tpu_custom_call.1} parent=1 // pred_fallthru
      _
    // Predicated region
    $region10: #{tpu_custom_call.1} parent=1 // pred_check
      _
    $region11: #{tpu_custom_call.1} parent=1 // pred_check_branch
      %55 = sbr.rel (0) target = $region13
    $region12: #{tpu_custom_call.1} parent=1 // pred_region
      %57 = vsyncadd [#allocation7], 0
      %s58 = sshll.u32 %s2, 4
      %s59 = int_to_ptr.hbm [resolvable:$true] %s58
      %s60 = sshll.u32 [#allocation8], 4
      %s61 = int_to_ptr.vmem [resolvable:$true] %s60
      %66 = dma.hbm_to_vmem [thread:$0]  %s59, 8192, %s61, [#allocation7], 512, 512, 32
    $region13: #{tpu_custom_call.1} parent=1 // pred_fallthru
      _
    // Predicated region
    $region14: #{tpu_custom_call.1} parent=1 // pred_check
      _
    $region15: #{tpu_custom_call.1} parent=1 // pred_check_branch
      %68 = sbr.rel (0) target = $region17
    $region16: #{tpu_custom_call.1} parent=1 // pred_region
      _
    $region17: #{tpu_custom_call.1} parent=1 // pred_fallthru
      _
    // Predicated region
    $region18: #{tpu_custom_call.1} parent=1 // pred_check
      _
    $region19: #{tpu_custom_call.1} parent=1 // pred_check_branch
      %70 = sbr.rel (0) target = $region21
    $region20: #{tpu_custom_call.1} parent=1 // pred_region
      %72 = vsyncadd [#allocation10], 0
      %s74 = sshll.u32 %s4, 4
      %s75 = int_to_ptr.hbm [resolvable:$true] %s74
      %s76 = sshll.u32 [#allocation9], 4
      %s77 = int_to_ptr.vmem [resolvable:$true] %s76
      %79 = dma.hbm_to_vmem [thread:$0]  %s75, 16, %s77, [#allocation10]
    $region21: #{tpu_custom_call.1} parent=1 // pred_fallthru
      _
    // Predicated region
    $region22: #{tpu_custom_call.1} parent=1 // pred_check
      _
    $region23: #{tpu_custom_call.1} parent=1 // pred_check_branch
      %81 = sbr.rel (0) target = $region25
    $region24: #{tpu_custom_call.1} parent=1 // pred_region
      %83 = vsyncadd [#allocation10], 0
      %s84 = sshll.u32 %s5, 4
      %s85 = int_to_ptr.hbm [resolvable:$true] %s84
      %s86 = sshll.u32 [#allocation11], 4
      %s87 = int_to_ptr.vmem [resolvable:$true] %s86
      %92 = dma.hbm_to_vmem [thread:$0]  %s85, 8192, %s87, [#allocation10], 512, 512, 32
    $region25: #{tpu_custom_call.1} parent=1 // pred_fallthru
      _
    // Predicated region
    $region26: #{tpu_custom_call.1} parent=1 // pred_check
      _
    $region27: #{tpu_custom_call.1} parent=1 // pred_check_branch
      %94 = sbr.rel (0) target = $region29
    $region28: #{tpu_custom_call.1} parent=1 // pred_region
      _
    $region29: #{tpu_custom_call.1} parent=1 // pred_fallthru
      _
    // Predicated region
    $region30: #{tpu_custom_call.1} parent=1 // pred_check
      _
    $region31: #{tpu_custom_call.1} parent=1 // pred_check_branch
      %96 = sbr.rel (0) target = $region33
    $region32: #{tpu_custom_call.1} parent=1 // pred_region
      %98 = vsyncadd [#allocation13], 0
      %s100 = sshll.u32 %s7, 4
      %s101 = int_to_ptr.hbm [resolvable:$true] %s100
      %s102 = sshll.u32 [#allocation12], 4
      %s103 = int_to_ptr.vmem [resolvable:$true] %s102
      %105 = dma.hbm_to_vmem [thread:$0]  %s101, 16, %s103, [#allocation13]
    $region33: #{tpu_custom_call.1} parent=1 // pred_fallthru
      _
    // Predicated region
    $region34: #{tpu_custom_call.1} parent=1 // pred_check
      _
    $region35: #{tpu_custom_call.1} parent=1 // pred_check_branch
      %107 = sbr.rel (0) target = $region37
    $region36: #{tpu_custom_call.1} parent=1 // pred_region
      _
    $region37: #{tpu_custom_call.1} parent=1 // pred_fallthru
      _
    // Predicated region
    $region38: #{tpu_custom_call.1} parent=1 // pred_check
      _
    $region39: #{tpu_custom_call.1} parent=1 // pred_check_branch
      %109 = sbr.rel (0) target = $region41
    $region40: #{tpu_custom_call.1} parent=1 // pred_region
      _
    $region41: #{tpu_custom_call.1} parent=1 // pred_fallthru
      _
    // Predicated region
    $region42: #{tpu_custom_call.1} parent=1 // pred_check
      _
    $region43: #{tpu_custom_call.1} parent=1 // pred_check_branch
      %111 = sbr.rel (0) target = $region45
    $region44: #{tpu_custom_call.1} parent=1 // pred_region
      %113 = vsyncadd [#allocation13], 0
      %s114 = sshll.u32 %s10, 4
      %s115 = int_to_ptr.hbm [resolvable:$true] %s114
      %s116 = sshll.u32 [#allocation14], 4
      %s117 = int_to_ptr.vmem [resolvable:$true] %s116
      %122 = dma.hbm_to_vmem [thread:$0]  %s115, 3072, %s117, [#allocation13], 64, 64, 4
    $region45: #{tpu_custom_call.1} parent=1 // pred_fallthru
      _
    // Predicated region
    $region46: #{tpu_custom_call.1} parent=1 // pred_check
      _
    $region47: #{tpu_custom_call.1} parent=1 // pred_check_branch
      %124 = sbr.rel (0) target = $region49
    $region48: #{tpu_custom_call.1} parent=1 // pred_region
      _
    $region49: #{tpu_custom_call.1} parent=1 // pred_fallthru
      _
    // Predicated region
    $region50: #{tpu_custom_call.1} parent=1 // pred_check
      _
    $region51: #{tpu_custom_call.1} parent=1 // pred_check_branch
      %126 = sbr.rel (0) target = $region53
    $region52: #{tpu_custom_call.1} parent=1 // pred_region
      _
    $region53: #{tpu_custom_call.1} parent=1 // pred_fallthru
      _
    // Predicated region
    $region54: #{tpu_custom_call.1} parent=1 // pred_check
      _
    $region55: #{tpu_custom_call.1} parent=1 // pred_check_branch
      %128 = sbr.rel (0) target = $region57
    $region56: #{tpu_custom_call.1} parent=1 // pred_region
      %130 = vsyncadd [#allocation16], 0
      %s131 = sshll.u32 %s13, 4
      %s132 = int_to_ptr.hbm [resolvable:$true] %s131
      %s133 = sshll.u32 [#allocation15], 4
      %s134 = int_to_ptr.vmem [resolvable:$true] %s133
      %139 = dma.hbm_to_vmem [thread:$0]  %s132, 1024, %s134, [#allocation16], 64, 64, 4
    $region57: #{tpu_custom_call.1} parent=1 // pred_fallthru
      _
    // Predicated region
    $region58: #{tpu_custom_call.1} parent=1 // pred_check
      _
    $region59: #{tpu_custom_call.1} parent=1 // pred_check_branch
      %141 = sbr.rel (0) target = $region61
    $region60: #{tpu_custom_call.1} parent=1 // pred_region
      _
    $region61: #{tpu_custom_call.1} parent=1 // pred_fallthru
      _
    // Predicated region
    $region62: #{tpu_custom_call.1} parent=1 // pred_check
      _
    $region63: #{tpu_custom_call.1} parent=1 // pred_check_branch
      %143 = sbr.rel (0) target = $region65
    $region64: #{tpu_custom_call.1} parent=1 // pred_region
      %145 = vsyncadd [#allocation16], 0
      %s146 = sshll.u32 %s15, 4
      %s147 = int_to_ptr.hbm [resolvable:$true] %s146
      %s148 = sshll.u32 [#allocation17], 4
      %s149 = int_to_ptr.vmem [resolvable:$true] %s148
      %154 = dma.hbm_to_vmem [thread:$0]  %s147, 1024, %s149, [#allocation16], 64, 64, 4
    $region65: #{tpu_custom_call.1} parent=1 // pred_fallthru
      _
    // Predicated region
    $region66: #{tpu_custom_call.1} parent=1 // pred_check
      _
    $region67: #{tpu_custom_call.1} parent=1 // pred_check_branch
      %156 = sbr.rel (0) target = $region69
    $region68: #{tpu_custom_call.1} parent=1 // pred_region
      _
    $region69: #{tpu_custom_call.1} parent=1 // pred_fallthru
      _
    // Predicated region
    $region70: #{tpu_custom_call.1} parent=1 // pred_check
      _
    $region71: #{tpu_custom_call.1} parent=1 // pred_check_branch
      %158 = sbr.rel (0) target = $region73
    $region72: #{tpu_custom_call.1} parent=1 // pred_region
      %160 = dma.done [#allocation4], 2048
    $region73: #{tpu_custom_call.1} parent=1 // pred_fallthru
      _
    // Predicated region
    $region74: #{tpu_custom_call.1} parent=1 // pred_check
      _
    $region75: #{tpu_custom_call.1} parent=1 // pred_check_branch
      %162 = sbr.rel (0) target = $region77
    $region76: #{tpu_custom_call.1} parent=1 // pred_region
      %164 = dma.done [#allocation7], 4096
    $region77: #{tpu_custom_call.1} parent=1 // pred_fallthru
      _
    // Predicated region
    $region78: #{tpu_custom_call.1} parent=1 // pred_check
      _
    $region79: #{tpu_custom_call.1} parent=1 // pred_check_branch
      %166 = sbr.rel (0) target = $region81
    $region80: #{tpu_custom_call.1} parent=1 // pred_region
      %168 = dma.done [#allocation7], 8192
    $region81: #{tpu_custom_call.1} parent=1 // pred_fallthru
      _
    // Predicated region
    $region82: #{tpu_custom_call.1} parent=1 // pred_check
      _
    $region83: #{tpu_custom_call.1} parent=1 // pred_check_branch
      %170 = sbr.rel (0) target = $region85
    $region84: #{tpu_custom_call.1} parent=1 // pred_region
      %172 = dma.done [#allocation10], 16
    $region85: #{tpu_custom_call.1} parent=1 // pred_fallthru
      _
    // Predicated region
    $region86: #{tpu_custom_call.1} parent=1 // pred_check
      _
    $region87: #{tpu_custom_call.1} parent=1 // pred_check_branch
      %174 = sbr.rel (0) target = $region89
    $region88: #{tpu_custom_call.1} parent=1 // pred_region
      %176 = dma.done [#allocation10], 8192
    $region89: #{tpu_custom_call.1} parent=1 // pred_fallthru
      _
    // Predicated region
    $region90: #{tpu_custom_call.1} parent=1 // pred_check
      _
    $region91: #{tpu_custom_call.1} parent=1 // pred_check_branch
      %178 = sbr.rel (0) target = $region93
    $region92: #{tpu_custom_call.1} parent=1 // pred_region
      %180 = dma.done [#allocation13], 16
    $region93: #{tpu_custom_call.1} parent=1 // pred_fallthru
      _
    // Predicated region
    $region94: #{tpu_custom_call.1} parent=1 // pred_check
      _
    $region95: #{tpu_custom_call.1} parent=1 // pred_check_branch
      %182 = sbr.rel (0) target = $region97
    $region96: #{tpu_custom_call.1} parent=1 // pred_region
      %184 = dma.done [#allocation13], 3072
    $region97: #{tpu_custom_call.1} parent=1 // pred_fallthru
      _
    // Predicated region
    $region98: #{tpu_custom_call.1} parent=1 // pred_check
      _
    $region99: #{tpu_custom_call.1} parent=1 // pred_check_branch
      %186 = sbr.rel (0) target = $region101
    $region100: #{tpu_custom_call.1} parent=1 // pred_region
      %188 = dma.done [#allocation16], 1024
    $region101: #{tpu_custom_call.1} parent=1 // pred_fallthru
      _
    // Predicated region
    $region102: #{tpu_custom_call.1} parent=1 // pred_check
      _
    $region103: #{tpu_custom_call.1} parent=1 // pred_check_branch
      %190 = sbr.rel (0) target = $region105
    $region104: #{tpu_custom_call.1} parent=1 // pred_region
      %192 = dma.done [#allocation16], 1024
    $region105: #{tpu_custom_call.1} parent=1 // pred_fallthru
      _
    %v193 = vld [vmem:[#allocation6] sm:$0xff]
    %v194 = vld [vmem:[#allocation6 + $0x8] sm:$0xff]
    %v195 = vld [vmem:[#allocation6 + $0x10] sm:$0xff]
    %v196 = vld [vmem:[#allocation6 + $0x18] sm:$0xff]
    %v197 = vld [vmem:[#allocation6 + $0x20] sm:$0xff]
    %v198 = vld [vmem:[#allocation6 + $0x28] sm:$0xff]
    %v199 = vld [vmem:[#allocation6 + $0x30] sm:$0xff]
    %v200 = vld [vmem:[#allocation6 + $0x38] sm:$0xff]
    %v201 = vld [vmem:[#allocation6 + $0x40] sm:$0xff]
    %v202 = vld [vmem:[#allocation6 + $0x48] sm:$0xff]
    %v203 = vld [vmem:[#allocation6 + $0x50] sm:$0xff]
    %v204 = vld [vmem:[#allocation6 + $0x58] sm:$0xff]
    %v205 = vld [vmem:[#allocation6 + $0x60] sm:$0xff]
    %v206 = vld [vmem:[#allocation6 + $0x68] sm:$0xff]
    %v207 = vld [vmem:[#allocation6 + $0x70] sm:$0xff]
    %v208 = vld [vmem:[#allocation6 + $0x78] sm:$0xff]
    %v209 = vld [vmem:[#allocation6 + $0x80] sm:$0xff]
    %v210 = vld [vmem:[#allocation6 + $0x88] sm:$0xff]
    %v211 = vld [vmem:[#allocation6 + $0x90] sm:$0xff]
    %v212 = vld [vmem:[#allocation6 + $0x98] sm:$0xff]
    %v213 = vld [vmem:[#allocation6 + $0xa0] sm:$0xff]
    %v214 = vld [vmem:[#allocation6 + $0xa8] sm:$0xff]
    %v215 = vld [vmem:[#allocation6 + $0xb0] sm:$0xff]
    %v216 = vld [vmem:[#allocation6 + $0xb8] sm:$0xff]
    %v217 = vld [vmem:[#allocation6 + $0xc0] sm:$0xff]
    %v218 = vld [vmem:[#allocation6 + $0xc8] sm:$0xff]
    %v219 = vld [vmem:[#allocation6 + $0xd0] sm:$0xff]
    %v220 = vld [vmem:[#allocation6 + $0xd8] sm:$0xff]
    %v221 = vld [vmem:[#allocation6 + $0xe0] sm:$0xff]
    %v222 = vld [vmem:[#allocation6 + $0xe8] sm:$0xff]
    %v223 = vld [vmem:[#allocation6 + $0xf0] sm:$0xff]
    %v224 = vld [vmem:[#allocation6 + $0xf8] sm:$0xff]
    %v225 = vld [vmem:[#allocation3] sm:$0xf]
    %v226 = vld [vmem:[#allocation3 + $0x4] sm:$0xf]
    %v227 = vld [vmem:[#allocation3 + $0x8] sm:$0xf]
    %v228 = vld [vmem:[#allocation3 + $0xc] sm:$0xf]
    %v229 = vld [vmem:[#allocation3 + $0x10] sm:$0xf]
    %v230 = vld [vmem:[#allocation3 + $0x14] sm:$0xf]
    %v231 = vld [vmem:[#allocation3 + $0x18] sm:$0xf]
    %v232 = vld [vmem:[#allocation3 + $0x1c] sm:$0xf]
    %v233 = vld [vmem:[#allocation3 + $0x20] sm:$0xf]
    %v234 = vld [vmem:[#allocation3 + $0x24] sm:$0xf]
    %v235 = vld [vmem:[#allocation3 + $0x28] sm:$0xf]
    %v236 = vld [vmem:[#allocation3 + $0x2c] sm:$0xf]
    %v237 = vld [vmem:[#allocation3 + $0x30] sm:$0xf]
    %v238 = vld [vmem:[#allocation3 + $0x34] sm:$0xf]
    %v239 = vld [vmem:[#allocation3 + $0x38] sm:$0xf]
    %v240 = vld [vmem:[#allocation3 + $0x3c] sm:$0xf]
    %v241 = vld [vmem:[#allocation3 + $0x40] sm:$0xf]
    %v242 = vld [vmem:[#allocation3 + $0x44] sm:$0xf]
    %v243 = vld [vmem:[#allocation3 + $0x48] sm:$0xf]
    %v244 = vld [vmem:[#allocation3 + $0x4c] sm:$0xf]
    %v245 = vld [vmem:[#allocation3 + $0x50] sm:$0xf]
    %v246 = vld [vmem:[#allocation3 + $0x54] sm:$0xf]
    %v247 = vld [vmem:[#allocation3 + $0x58] sm:$0xf]
    %v248 = vld [vmem:[#allocation3 + $0x5c] sm:$0xf]
    %v249 = vld [vmem:[#allocation3 + $0x60] sm:$0xf]
    %v250 = vld [vmem:[#allocation3 + $0x64] sm:$0xf]
    %v251 = vld [vmem:[#allocation3 + $0x68] sm:$0xf]
    %v252 = vld [vmem:[#allocation3 + $0x6c] sm:$0xf]
    %v253 = vld [vmem:[#allocation3 + $0x70] sm:$0xf]
    %v254 = vld [vmem:[#allocation3 + $0x74] sm:$0xf]
    %v255 = vld [vmem:[#allocation3 + $0x78] sm:$0xf]
    %v256 = vld [vmem:[#allocation3 + $0x7c] sm:$0xf]
    %257 = vst [vmem:[#allocation2] sm:$0xf] %v225
    %258 = vst [vmem:[#allocation2 + $0xc] sm:$0xf] %v226
    %259 = vst [vmem:[#allocation2 + $0x18] sm:$0xf] %v227
    %260 = vst [vmem:[#allocation2 + $0x24] sm:$0xf] %v228
    %261 = vst [vmem:[#allocation2 + $0x30] sm:$0xf] %v229
    %262 = vst [vmem:[#allocation2 + $0x3c] sm:$0xf] %v230
    %263 = vst [vmem:[#allocation2 + $0x48] sm:$0xf] %v231
    %264 = vst [vmem:[#allocation2 + $0x54] sm:$0xf] %v232
    %265 = vst [vmem:[#allocation2 + $0x60] sm:$0xf] %v233
    %266 = vst [vmem:[#allocation2 + $0x6c] sm:$0xf] %v234
    %267 = vst [vmem:[#allocation2 + $0x78] sm:$0xf] %v235
    %268 = vst [vmem:[#allocation2 + $0x84] sm:$0xf] %v236
    %269 = vst [vmem:[#allocation2 + $0x90] sm:$0xf] %v237
    %270 = vst [vmem:[#allocation2 + $0x9c] sm:$0xf] %v238
    %271 = vst [vmem:[#allocation2 + $0xa8] sm:$0xf] %v239
    %272 = vst [vmem:[#allocation2 + $0xb4] sm:$0xf] %v240
    %273 = vst [vmem:[#allocation2 + $0xc0] sm:$0xf] %v241
    %274 = vst [vmem:[#allocation2 + $0xcc] sm:$0xf] %v242
    %275 = vst [vmem:[#allocation2 + $0xd8] sm:$0xf] %v243
    %276 = vst [vmem:[#allocation2 + $0xe4] sm:$0xf] %v244
    %277 = vst [vmem:[#allocation2 + $0xf0] sm:$0xf] %v245
    %278 = vst [vmem:[#allocation2 + $0xfc] sm:$0xf] %v246
    %279 = vst [vmem:[#allocation2 + $0x108] sm:$0xf] %v247
    %280 = vst [vmem:[#allocation2 + $0x114] sm:$0xf] %v248
    %281 = vst [vmem:[#allocation2 + $0x120] sm:$0xf] %v249
    %282 = vst [vmem:[#allocation2 + $0x12c] sm:$0xf] %v250
    %283 = vst [vmem:[#allocation2 + $0x138] sm:$0xf] %v251
    %284 = vst [vmem:[#allocation2 + $0x144] sm:$0xf] %v252
    %285 = vst [vmem:[#allocation2 + $0x150] sm:$0xf] %v253
    %286 = vst [vmem:[#allocation2 + $0x15c] sm:$0xf] %v254
    %287 = vst [vmem:[#allocation2 + $0x168] sm:$0xf] %v255
    %288 = vst [vmem:[#allocation2 + $0x174] sm:$0xf] %v256
    %v289 = vld [vmem:[#allocation8] sm:$0xff]
    %v290 = vld [vmem:[#allocation8 + $0x8] sm:$0xff]
    %v291 = vld [vmem:[#allocation8 + $0x10] sm:$0xff]
    %v292 = vld [vmem:[#allocation8 + $0x18] sm:$0xff]
    %v293 = vld [vmem:[#allocation8 + $0x20] sm:$0xff]
    %v294 = vld [vmem:[#allocation8 + $0x28] sm:$0xff]
    %v295 = vld [vmem:[#allocation8 + $0x30] sm:$0xff]
    %v296 = vld [vmem:[#allocation8 + $0x38] sm:$0xff]
    %v297 = vld [vmem:[#allocation8 + $0x40] sm:$0xff]
    %v298 = vld [vmem:[#allocation8 + $0x48] sm:$0xff]
    %v299 = vld [vmem:[#allocation8 + $0x50] sm:$0xff]
    %v300 = vld [vmem:[#allocation8 + $0x58] sm:$0xff]
    %v301 = vld [vmem:[#allocation8 + $0x60] sm:$0xff]
    %v302 = vld [vmem:[#allocation8 + $0x68] sm:$0xff]
    %v303 = vld [vmem:[#allocation8 + $0x70] sm:$0xff]
    %v304 = vld [vmem:[#allocation8 + $0x78] sm:$0xff]
    %v305 = vld [vmem:[#allocation8 + $0x80] sm:$0xff]
    %v306 = vld [vmem:[#allocation8 + $0x88] sm:$0xff]
    %v307 = vld [vmem:[#allocation8 + $0x90] sm:$0xff]
    %v308 = vld [vmem:[#allocation8 + $0x98] sm:$0xff]
    %v309 = vld [vmem:[#allocation8 + $0xa0] sm:$0xff]
    %v310 = vld [vmem:[#allocation8 + $0xa8] sm:$0xff]
    %v311 = vld [vmem:[#allocation8 + $0xb0] sm:$0xff]
    %v312 = vld [vmem:[#allocation8 + $0xb8] sm:$0xff]
    %v313 = vld [vmem:[#allocation8 + $0xc0] sm:$0xff]
    %v314 = vld [vmem:[#allocation8 + $0xc8] sm:$0xff]
    %v315 = vld [vmem:[#allocation8 + $0xd0] sm:$0xff]
    %v316 = vld [vmem:[#allocation8 + $0xd8] sm:$0xff]
    %v317 = vld [vmem:[#allocation8 + $0xe0] sm:$0xff]
    %v318 = vld [vmem:[#allocation8 + $0xe8] sm:$0xff]
    %v319 = vld [vmem:[#allocation8 + $0xf0] sm:$0xff]
    %v320 = vld [vmem:[#allocation8 + $0xf8] sm:$0xff]
    %v321 = vld [vmem:[#allocation8 + $0x100] sm:$0xff]
    %v322 = vld [vmem:[#allocation8 + $0x108] sm:$0xff]
    %v323 = vld [vmem:[#allocation8 + $0x110] sm:$0xff]
    %v324 = vld [vmem:[#allocation8 + $0x118] sm:$0xff]
    %v325 = vld [vmem:[#allocation8 + $0x120] sm:$0xff]
    %v326 = vld [vmem:[#allocation8 + $0x128] sm:$0xff]
    %v327 = vld [vmem:[#allocation8 + $0x130] sm:$0xff]
    %v328 = vld [vmem:[#allocation8 + $0x138] sm:$0xff]
    %v329 = vld [vmem:[#allocation8 + $0x140] sm:$0xff]
    %v330 = vld [vmem:[#allocation8 + $0x148] sm:$0xff]
    %v331 = vld [vmem:[#allocation8 + $0x150] sm:$0xff]
    %v332 = vld [vmem:[#allocation8 + $0x158] sm:$0xff]
    %v333 = vld [vmem:[#allocation8 + $0x160] sm:$0xff]
    %v334 = vld [vmem:[#allocation8 + $0x168] sm:$0xff]
    %v335 = vld [vmem:[#allocation8 + $0x170] sm:$0xff]
    %v336 = vld [vmem:[#allocation8 + $0x178] sm:$0xff]
    %v337 = vld [vmem:[#allocation8 + $0x180] sm:$0xff]
    %v338 = vld [vmem:[#allocation8 + $0x188] sm:$0xff]
    %v339 = vld [vmem:[#allocation8 + $0x190] sm:$0xff]
    %v340 = vld [vmem:[#allocation8 + $0x198] sm:$0xff]
    %v341 = vld [vmem:[#allocation8 + $0x1a0] sm:$0xff]
    %v342 = vld [vmem:[#allocation8 + $0x1a8] sm:$0xff]
    %v343 = vld [vmem:[#allocation8 + $0x1b0] sm:$0xff]
    %v344 = vld [vmem:[#allocation8 + $0x1b8] sm:$0xff]
    %v345 = vld [vmem:[#allocation8 + $0x1c0] sm:$0xff]
    %v346 = vld [vmem:[#allocation8 + $0x1c8] sm:$0xff]
    %v347 = vld [vmem:[#allocation8 + $0x1d0] sm:$0xff]
    %v348 = vld [vmem:[#allocation8 + $0x1d8] sm:$0xff]
    %v349 = vld [vmem:[#allocation8 + $0x1e0] sm:$0xff]
    %v350 = vld [vmem:[#allocation8 + $0x1e8] sm:$0xff]
    %v351 = vld [vmem:[#allocation8 + $0x1f0] sm:$0xff]
    %v352 = vld [vmem:[#allocation8 + $0x1f8] sm:$0xff]
    %v385 = vunpack.c.l.b16 %v225
    %v386 = vunpack.c.l.b16 %v226
    %v387 = vunpack.c.l.b16 %v227
    %v388 = vunpack.c.l.b16 %v228
    %v389 = vunpack.c.l.b16 %v229
    %v390 = vunpack.c.l.b16 %v230
    %v391 = vunpack.c.l.b16 %v231
    %v392 = vunpack.c.l.b16 %v232
    %v393 = vunpack.c.l.b16 %v233
    %v394 = vunpack.c.l.b16 %v234
    %v395 = vunpack.c.l.b16 %v235
    %v396 = vunpack.c.l.b16 %v236
    %v397 = vunpack.c.l.b16 %v237
    %v398 = vunpack.c.l.b16 %v238
    %v399 = vunpack.c.l.b16 %v239
    %v400 = vunpack.c.l.b16 %v240
    %v401 = vunpack.c.l.b16 %v241
    %v402 = vunpack.c.l.b16 %v242
    %v403 = vunpack.c.l.b16 %v243
    %v404 = vunpack.c.l.b16 %v244
    %v405 = vunpack.c.l.b16 %v245
    %v406 = vunpack.c.l.b16 %v246
    %v407 = vunpack.c.l.b16 %v247
    %v408 = vunpack.c.l.b16 %v248
    %v409 = vunpack.c.l.b16 %v249
    %v410 = vunpack.c.l.b16 %v250
    %v411 = vunpack.c.l.b16 %v251
    %v412 = vunpack.c.l.b16 %v252
    %v413 = vunpack.c.l.b16 %v253
    %v414 = vunpack.c.l.b16 %v254
    %v415 = vunpack.c.l.b16 %v255
    %v416 = vunpack.c.l.b16 %v256
    %v417 = vpack.c.b16 %v386, %v385
    %v418 = vpack.c.b16 %v388, %v387
    %v419 = vpack.c.b16 %v390, %v389
    %v420 = vpack.c.b16 %v392, %v391
    %v421 = vpack.c.b16 %v394, %v393
    %v422 = vpack.c.b16 %v396, %v395
    %v423 = vpack.c.b16 %v398, %v397
    %v424 = vpack.c.b16 %v400, %v399
    %v425 = vpack.c.b16 %v402, %v401
    %v426 = vpack.c.b16 %v404, %v403
    %v427 = vpack.c.b16 %v406, %v405
    %v428 = vpack.c.b16 %v408, %v407
    %v429 = vpack.c.b16 %v410, %v409
    %v430 = vpack.c.b16 %v412, %v411
    %v431 = vpack.c.b16 %v414, %v413
    %v432 = vpack.c.b16 %v416, %v415
    %v513 = vunpack.c.l.b16 %v289
    %v514 = vunpack.c.h.b16 %v289
    %v515 = vunpack.c.l.b16 %v290
    %v516 = vunpack.c.h.b16 %v290
    %v517 = vunpack.c.l.b16 %v291
    %v518 = vunpack.c.h.b16 %v291
    %v519 = vunpack.c.l.b16 %v292
    %v520 = vunpack.c.h.b16 %v292
    %v521 = vunpack.c.l.b16 %v293
    %v522 = vunpack.c.h.b16 %v293
    %v523 = vunpack.c.l.b16 %v294
    %v524 = vunpack.c.h.b16 %v294
    %v525 = vunpack.c.l.b16 %v295
    %v526 = vunpack.c.h.b16 %v295
    %v527 = vunpack.c.l.b16 %v296
    %v528 = vunpack.c.h.b16 %v296
    %v529 = vunpack.c.l.b16 %v297
    %v530 = vunpack.c.h.b16 %v297
    %v531 = vunpack.c.l.b16 %v298
    %v532 = vunpack.c.h.b16 %v298
    %v533 = vunpack.c.l.b16 %v299
    %v534 = vunpack.c.h.b16 %v299
    %v535 = vunpack.c.l.b16 %v300
    %v536 = vunpack.c.h.b16 %v300
    %v537 = vunpack.c.l.b16 %v301
    %v538 = vunpack.c.h.b16 %v301
    %v539 = vunpack.c.l.b16 %v302
    %v540 = vunpack.c.h.b16 %v302
    %v541 = vunpack.c.l.b16 %v303
    %v542 = vunpack.c.h.b16 %v303
    %v543 = vunpack.c.l.b16 %v304
    %v544 = vunpack.c.h.b16 %v304
    %v545 = vunpack.c.l.b16 %v305
    %v546 = vunpack.c.h.b16 %v305
    %v547 = vunpack.c.l.b16 %v306
    %v548 = vunpack.c.h.b16 %v306
    %v549 = vunpack.c.l.b16 %v307
    %v550 = vunpack.c.h.b16 %v307
    %v551 = vunpack.c.l.b16 %v308
    %v552 = vunpack.c.h.b16 %v308
    %v553 = vunpack.c.l.b16 %v309
    %v554 = vunpack.c.h.b16 %v309
    %v555 = vunpack.c.l.b16 %v310
    %v556 = vunpack.c.h.b16 %v310
    %v557 = vunpack.c.l.b16 %v311
    %v558 = vunpack.c.h.b16 %v311
    %v559 = vunpack.c.l.b16 %v312
    %v560 = vunpack.c.h.b16 %v312
    %v561 = vunpack.c.l.b16 %v313
    %v562 = vunpack.c.h.b16 %v313
    %v563 = vunpack.c.l.b16 %v314
    %v564 = vunpack.c.h.b16 %v314
    %v565 = vunpack.c.l.b16 %v315
    %v566 = vunpack.c.h.b16 %v315
    %v567 = vunpack.c.l.b16 %v316
    %v568 = vunpack.c.h.b16 %v316
    %v569 = vunpack.c.l.b16 %v317
    %v570 = vunpack.c.h.b16 %v317
    %v571 = vunpack.c.l.b16 %v318
    %v572 = vunpack.c.h.b16 %v318
    %v573 = vunpack.c.l.b16 %v319
    %v574 = vunpack.c.h.b16 %v319
    %v575 = vunpack.c.l.b16 %v320
    %v576 = vunpack.c.h.b16 %v320
    %v577 = vunpack.c.l.b16 %v321
    %v578 = vunpack.c.h.b16 %v321
    %v579 = vunpack.c.l.b16 %v322
    %v580 = vunpack.c.h.b16 %v322
    %v581 = vunpack.c.l.b16 %v323
    %v582 = vunpack.c.h.b16 %v323
    %v583 = vunpack.c.l.b16 %v324
    %v584 = vunpack.c.h.b16 %v324
    %v585 = vunpack.c.l.b16 %v325
    %v586 = vunpack.c.h.b16 %v325
    %v587 = vunpack.c.l.b16 %v326
    %v588 = vunpack.c.h.b16 %v326
    %v589 = vunpack.c.l.b16 %v327
    %v590 = vunpack.c.h.b16 %v327
    %v591 = vunpack.c.l.b16 %v328
    %v592 = vunpack.c.h.b16 %v328
    %v593 = vunpack.c.l.b16 %v329
    %v594 = vunpack.c.h.b16 %v329
    %v595 = vunpack.c.l.b16 %v330
    %v596 = vunpack.c.h.b16 %v330
    %v597 = vunpack.c.l.b16 %v331
    %v598 = vunpack.c.h.b16 %v331
    %v599 = vunpack.c.l.b16 %v332
    %v600 = vunpack.c.h.b16 %v332
    %v601 = vunpack.c.l.b16 %v333
    %v602 = vunpack.c.h.b16 %v333
    %v603 = vunpack.c.l.b16 %v334
    %v604 = vunpack.c.h.b16 %v334
    %v605 = vunpack.c.l.b16 %v335
    %v606 = vunpack.c.h.b16 %v335
    %v607 = vunpack.c.l.b16 %v336
    %v608 = vunpack.c.h.b16 %v336
    %v609 = vunpack.c.l.b16 %v337
    %v610 = vunpack.c.h.b16 %v337
    %v611 = vunpack.c.l.b16 %v338
    %v612 = vunpack.c.h.b16 %v338
    %v613 = vunpack.c.l.b16 %v339
    %v614 = vunpack.c.h.b16 %v339
    %v615 = vunpack.c.l.b16 %v340
    %v616 = vunpack.c.h.b16 %v340
    %v617 = vunpack.c.l.b16 %v341
    %v618 = vunpack.c.h.b16 %v341
    %v619 = vunpack.c.l.b16 %v342
    %v620 = vunpack.c.h.b16 %v342
    %v621 = vunpack.c.l.b16 %v343
    %v622 = vunpack.c.h.b16 %v343
    %v623 = vunpack.c.l.b16 %v344
    %v624 = vunpack.c.h.b16 %v344
    %v625 = vunpack.c.l.b16 %v345
    %v626 = vunpack.c.h.b16 %v345
    %v627 = vunpack.c.l.b16 %v346
    %v628 = vunpack.c.h.b16 %v346
    %v629 = vunpack.c.l.b16 %v347
    %v630 = vunpack.c.h.b16 %v347
    %v631 = vunpack.c.l.b16 %v348
    %v632 = vunpack.c.h.b16 %v348
    %v633 = vunpack.c.l.b16 %v349
    %v634 = vunpack.c.h.b16 %v349
    %v635 = vunpack.c.l.b16 %v350
    %v636 = vunpack.c.h.b16 %v350
    %v637 = vunpack.c.l.b16 %v351
    %v638 = vunpack.c.h.b16 %v351
    %v639 = vunpack.c.l.b16 %v352
    %v640 = vunpack.c.h.b16 %v352
    %v641 = vpack.c.b16 %v521, %v513
    %v642 = vpack.c.b16 %v522, %v514
    %v643 = vpack.c.b16 %v523, %v515
    %v644 = vpack.c.b16 %v524, %v516
    %v645 = vpack.c.b16 %v525, %v517
    %v646 = vpack.c.b16 %v526, %v518
    %v647 = vpack.c.b16 %v527, %v519
    %v648 = vpack.c.b16 %v528, %v520
    %v649 = vpack.c.b16 %v537, %v529
    %v650 = vpack.c.b16 %v538, %v530
    %v651 = vpack.c.b16 %v539, %v531
    %v652 = vpack.c.b16 %v540, %v532
    %v653 = vpack.c.b16 %v541, %v533
    %v654 = vpack.c.b16 %v542, %v534
    %v655 = vpack.c.b16 %v543, %v535
    %v656 = vpack.c.b16 %v544, %v536
    %v657 = vpack.c.b16 %v553, %v545
    %v658 = vpack.c.b16 %v554, %v546
    %v659 = vpack.c.b16 %v555, %v547
    %v660 = vpack.c.b16 %v556, %v548
    %v661 = vpack.c.b16 %v557, %v549
    %v662 = vpack.c.b16 %v558, %v550
    %v663 = vpack.c.b16 %v559, %v551
    %v664 = vpack.c.b16 %v560, %v552
    %v665 = vpack.c.b16 %v569, %v561
    %v666 = vpack.c.b16 %v570, %v562
    %v667 = vpack.c.b16 %v571, %v563
    %v668 = vpack.c.b16 %v572, %v564
    %v669 = vpack.c.b16 %v573, %v565
    %v670 = vpack.c.b16 %v574, %v566
    %v671 = vpack.c.b16 %v575, %v567
    %v672 = vpack.c.b16 %v576, %v568
    %v673 = vpack.c.b16 %v585, %v577
    %v674 = vpack.c.b16 %v586, %v578
    %v675 = vpack.c.b16 %v587, %v579
    %v676 = vpack.c.b16 %v588, %v580
    %v677 = vpack.c.b16 %v589, %v581
    %v678 = vpack.c.b16 %v590, %v582
    %v679 = vpack.c.b16 %v591, %v583
    %v680 = vpack.c.b16 %v592, %v584
    %v681 = vpack.c.b16 %v601, %v593
    %v682 = vpack.c.b16 %v602, %v594
    %v683 = vpack.c.b16 %v603, %v595
    %v684 = vpack.c.b16 %v604, %v596
    %v685 = vpack.c.b16 %v605, %v597
    %v686 = vpack.c.b16 %v606, %v598
    %v687 = vpack.c.b16 %v607, %v599
    %v688 = vpack.c.b16 %v608, %v600
    %v689 = vpack.c.b16 %v617, %v609
    %v690 = vpack.c.b16 %v618, %v610
    %v691 = vpack.c.b16 %v619, %v611
    %v692 = vpack.c.b16 %v620, %v612
    %v693 = vpack.c.b16 %v621, %v613
    %v694 = vpack.c.b16 %v622, %v614
    %v695 = vpack.c.b16 %v623, %v615
    %v696 = vpack.c.b16 %v624, %v616
    %v697 = vpack.c.b16 %v633, %v625
    %v698 = vpack.c.b16 %v634, %v626
    %v699 = vpack.c.b16 %v635, %v627
    %v700 = vpack.c.b16 %v636, %v628
    %v701 = vpack.c.b16 %v637, %v629
    %v702 = vpack.c.b16 %v638, %v630
    %v703 = vpack.c.b16 %v639, %v631
    %v704 = vpack.c.b16 %v640, %v632
    %769 = vmatpush.bf16.msra.mxu0 %v697
    %770 = vmatpush.bf16.msra.mxu0 %v689
    %771 = vmatpush.bf16.msra.mxu0 %v681
    %772 = vmatpush.bf16.msra.mxu0 %v673
    %773 = vmatpush.bf16.msra.mxu0 %v665
    %774 = vmatpush.bf16.msra.mxu0 %v657
    %775 = vmatpush.bf16.msra.mxu0 %v649
    %776 = vmatpush.bf16.msra.mxu0 %v641
    %777 = vmatmul.bf16.gmra.mxu0 %v417
    %v778 = vpop.f32.mrf.mxu0
    %v779 = vadd.f32 0.0, %v778
    %v780 = vpop.f32.mrf.mxu0
    %v781 = vadd.f32 0.0, %v780
    %782 = vmatmul.bf16.gmra.mxu0 %v418
    %v783 = vpop.f32.mrf.mxu0
    %v784 = vadd.f32 0.0, %v783
    %v785 = vpop.f32.mrf.mxu0
    %v786 = vadd.f32 0.0, %v785
    %787 = vmatmul.bf16.gmra.mxu0 %v419
    %v788 = vpop.f32.mrf.mxu0
    %v789 = vadd.f32 0.0, %v788
    %v790 = vpop.f32.mrf.mxu0
    %v791 = vadd.f32 0.0, %v790
    %792 = vmatmul.bf16.gmra.mxu0 %v420
    %v793 = vpop.f32.mrf.mxu0
    %v794 = vadd.f32 0.0, %v793
    %v795 = vpop.f32.mrf.mxu0
    %v796 = vadd.f32 0.0, %v795
    %797 = vmatmul.bf16.gmra.mxu0 %v421
    %v798 = vpop.f32.mrf.mxu0
    %v799 = vadd.f32 0.0, %v798
    %v800 = vpop.f32.mrf.mxu0
    %v801 = vadd.f32 0.0, %v800
    %802 = vmatmul.bf16.gmra.mxu0 %v422
    %v803 = vpop.f32.mrf.mxu0
    %v804 = vadd.f32 0.0, %v803
    %v805 = vpop.f32.mrf.mxu0
    %v806 = vadd.f32 0.0, %v805
    %807 = vmatmul.bf16.gmra.mxu0 %v423
    %v808 = vpop.f32.mrf.mxu0
    %v809 = vadd.f32 0.0, %v808
    %v810 = vpop.f32.mrf.mxu0
    %v811 = vadd.f32 0.0, %v810
    %812 = vmatmul.bf16.gmra.mxu0 %v424
    %v813 = vpop.f32.mrf.mxu0
    %v814 = vadd.f32 0.0, %v813
    %v815 = vpop.f32.mrf.mxu0
    %v816 = vadd.f32 0.0, %v815
    %817 = vmatmul.bf16.gmra.mxu0 %v425
    %v818 = vpop.f32.mrf.mxu0
    %v819 = vadd.f32 0.0, %v818
    %v820 = vpop.f32.mrf.mxu0
    %v821 = vadd.f32 0.0, %v820
    %822 = vmatmul.bf16.gmra.mxu0 %v426
    %v823 = vpop.f32.mrf.mxu0
    %v824 = vadd.f32 0.0, %v823
    %v825 = vpop.f32.mrf.mxu0
    %v826 = vadd.f32 0.0, %v825
    %827 = vmatmul.bf16.gmra.mxu0 %v427
    %v828 = vpop.f32.mrf.mxu0
    %v829 = vadd.f32 0.0, %v828
    %v830 = vpop.f32.mrf.mxu0
    %v831 = vadd.f32 0.0, %v830
    %832 = vmatmul.bf16.gmra.mxu0 %v428
    %v833 = vpop.f32.mrf.mxu0
    %v834 = vadd.f32 0.0, %v833
    %v835 = vpop.f32.mrf.mxu0
    %v836 = vadd.f32 0.0, %v835
    %837 = vmatmul.bf16.gmra.mxu0 %v429
    %v838 = vpop.f32.mrf.mxu0
    %v839 = vadd.f32 0.0, %v838
    %v840 = vpop.f32.mrf.mxu0
    %v841 = vadd.f32 0.0, %v840
    %842 = vmatmul.bf16.gmra.mxu0 %v430
    %v843 = vpop.f32.mrf.mxu0
    %v844 = vadd.f32 0.0, %v843
    %v845 = vpop.f32.mrf.mxu0
    %v846 = vadd.f32 0.0, %v845
    %847 = vmatmul.bf16.gmra.mxu0 %v431
    %v848 = vpop.f32.mrf.mxu0
    %v849 = vadd.f32 0.0, %v848
    %v850 = vpop.f32.mrf.mxu0
    %v851 = vadd.f32 0.0, %v850
    %852 = vmatmul.bf16.gmra.mxu0 %v432
    %v853 = vpop.f32.mrf.mxu0
    %v854 = vadd.f32 0.0, %v853
    %v855 = vpop.f32.mrf.mxu0
    %v856 = vadd.f32 0.0, %v855
    %857 = vdwg.mxu0
    %858 = vmatpush.bf16.msra.mxu0 %v698
    %859 = vmatpush.bf16.msra.mxu0 %v690
    %860 = vmatpush.bf16.msra.mxu0 %v682
    %861 = vmatpush.bf16.msra.mxu0 %v674
    %862 = vmatpush.bf16.msra.mxu0 %v666
    %863 = vmatpush.bf16.msra.mxu0 %v658
    %864 = vmatpush.bf16.msra.mxu0 %v650
    %865 = vmatpush.bf16.msra.mxu0 %v642
    %866 = vmatmul.bf16.gmra.mxu0 %v417
    %v867 = vpop.f32.mrf.mxu0
    %v868 = vadd.f32 0.0, %v867
    %v869 = vpop.f32.mrf.mxu0
    %v870 = vadd.f32 0.0, %v869
    %871 = vmatmul.bf16.gmra.mxu0 %v418
    %v872 = vpop.f32.mrf.mxu0
    %v873 = vadd.f32 0.0, %v872
    %v874 = vpop.f32.mrf.mxu0
    %v875 = vadd.f32 0.0, %v874
    %876 = vmatmul.bf16.gmra.mxu0 %v419
    %v877 = vpop.f32.mrf.mxu0
    %v878 = vadd.f32 0.0, %v877
    %v879 = vpop.f32.mrf.mxu0
    %v880 = vadd.f32 0.0, %v879
    %881 = vmatmul.bf16.gmra.mxu0 %v420
    %v882 = vpop.f32.mrf.mxu0
    %v883 = vadd.f32 0.0, %v882
    %v884 = vpop.f32.mrf.mxu0
    %v885 = vadd.f32 0.0, %v884
    %886 = vmatmul.bf16.gmra.mxu0 %v421
    %v887 = vpop.f32.mrf.mxu0
    %v888 = vadd.f32 0.0, %v887
    %v889 = vpop.f32.mrf.mxu0
    %v890 = vadd.f32 0.0, %v889
    %891 = vmatmul.bf16.gmra.mxu0 %v422
    %v892 = vpop.f32.mrf.mxu0
    %v893 = vadd.f32 0.0, %v892
    %v894 = vpop.f32.mrf.mxu0
    %v895 = vadd.f32 0.0, %v894
    %896 = vmatmul.bf16.gmra.mxu0 %v423
    %v897 = vpop.f32.mrf.mxu0
    %v898 = vadd.f32 0.0, %v897
    %v899 = vpop.f32.mrf.mxu0
    %v900 = vadd.f32 0.0, %v899
    %901 = vmatmul.bf16.gmra.mxu0 %v424
    %v902 = vpop.f32.mrf.mxu0
    %v903 = vadd.f32 0.0, %v902
    %v904 = vpop.f32.mrf.mxu0
    %v905 = vadd.f32 0.0, %v904
    %906 = vmatmul.bf16.gmra.mxu0 %v425
    %v907 = vpop.f32.mrf.mxu0
    %v908 = vadd.f32 0.0, %v907
    %v909 = vpop.f32.mrf.mxu0
    %v910 = vadd.f32 0.0, %v909
    %911 = vmatmul.bf16.gmra.mxu0 %v426
    %v912 = vpop.f32.mrf.mxu0
    %v913 = vadd.f32 0.0, %v912
    %v914 = vpop.f32.mrf.mxu0
    %v915 = vadd.f32 0.0, %v914
    %916 = vmatmul.bf16.gmra.mxu0 %v427
    %v917 = vpop.f32.mrf.mxu0
    %v918 = vadd.f32 0.0, %v917
    %v919 = vpop.f32.mrf.mxu0
    %v920 = vadd.f32 0.0, %v919
    %921 = vmatmul.bf16.gmra.mxu0 %v428
    %v922 = vpop.f32.mrf.mxu0
    %v923 = vadd.f32 0.0, %v922
    %v924 = vpop.f32.mrf.mxu0
    %v925 = vadd.f32 0.0, %v924
    %926 = vmatmul.bf16.gmra.mxu0 %v429
    %v927 = vpop.f32.mrf.mxu0
    %v928 = vadd.f32 0.0, %v927
    %v929 = vpop.f32.mrf.mxu0
    %v930 = vadd.f32 0.0, %v929
    %931 = vmatmul.bf16.gmra.mxu0 %v430
    %v932 = vpop.f32.mrf.mxu0
    %v933 = vadd.f32 0.0, %v932
    %v934 = vpop.f32.mrf.mxu0
    %v935 = vadd.f32 0.0, %v934
    %936 = vmatmul.bf16.gmra.mxu0 %v431
    %v937 = vpop.f32.mrf.mxu0
    %v938 = vadd.f32 0.0, %v937
    %v939 = vpop.f32.mrf.mxu0
    %v940 = vadd.f32 0.0, %v939
    %941 = vmatmul.bf16.gmra.mxu0 %v432
    %v942 = vpop.f32.mrf.mxu0
    %v943 = vadd.f32 0.0, %v942
    %v944 = vpop.f32.mrf.mxu0
    %v945 = vadd.f32 0.0, %v944
    %946 = vdwg.mxu0
    %947 = vmatpush.bf16.msra.mxu0 %v699
    %948 = vmatpush.bf16.msra.mxu0 %v691
    %949 = vmatpush.bf16.msra.mxu0 %v683
    %950 = vmatpush.bf16.msra.mxu0 %v675
    %951 = vmatpush.bf16.msra.mxu0 %v667
    %952 = vmatpush.bf16.msra.mxu0 %v659
    %953 = vmatpush.bf16.msra.mxu0 %v651
    %954 = vmatpush.bf16.msra.mxu0 %v643
    %955 = vmatmul.bf16.gmra.mxu0 %v417
    %v956 = vpop.f32.mrf.mxu0
    %v957 = vadd.f32 0.0, %v956
    %v958 = vpop.f32.mrf.mxu0
    %v959 = vadd.f32 0.0, %v958
    %960 = vmatmul.bf16.gmra.mxu0 %v418
    %v961 = vpop.f32.mrf.mxu0
    %v962 = vadd.f32 0.0, %v961
    %v963 = vpop.f32.mrf.mxu0
    %v964 = vadd.f32 0.0, %v963
    %965 = vmatmul.bf16.gmra.mxu0 %v419
    %v966 = vpop.f32.mrf.mxu0
    %v967 = vadd.f32 0.0, %v966
    %v968 = vpop.f32.mrf.mxu0
    %v969 = vadd.f32 0.0, %v968
    %970 = vmatmul.bf16.gmra.mxu0 %v420
    %v971 = vpop.f32.mrf.mxu0
    %v972 = vadd.f32 0.0, %v971
    %v973 = vpop.f32.mrf.mxu0
    %v974 = vadd.f32 0.0, %v973
    %975 = vmatmul.bf16.gmra.mxu0 %v421
    %v976 = vpop.f32.mrf.mxu0
    %v977 = vadd.f32 0.0, %v976
    %v978 = vpop.f32.mrf.mxu0
    %v979 = vadd.f32 0.0, %v978
    %980 = vmatmul.bf16.gmra.mxu0 %v422
    %v981 = vpop.f32.mrf.mxu0
    %v982 = vadd.f32 0.0, %v981
    %v983 = vpop.f32.mrf.mxu0
    %v984 = vadd.f32 0.0, %v983
    %985 = vmatmul.bf16.gmra.mxu0 %v423
    %v986 = vpop.f32.mrf.mxu0
    %v987 = vadd.f32 0.0, %v986
    %v988 = vpop.f32.mrf.mxu0
    %v989 = vadd.f32 0.0, %v988
    %990 = vmatmul.bf16.gmra.mxu0 %v424
    %v991 = vpop.f32.mrf.mxu0
    %v992 = vadd.f32 0.0, %v991
    %v993 = vpop.f32.mrf.mxu0
    %v994 = vadd.f32 0.0, %v993
    %995 = vmatmul.bf16.gmra.mxu0 %v425
    %v996 = vpop.f32.mrf.mxu0
    %v997 = vadd.f32 0.0, %v996
    %v998 = vpop.f32.mrf.mxu0
    %v999 = vadd.f32 0.0, %v998
    %1000 = vmatmul.bf16.gmra.mxu0 %v426
    %v1001 = vpop.f32.mrf.mxu0
    %v1002 = vadd.f32 0.0, %v1001
    %v1003 = vpop.f32.mrf.mxu0
    %v1004 = vadd.f32 0.0, %v1003
    %1005 = vmatmul.bf16.gmra.mxu0 %v427
    %v1006 = vpop.f32.mrf.mxu0
    %v1007 = vadd.f32 0.0, %v1006
    %v1008 = vpop.f32.mrf.mxu0
    %v1009 = vadd.f32 0.0, %v1008
    %1010 = vmatmul.bf16.gmra.mxu0 %v428
    %v1011 = vpop.f32.mrf.mxu0
    %v1012 = vadd.f32 0.0, %v1011
    %v1013 = vpop.f32.mrf.mxu0
    %v1014 = vadd.f32 0.0, %v1013
    %1015 = vmatmul.bf16.gmra.mxu0 %v429
    %v1016 = vpop.f32.mrf.mxu0
    %v1017 = vadd.f32 0.0, %v1016
    %v1018 = vpop.f32.mrf.mxu0
    %v1019 = vadd.f32 0.0, %v1018
    %1020 = vmatmul.bf16.gmra.mxu0 %v430
    %v1021 = vpop.f32.mrf.mxu0
    %v1022 = vadd.f32 0.0, %v1021
    %v1023 = vpop.f32.mrf.mxu0
    %v1024 = vadd.f32 0.0, %v1023
    %1025 = vmatmul.bf16.gmra.mxu0 %v431
    %v1026 = vpop.f32.mrf.mxu0
    %v1027 = vadd.f32 0.0, %v1026
    %v1028 = vpop.f32.mrf.mxu0
    %v1029 = vadd.f32 0.0, %v1028
    %1030 = vmatmul.bf16.gmra.mxu0 %v432
    %v1031 = vpop.f32.mrf.mxu0
    %v1032 = vadd.f32 0.0, %v1031
    %v1033 = vpop.f32.mrf.mxu0
    %v1034 = vadd.f32 0.0, %v1033
    %1035 = vdwg.mxu0
    %1036 = vmatpush.bf16.msra.mxu0 %v700
    %1037 = vmatpush.bf16.msra.mxu0 %v692
    %1038 = vmatpush.bf16.msra.mxu0 %v684
    %1039 = vmatpush.bf16.msra.mxu0 %v676
    %1040 = vmatpush.bf16.msra.mxu0 %v668
    %1041 = vmatpush.bf16.msra.mxu0 %v660
    %1042 = vmatpush.bf16.msra.mxu0 %v652
    %1043 = vmatpush.bf16.msra.mxu0 %v644
    %1044 = vmatmul.bf16.gmra.mxu0 %v417
    %v1045 = vpop.f32.mrf.mxu0
    %v1046 = vadd.f32 0.0, %v1045
    %v1047 = vpop.f32.mrf.mxu0
    %v1048 = vadd.f32 0.0, %v1047
    %1049 = vmatmul.bf16.gmra.mxu0 %v418
    %v1050 = vpop.f32.mrf.mxu0
    %v1051 = vadd.f32 0.0, %v1050
    %v1052 = vpop.f32.mrf.mxu0
    %v1053 = vadd.f32 0.0, %v1052
    %1054 = vmatmul.bf16.gmra.mxu0 %v419
    %v1055 = vpop.f32.mrf.mxu0
    %v1056 = vadd.f32 0.0, %v1055
    %v1057 = vpop.f32.mrf.mxu0
    %v1058 = vadd.f32 0.0, %v1057
    %1059 = vmatmul.bf16.gmra.mxu0 %v420
    %v1060 = vpop.f32.mrf.mxu0
    %v1061 = vadd.f32 0.0, %v1060
    %v1062 = vpop.f32.mrf.mxu0
    %v1063 = vadd.f32 0.0, %v1062
    %1064 = vmatmul.bf16.gmra.mxu0 %v421
    %v1065 = vpop.f32.mrf.mxu0
    %v1066 = vadd.f32 0.0, %v1065
    %v1067 = vpop.f32.mrf.mxu0
    %v1068 = vadd.f32 0.0, %v1067
    %1069 = vmatmul.bf16.gmra.mxu0 %v422
    %v1070 = vpop.f32.mrf.mxu0
    %v1071 = vadd.f32 0.0, %v1070
    %v1072 = vpop.f32.mrf.mxu0
    %v1073 = vadd.f32 0.0, %v1072
    %1074 = vmatmul.bf16.gmra.mxu0 %v423
    %v1075 = vpop.f32.mrf.mxu0
    %v1076 = vadd.f32 0.0, %v1075
    %v1077 = vpop.f32.mrf.mxu0
    %v1078 = vadd.f32 0.0, %v1077
    %1079 = vmatmul.bf16.gmra.mxu0 %v424
    %v1080 = vpop.f32.mrf.mxu0
    %v1081 = vadd.f32 0.0, %v1080
    %v1082 = vpop.f32.mrf.mxu0
    %v1083 = vadd.f32 0.0, %v1082
    %1084 = vmatmul.bf16.gmra.mxu0 %v425
    %v1085 = vpop.f32.mrf.mxu0
    %v1086 = vadd.f32 0.0, %v1085
    %v1087 = vpop.f32.mrf.mxu0
    %v1088 = vadd.f32 0.0, %v1087
    %1089 = vmatmul.bf16.gmra.mxu0 %v426
    %v1090 = vpop.f32.mrf.mxu0
    %v1091 = vadd.f32 0.0, %v1090
    %v1092 = vpop.f32.mrf.mxu0
    %v1093 = vadd.f32 0.0, %v1092
    %1094 = vmatmul.bf16.gmra.mxu0 %v427
    %v1095 = vpop.f32.mrf.mxu0
    %v1096 = vadd.f32 0.0, %v1095
    %v1097 = vpop.f32.mrf.mxu0
    %v1098 = vadd.f32 0.0, %v1097
    %1099 = vmatmul.bf16.gmra.mxu0 %v428
    %v1100 = vpop.f32.mrf.mxu0
    %v1101 = vadd.f32 0.0, %v1100
    %v1102 = vpop.f32.mrf.mxu0
    %v1103 = vadd.f32 0.0, %v1102
    %1104 = vmatmul.bf16.gmra.mxu0 %v429
    %v1105 = vpop.f32.mrf.mxu0
    %v1106 = vadd.f32 0.0, %v1105
    %v1107 = vpop.f32.mrf.mxu0
    %v1108 = vadd.f32 0.0, %v1107
    %1109 = vmatmul.bf16.gmra.mxu0 %v430
    %v1110 = vpop.f32.mrf.mxu0
    %v1111 = vadd.f32 0.0, %v1110
    %v1112 = vpop.f32.mrf.mxu0
    %v1113 = vadd.f32 0.0, %v1112
    %1114 = vmatmul.bf16.gmra.mxu0 %v431
    %v1115 = vpop.f32.mrf.mxu0
    %v1116 = vadd.f32 0.0, %v1115
    %v1117 = vpop.f32.mrf.mxu0
    %v1118 = vadd.f32 0.0, %v1117
    %1119 = vmatmul.bf16.gmra.mxu0 %v432
    %v1120 = vpop.f32.mrf.mxu0
    %v1121 = vadd.f32 0.0, %v1120
    %v1122 = vpop.f32.mrf.mxu0
    %v1123 = vadd.f32 0.0, %v1122
    %1124 = vdwg.mxu0
    %1125 = vmatpush.bf16.msra.mxu0 %v701
    %1126 = vmatpush.bf16.msra.mxu0 %v693
    %1127 = vmatpush.bf16.msra.mxu0 %v685
    %1128 = vmatpush.bf16.msra.mxu0 %v677
    %1129 = vmatpush.bf16.msra.mxu0 %v669
    %1130 = vmatpush.bf16.msra.mxu0 %v661
    %1131 = vmatpush.bf16.msra.mxu0 %v653
    %1132 = vmatpush.bf16.msra.mxu0 %v645
    %1133 = vmatmul.bf16.gmra.mxu0 %v417
    %v1134 = vpop.f32.mrf.mxu0
    %v1135 = vadd.f32 0.0, %v1134
    %v1136 = vpop.f32.mrf.mxu0
    %v1137 = vadd.f32 0.0, %v1136
    %1138 = vmatmul.bf16.gmra.mxu0 %v418
    %v1139 = vpop.f32.mrf.mxu0
    %v1140 = vadd.f32 0.0, %v1139
    %v1141 = vpop.f32.mrf.mxu0
    %v1142 = vadd.f32 0.0, %v1141
    %1143 = vmatmul.bf16.gmra.mxu0 %v419
    %v1144 = vpop.f32.mrf.mxu0
    %v1145 = vadd.f32 0.0, %v1144
    %v1146 = vpop.f32.mrf.mxu0
    %v1147 = vadd.f32 0.0, %v1146
    %1148 = vmatmul.bf16.gmra.mxu0 %v420
    %v1149 = vpop.f32.mrf.mxu0
    %v1150 = vadd.f32 0.0, %v1149
    %v1151 = vpop.f32.mrf.mxu0
    %v1152 = vadd.f32 0.0, %v1151
    %1153 = vmatmul.bf16.gmra.mxu0 %v421
    %v1154 = vpop.f32.mrf.mxu0
    %v1155 = vadd.f32 0.0, %v1154
    %v1156 = vpop.f32.mrf.mxu0
    %v1157 = vadd.f32 0.0, %v1156
    %1158 = vmatmul.bf16.gmra.mxu0 %v422
    %v1159 = vpop.f32.mrf.mxu0
    %v1160 = vadd.f32 0.0, %v1159
    %v1161 = vpop.f32.mrf.mxu0
    %v1162 = vadd.f32 0.0, %v1161
    %1163 = vmatmul.bf16.gmra.mxu0 %v423
    %v1164 = vpop.f32.mrf.mxu0
    %v1165 = vadd.f32 0.0, %v1164
    %v1166 = vpop.f32.mrf.mxu0
    %v1167 = vadd.f32 0.0, %v1166
    %1168 = vmatmul.bf16.gmra.mxu0 %v424
    %v1169 = vpop.f32.mrf.mxu0
    %v1170 = vadd.f32 0.0, %v1169
    %v1171 = vpop.f32.mrf.mxu0
    %v1172 = vadd.f32 0.0, %v1171
    %1173 = vmatmul.bf16.gmra.mxu0 %v425
    %v1174 = vpop.f32.mrf.mxu0
    %v1175 = vadd.f32 0.0, %v1174
    %v1176 = vpop.f32.mrf.mxu0
    %v1177 = vadd.f32 0.0, %v1176
    %1178 = vmatmul.bf16.gmra.mxu0 %v426
    %v1179 = vpop.f32.mrf.mxu0
    %v1180 = vadd.f32 0.0, %v1179
    %v1181 = vpop.f32.mrf.mxu0
    %v1182 = vadd.f32 0.0, %v1181
    %1183 = vmatmul.bf16.gmra.mxu0 %v427
    %v1184 = vpop.f32.mrf.mxu0
    %v1185 = vadd.f32 0.0, %v1184
    %v1186 = vpop.f32.mrf.mxu0
    %v1187 = vadd.f32 0.0, %v1186
    %1188 = vmatmul.bf16.gmra.mxu0 %v428
    %v1189 = vpop.f32.mrf.mxu0
    %v1190 = vadd.f32 0.0, %v1189
    %v1191 = vpop.f32.mrf.mxu0
    %v1192 = vadd.f32 0.0, %v1191
    %1193 = vmatmul.bf16.gmra.mxu0 %v429
    %v1194 = vpop.f32.mrf.mxu0
    %v1195 = vadd.f32 0.0, %v1194
    %v1196 = vpop.f32.mrf.mxu0
    %v1197 = vadd.f32 0.0, %v1196
    %1198 = vmatmul.bf16.gmra.mxu0 %v430
    %v1199 = vpop.f32.mrf.mxu0
    %v1200 = vadd.f32 0.0, %v1199
    %v1201 = vpop.f32.mrf.mxu0
    %v1202 = vadd.f32 0.0, %v1201
    %1203 = vmatmul.bf16.gmra.mxu0 %v431
    %v1204 = vpop.f32.mrf.mxu0
    %v1205 = vadd.f32 0.0, %v1204
    %v1206 = vpop.f32.mrf.mxu0
    %v1207 = vadd.f32 0.0, %v1206
    %1208 = vmatmul.bf16.gmra.mxu0 %v432
    %v1209 = vpop.f32.mrf.mxu0
    %v1210 = vadd.f32 0.0, %v1209
    %v1211 = vpop.f32.mrf.mxu0
    %v1212 = vadd.f32 0.0, %v1211
    %1213 = vdwg.mxu0
    %1214 = vmatpush.bf16.msra.mxu0 %v702
    %1215 = vmatpush.bf16.msra.mxu0 %v694
    %1216 = vmatpush.bf16.msra.mxu0 %v686
    %1217 = vmatpush.bf16.msra.mxu0 %v678
    %1218 = vmatpush.bf16.msra.mxu0 %v670
    %1219 = vmatpush.bf16.msra.mxu0 %v662
    %1220 = vmatpush.bf16.msra.mxu0 %v654
    %1221 = vmatpush.bf16.msra.mxu0 %v646
    %1222 = vmatmul.bf16.gmra.mxu0 %v417
    %v1223 = vpop.f32.mrf.mxu0
    %v1224 = vadd.f32 0.0, %v1223
    %v1225 = vpop.f32.mrf.mxu0
    %v1226 = vadd.f32 0.0, %v1225
    %1227 = vmatmul.bf16.gmra.mxu0 %v418
    %v1228 = vpop.f32.mrf.mxu0
    %v1229 = vadd.f32 0.0, %v1228
    %v1230 = vpop.f32.mrf.mxu0
    %v1231 = vadd.f32 0.0, %v1230
    %1232 = vmatmul.bf16.gmra.mxu0 %v419
    %v1233 = vpop.f32.mrf.mxu0
    %v1234 = vadd.f32 0.0, %v1233
    %v1235 = vpop.f32.mrf.mxu0
    %v1236 = vadd.f32 0.0, %v1235
    %1237 = vmatmul.bf16.gmra.mxu0 %v420
    %v1238 = vpop.f32.mrf.mxu0
    %v1239 = vadd.f32 0.0, %v1238
    %v1240 = vpop.f32.mrf.mxu0
    %v1241 = vadd.f32 0.0, %v1240
    %1242 = vmatmul.bf16.gmra.mxu0 %v421
    %v1243 = vpop.f32.mrf.mxu0
    %v1244 = vadd.f32 0.0, %v1243
    %v1245 = vpop.f32.mrf.mxu0
    %v1246 = vadd.f32 0.0, %v1245
    %1247 = vmatmul.bf16.gmra.mxu0 %v422
    %v1248 = vpop.f32.mrf.mxu0
    %v1249 = vadd.f32 0.0, %v1248
    %v1250 = vpop.f32.mrf.mxu0
    %v1251 = vadd.f32 0.0, %v1250
    %1252 = vmatmul.bf16.gmra.mxu0 %v423
    %v1253 = vpop.f32.mrf.mxu0
    %v1254 = vadd.f32 0.0, %v1253
    %v1255 = vpop.f32.mrf.mxu0
    %v1256 = vadd.f32 0.0, %v1255
    %1257 = vmatmul.bf16.gmra.mxu0 %v424
    %v1258 = vpop.f32.mrf.mxu0
    %v1259 = vadd.f32 0.0, %v1258
    %v1260 = vpop.f32.mrf.mxu0
    %v1261 = vadd.f32 0.0, %v1260
    %1262 = vmatmul.bf16.gmra.mxu0 %v425
    %v1263 = vpop.f32.mrf.mxu0
    %v1264 = vadd.f32 0.0, %v1263
    %v1265 = vpop.f32.mrf.mxu0
    %v1266 = vadd.f32 0.0, %v1265
    %1267 = vmatmul.bf16.gmra.mxu0 %v426
    %v1268 = vpop.f32.mrf.mxu0
    %v1269 = vadd.f32 0.0, %v1268
    %v1270 = vpop.f32.mrf.mxu0
    %v1271 = vadd.f32 0.0, %v1270
    %1272 = vmatmul.bf16.gmra.mxu0 %v427
    %v1273 = vpop.f32.mrf.mxu0
    %v1274 = vadd.f32 0.0, %v1273
    %v1275 = vpop.f32.mrf.mxu0
    %v1276 = vadd.f32 0.0, %v1275
    %1277 = vmatmul.bf16.gmra.mxu0 %v428
    %v1278 = vpop.f32.mrf.mxu0
    %v1279 = vadd.f32 0.0, %v1278
    %v1280 = vpop.f32.mrf.mxu0
    %v1281 = vadd.f32 0.0, %v1280
    %1282 = vmatmul.bf16.gmra.mxu0 %v429
    %v1283 = vpop.f32.mrf.mxu0
    %v1284 = vadd.f32 0.0, %v1283
    %v1285 = vpop.f32.mrf.mxu0
    %v1286 = vadd.f32 0.0, %v1285
    %1287 = vmatmul.bf16.gmra.mxu0 %v430
    %v1288 = vpop.f32.mrf.mxu0
    %v1289 = vadd.f32 0.0, %v1288
    %v1290 = vpop.f32.mrf.mxu0
    %v1291 = vadd.f32 0.0, %v1290
    %1292 = vmatmul.bf16.gmra.mxu0 %v431
    %v1293 = vpop.f32.mrf.mxu0
    %v1294 = vadd.f32 0.0, %v1293
    %v1295 = vpop.f32.mrf.mxu0
    %v1296 = vadd.f32 0.0, %v1295
    %1297 = vmatmul.bf16.gmra.mxu0 %v432
    %v1298 = vpop.f32.mrf.mxu0
    %v1299 = vadd.f32 0.0, %v1298
    %v1300 = vpop.f32.mrf.mxu0
    %v1301 = vadd.f32 0.0, %v1300
    %1302 = vdwg.mxu0
    %1303 = vmatpush.bf16.msra.mxu0 %v703
    %1304 = vmatpush.bf16.msra.mxu0 %v695
    %1305 = vmatpush.bf16.msra.mxu0 %v687
    %1306 = vmatpush.bf16.msra.mxu0 %v679
    %1307 = vmatpush.bf16.msra.mxu0 %v671
    %1308 = vmatpush.bf16.msra.mxu0 %v663
    %1309 = vmatpush.bf16.msra.mxu0 %v655
    %1310 = vmatpush.bf16.msra.mxu0 %v647
    %1311 = vmatmul.bf16.gmra.mxu0 %v417
    %v1312 = vpop.f32.mrf.mxu0
    %v1313 = vadd.f32 0.0, %v1312
    %v1314 = vpop.f32.mrf.mxu0
    %v1315 = vadd.f32 0.0, %v1314
    %1316 = vmatmul.bf16.gmra.mxu0 %v418
    %v1317 = vpop.f32.mrf.mxu0
    %v1318 = vadd.f32 0.0, %v1317
    %v1319 = vpop.f32.mrf.mxu0
    %v1320 = vadd.f32 0.0, %v1319
    %1321 = vmatmul.bf16.gmra.mxu0 %v419
    %v1322 = vpop.f32.mrf.mxu0
    %v1323 = vadd.f32 0.0, %v1322
    %v1324 = vpop.f32.mrf.mxu0
    %v1325 = vadd.f32 0.0, %v1324
    %1326 = vmatmul.bf16.gmra.mxu0 %v420
    %v1327 = vpop.f32.mrf.mxu0
    %v1328 = vadd.f32 0.0, %v1327
    %v1329 = vpop.f32.mrf.mxu0
    %v1330 = vadd.f32 0.0, %v1329
    %1331 = vmatmul.bf16.gmra.mxu0 %v421
    %v1332 = vpop.f32.mrf.mxu0
    %v1333 = vadd.f32 0.0, %v1332
    %v1334 = vpop.f32.mrf.mxu0
    %v1335 = vadd.f32 0.0, %v1334
    %1336 = vmatmul.bf16.gmra.mxu0 %v422
    %v1337 = vpop.f32.mrf.mxu0
    %v1338 = vadd.f32 0.0, %v1337
    %v1339 = vpop.f32.mrf.mxu0
    %v1340 = vadd.f32 0.0, %v1339
    %1341 = vmatmul.bf16.gmra.mxu0 %v423
    %v1342 = vpop.f32.mrf.mxu0
    %v1343 = vadd.f32 0.0, %v1342
    %v1344 = vpop.f32.mrf.mxu0
    %v1345 = vadd.f32 0.0, %v1344
    %1346 = vmatmul.bf16.gmra.mxu0 %v424
    %v1347 = vpop.f32.mrf.mxu0
    %v1348 = vadd.f32 0.0, %v1347
    %v1349 = vpop.f32.mrf.mxu0
    %v1350 = vadd.f32 0.0, %v1349
    %1351 = vmatmul.bf16.gmra.mxu0 %v425
    %v1352 = vpop.f32.mrf.mxu0
    %v1353 = vadd.f32 0.0, %v1352
    %v1354 = vpop.f32.mrf.mxu0
    %v1355 = vadd.f32 0.0, %v1354
    %1356 = vmatmul.bf16.gmra.mxu0 %v426
    %v1357 = vpop.f32.mrf.mxu0
    %v1358 = vadd.f32 0.0, %v1357
    %v1359 = vpop.f32.mrf.mxu0
    %v1360 = vadd.f32 0.0, %v1359
    %1361 = vmatmul.bf16.gmra.mxu0 %v427
    %v1362 = vpop.f32.mrf.mxu0
    %v1363 = vadd.f32 0.0, %v1362
    %v1364 = vpop.f32.mrf.mxu0
    %v1365 = vadd.f32 0.0, %v1364
    %1366 = vmatmul.bf16.gmra.mxu0 %v428
    %v1367 = vpop.f32.mrf.mxu0
    %v1368 = vadd.f32 0.0, %v1367
    %v1369 = vpop.f32.mrf.mxu0
    %v1370 = vadd.f32 0.0, %v1369
    %1371 = vmatmul.bf16.gmra.mxu0 %v429
    %v1372 = vpop.f32.mrf.mxu0
    %v1373 = vadd.f32 0.0, %v1372
    %v1374 = vpop.f32.mrf.mxu0
    %v1375 = vadd.f32 0.0, %v1374
    %1376 = vmatmul.bf16.gmra.mxu0 %v430
    %v1377 = vpop.f32.mrf.mxu0
    %v1378 = vadd.f32 0.0, %v1377
    %v1379 = vpop.f32.mrf.mxu0
    %v1380 = vadd.f32 0.0, %v1379
    %1381 = vmatmul.bf16.gmra.mxu0 %v431
    %v1382 = vpop.f32.mrf.mxu0
    %v1383 = vadd.f32 0.0, %v1382
    %v1384 = vpop.f32.mrf.mxu0
    %v1385 = vadd.f32 0.0, %v1384
    %1386 = vmatmul.bf16.gmra.mxu0 %v432
    %v1387 = vpop.f32.mrf.mxu0
    %v1388 = vadd.f32 0.0, %v1387
    %v1389 = vpop.f32.mrf.mxu0
    %v1390 = vadd.f32 0.0, %v1389
    %1391 = vdwg.mxu0
    %1392 = vmatpush.bf16.msra.mxu0 %v704
    %1393 = vmatpush.bf16.msra.mxu0 %v696
    %1394 = vmatpush.bf16.msra.mxu0 %v688
    %1395 = vmatpush.bf16.msra.mxu0 %v680
    %1396 = vmatpush.bf16.msra.mxu0 %v672
    %1397 = vmatpush.bf16.msra.mxu0 %v664
    %1398 = vmatpush.bf16.msra.mxu0 %v656
    %1399 = vmatpush.bf16.msra.mxu0 %v648
    %1400 = vmatmul.bf16.gmra.mxu0 %v417
    %v1401 = vpop.f32.mrf.mxu0
    %v1402 = vadd.f32 0.0, %v1401
    %v1403 = vpop.f32.mrf.mxu0
    %v1404 = vadd.f32 0.0, %v1403
    %1405 = vmatmul.bf16.gmra.mxu0 %v418
    %v1406 = vpop.f32.mrf.mxu0
    %v1407 = vadd.f32 0.0, %v1406
    %v1408 = vpop.f32.mrf.mxu0
    %v1409 = vadd.f32 0.0, %v1408
    %1410 = vmatmul.bf16.gmra.mxu0 %v419
    %v1411 = vpop.f32.mrf.mxu0
    %v1412 = vadd.f32 0.0, %v1411
    %v1413 = vpop.f32.mrf.mxu0
    %v1414 = vadd.f32 0.0, %v1413
    %1415 = vmatmul.bf16.gmra.mxu0 %v420
    %v1416 = vpop.f32.mrf.mxu0
    %v1417 = vadd.f32 0.0, %v1416
    %v1418 = vpop.f32.mrf.mxu0
    %v1419 = vadd.f32 0.0, %v1418
    %1420 = vmatmul.bf16.gmra.mxu0 %v421
    %v1421 = vpop.f32.mrf.mxu0
    %v1422 = vadd.f32 0.0, %v1421
    %v1423 = vpop.f32.mrf.mxu0
    %v1424 = vadd.f32 0.0, %v1423
    %1425 = vmatmul.bf16.gmra.mxu0 %v422
    %v1426 = vpop.f32.mrf.mxu0
    %v1427 = vadd.f32 0.0, %v1426
    %v1428 = vpop.f32.mrf.mxu0
    %v1429 = vadd.f32 0.0, %v1428
    %1430 = vmatmul.bf16.gmra.mxu0 %v423
    %v1431 = vpop.f32.mrf.mxu0
    %v1432 = vadd.f32 0.0, %v1431
    %v1433 = vpop.f32.mrf.mxu0
    %v1434 = vadd.f32 0.0, %v1433
    %1435 = vmatmul.bf16.gmra.mxu0 %v424
    %v1436 = vpop.f32.mrf.mxu0
    %v1437 = vadd.f32 0.0, %v1436
    %v1438 = vpop.f32.mrf.mxu0
    %v1439 = vadd.f32 0.0, %v1438
    %1440 = vmatmul.bf16.gmra.mxu0 %v425
    %v1441 = vpop.f32.mrf.mxu0
    %v1442 = vadd.f32 0.0, %v1441
    %v1443 = vpop.f32.mrf.mxu0
    %v1444 = vadd.f32 0.0, %v1443
    %1445 = vmatmul.bf16.gmra.mxu0 %v426
    %v1446 = vpop.f32.mrf.mxu0
    %v1447 = vadd.f32 0.0, %v1446
    %v1448 = vpop.f32.mrf.mxu0
    %v1449 = vadd.f32 0.0, %v1448
    %1450 = vmatmul.bf16.gmra.mxu0 %v427
    %v1451 = vpop.f32.mrf.mxu0
    %v1452 = vadd.f32 0.0, %v1451
    %v1453 = vpop.f32.mrf.mxu0
    %v1454 = vadd.f32 0.0, %v1453
    %1455 = vmatmul.bf16.gmra.mxu0 %v428
    %v1456 = vpop.f32.mrf.mxu0
    %v1457 = vadd.f32 0.0, %v1456
    %v1458 = vpop.f32.mrf.mxu0
    %v1459 = vadd.f32 0.0, %v1458
    %1460 = vmatmul.bf16.gmra.mxu0 %v429
    %v1461 = vpop.f32.mrf.mxu0
    %v1462 = vadd.f32 0.0, %v1461
    %v1463 = vpop.f32.mrf.mxu0
    %v1464 = vadd.f32 0.0, %v1463
    %1465 = vmatmul.bf16.gmra.mxu0 %v430
    %v1466 = vpop.f32.mrf.mxu0
    %v1467 = vadd.f32 0.0, %v1466
    %v1468 = vpop.f32.mrf.mxu0
    %v1469 = vadd.f32 0.0, %v1468
    %1470 = vmatmul.bf16.gmra.mxu0 %v431
    %v1471 = vpop.f32.mrf.mxu0
    %v1472 = vadd.f32 0.0, %v1471
    %v1473 = vpop.f32.mrf.mxu0
    %v1474 = vadd.f32 0.0, %v1473
    %1475 = vmatmul.bf16.gmra.mxu0 %v432
    %v1476 = vpop.f32.mrf.mxu0
    %v1477 = vadd.f32 0.0, %v1476
    %v1478 = vpop.f32.mrf.mxu0
    %v1479 = vadd.f32 0.0, %v1478
    %1480 = vdwg.mxu0
    %v1481 = vld [vmem:[%s3] sm:$0xf]
    %v1483 = vperm.slane %v1481, 0
    %v1484 = vperm.slane %v1481, 1
    %v1485 = vperm.slane %v1481, 2
    %v1486 = vperm.slane %v1481, 3
    %v1491 = vadd.f32 %v1135, %v1483
    %v1492 = vadd.f32 %v1224, %v1484
    %v1493 = vadd.f32 %v1313, %v1485
    %v1494 = vadd.f32 %v1402, %v1486
    %v1495 = vadd.f32 %v1137, %v1483
    %v1496 = vadd.f32 %v1226, %v1484
    %v1497 = vadd.f32 %v1315, %v1485
    %v1498 = vadd.f32 %v1404, %v1486
    %v1499 = vadd.f32 %v1140, %v1483
    %v1500 = vadd.f32 %v1229, %v1484
    %v1501 = vadd.f32 %v1318, %v1485
    %v1502 = vadd.f32 %v1407, %v1486
    %v1503 = vadd.f32 %v1142, %v1483
    %v1504 = vadd.f32 %v1231, %v1484
    %v1505 = vadd.f32 %v1320, %v1485
    %v1506 = vadd.f32 %v1409, %v1486
    %v1507 = vadd.f32 %v1145, %v1483
    %v1508 = vadd.f32 %v1234, %v1484
    %v1509 = vadd.f32 %v1323, %v1485
    %v1510 = vadd.f32 %v1412, %v1486
    %v1511 = vadd.f32 %v1147, %v1483
    %v1512 = vadd.f32 %v1236, %v1484
    %v1513 = vadd.f32 %v1325, %v1485
    %v1514 = vadd.f32 %v1414, %v1486
    %v1515 = vadd.f32 %v1150, %v1483
    %v1516 = vadd.f32 %v1239, %v1484
    %v1517 = vadd.f32 %v1328, %v1485
    %v1518 = vadd.f32 %v1417, %v1486
    %v1519 = vadd.f32 %v1152, %v1483
    %v1520 = vadd.f32 %v1241, %v1484
    %v1521 = vadd.f32 %v1330, %v1485
    %v1522 = vadd.f32 %v1419, %v1486
    %v1523 = vadd.f32 %v1155, %v1483
    %v1524 = vadd.f32 %v1244, %v1484
    %v1525 = vadd.f32 %v1333, %v1485
    %v1526 = vadd.f32 %v1422, %v1486
    %v1527 = vadd.f32 %v1157, %v1483
    %v1528 = vadd.f32 %v1246, %v1484
    %v1529 = vadd.f32 %v1335, %v1485
    %v1530 = vadd.f32 %v1424, %v1486
    %v1531 = vadd.f32 %v1160, %v1483
    %v1532 = vadd.f32 %v1249, %v1484
    %v1533 = vadd.f32 %v1338, %v1485
    %v1534 = vadd.f32 %v1427, %v1486
    %v1535 = vadd.f32 %v1162, %v1483
    %v1536 = vadd.f32 %v1251, %v1484
    %v1537 = vadd.f32 %v1340, %v1485
    %v1538 = vadd.f32 %v1429, %v1486
    %v1539 = vadd.f32 %v1165, %v1483
    %v1540 = vadd.f32 %v1254, %v1484
    %v1541 = vadd.f32 %v1343, %v1485
    %v1542 = vadd.f32 %v1432, %v1486
    %v1543 = vadd.f32 %v1167, %v1483
    %v1544 = vadd.f32 %v1256, %v1484
    %v1545 = vadd.f32 %v1345, %v1485
    %v1546 = vadd.f32 %v1434, %v1486
    %v1547 = vadd.f32 %v1170, %v1483
    %v1548 = vadd.f32 %v1259, %v1484
    %v1549 = vadd.f32 %v1348, %v1485
    %v1550 = vadd.f32 %v1437, %v1486
    %v1551 = vadd.f32 %v1172, %v1483
    %v1552 = vadd.f32 %v1261, %v1484
    %v1553 = vadd.f32 %v1350, %v1485
    %v1554 = vadd.f32 %v1439, %v1486
    %v1555 = vadd.f32 %v1175, %v1483
    %v1556 = vadd.f32 %v1264, %v1484
    %v1557 = vadd.f32 %v1353, %v1485
    %v1558 = vadd.f32 %v1442, %v1486
    %v1559 = vadd.f32 %v1177, %v1483
    %v1560 = vadd.f32 %v1266, %v1484
    %v1561 = vadd.f32 %v1355, %v1485
    %v1562 = vadd.f32 %v1444, %v1486
    %v1563 = vadd.f32 %v1180, %v1483
    %v1564 = vadd.f32 %v1269, %v1484
    %v1565 = vadd.f32 %v1358, %v1485
    %v1566 = vadd.f32 %v1447, %v1486
    %v1567 = vadd.f32 %v1182, %v1483
    %v1568 = vadd.f32 %v1271, %v1484
    %v1569 = vadd.f32 %v1360, %v1485
    %v1570 = vadd.f32 %v1449, %v1486
    %v1571 = vadd.f32 %v1185, %v1483
    %v1572 = vadd.f32 %v1274, %v1484
    %v1573 = vadd.f32 %v1363, %v1485
    %v1574 = vadd.f32 %v1452, %v1486
    %v1575 = vadd.f32 %v1187, %v1483
    %v1576 = vadd.f32 %v1276, %v1484
    %v1577 = vadd.f32 %v1365, %v1485
    %v1578 = vadd.f32 %v1454, %v1486
    %v1579 = vadd.f32 %v1190, %v1483
    %v1580 = vadd.f32 %v1279, %v1484
    %v1581 = vadd.f32 %v1368, %v1485
    %v1582 = vadd.f32 %v1457, %v1486
    %v1583 = vadd.f32 %v1192, %v1483
    %v1584 = vadd.f32 %v1281, %v1484
    %v1585 = vadd.f32 %v1370, %v1485
    %v1586 = vadd.f32 %v1459, %v1486
    %v1587 = vadd.f32 %v1195, %v1483
    %v1588 = vadd.f32 %v1284, %v1484
    %v1589 = vadd.f32 %v1373, %v1485
    %v1590 = vadd.f32 %v1462, %v1486
    %v1591 = vadd.f32 %v1197, %v1483
    %v1592 = vadd.f32 %v1286, %v1484
    %v1593 = vadd.f32 %v1375, %v1485
    %v1594 = vadd.f32 %v1464, %v1486
    %v1595 = vadd.f32 %v1200, %v1483
    %v1596 = vadd.f32 %v1289, %v1484
    %v1597 = vadd.f32 %v1378, %v1485
    %v1598 = vadd.f32 %v1467, %v1486
    %v1599 = vadd.f32 %v1202, %v1483
    %v1600 = vadd.f32 %v1291, %v1484
    %v1601 = vadd.f32 %v1380, %v1485
    %v1602 = vadd.f32 %v1469, %v1486
    %v1603 = vadd.f32 %v1205, %v1483
    %v1604 = vadd.f32 %v1294, %v1484
    %v1605 = vadd.f32 %v1383, %v1485
    %v1606 = vadd.f32 %v1472, %v1486
    %v1607 = vadd.f32 %v1207, %v1483
    %v1608 = vadd.f32 %v1296, %v1484
    %v1609 = vadd.f32 %v1385, %v1485
    %v1610 = vadd.f32 %v1474, %v1486
    %v1611 = vadd.f32 %v1210, %v1483
    %v1612 = vadd.f32 %v1299, %v1484
    %v1613 = vadd.f32 %v1388, %v1485
    %v1614 = vadd.f32 %v1477, %v1486
    %v1615 = vadd.f32 %v1212, %v1483
    %v1616 = vadd.f32 %v1301, %v1484
    %v1617 = vadd.f32 %v1390, %v1485
    %v1618 = vadd.f32 %v1479, %v1486
    %v1619 = vpack.c.bf16 %v781, %v779
    %v1620 = vpack.c.bf16 %v870, %v868
    %v1621 = vpack.c.bf16 %v959, %v957
    %v1622 = vpack.c.bf16 %v1048, %v1046
    %v1623 = vpack.c.bf16 %v786, %v784
    %v1624 = vpack.c.bf16 %v875, %v873
    %v1625 = vpack.c.bf16 %v964, %v962
    %v1626 = vpack.c.bf16 %v1053, %v1051
    %v1627 = vpack.c.bf16 %v791, %v789
    %v1628 = vpack.c.bf16 %v880, %v878
    %v1629 = vpack.c.bf16 %v969, %v967
    %v1630 = vpack.c.bf16 %v1058, %v1056
    %v1631 = vpack.c.bf16 %v796, %v794
    %v1632 = vpack.c.bf16 %v885, %v883
    %v1633 = vpack.c.bf16 %v974, %v972
    %v1634 = vpack.c.bf16 %v1063, %v1061
    %v1635 = vpack.c.bf16 %v801, %v799
    %v1636 = vpack.c.bf16 %v890, %v888
    %v1637 = vpack.c.bf16 %v979, %v977
    %v1638 = vpack.c.bf16 %v1068, %v1066
    %v1639 = vpack.c.bf16 %v806, %v804
    %v1640 = vpack.c.bf16 %v895, %v893
    %v1641 = vpack.c.bf16 %v984, %v982
    %v1642 = vpack.c.bf16 %v1073, %v1071
    %v1643 = vpack.c.bf16 %v811, %v809
    %v1644 = vpack.c.bf16 %v900, %v898
    %v1645 = vpack.c.bf16 %v989, %v987
    %v1646 = vpack.c.bf16 %v1078, %v1076
    %v1647 = vpack.c.bf16 %v816, %v814
    %v1648 = vpack.c.bf16 %v905, %v903
    %v1649 = vpack.c.bf16 %v994, %v992
    %v1650 = vpack.c.bf16 %v1083, %v1081
    %v1651 = vpack.c.bf16 %v821, %v819
    %v1652 = vpack.c.bf16 %v910, %v908
    %v1653 = vpack.c.bf16 %v999, %v997
    %v1654 = vpack.c.bf16 %v1088, %v1086
    %v1655 = vpack.c.bf16 %v826, %v824
    %v1656 = vpack.c.bf16 %v915, %v913
    %v1657 = vpack.c.bf16 %v1004, %v1002
    %v1658 = vpack.c.bf16 %v1093, %v1091
    %v1659 = vpack.c.bf16 %v831, %v829
    %v1660 = vpack.c.bf16 %v920, %v918
    %v1661 = vpack.c.bf16 %v1009, %v1007
    %v1662 = vpack.c.bf16 %v1098, %v1096
    %v1663 = vpack.c.bf16 %v836, %v834
    %v1664 = vpack.c.bf16 %v925, %v923
    %v1665 = vpack.c.bf16 %v1014, %v1012
    %v1666 = vpack.c.bf16 %v1103, %v1101
    %v1667 = vpack.c.bf16 %v841, %v839
    %v1668 = vpack.c.bf16 %v930, %v928
    %v1669 = vpack.c.bf16 %v1019, %v1017
    %v1670 = vpack.c.bf16 %v1108, %v1106
    %v1671 = vpack.c.bf16 %v846, %v844
    %v1672 = vpack.c.bf16 %v935, %v933
    %v1673 = vpack.c.bf16 %v1024, %v1022
    %v1674 = vpack.c.bf16 %v1113, %v1111
    %v1675 = vpack.c.bf16 %v851, %v849
    %v1676 = vpack.c.bf16 %v940, %v938
    %v1677 = vpack.c.bf16 %v1029, %v1027
    %v1678 = vpack.c.bf16 %v1118, %v1116
    %v1679 = vpack.c.bf16 %v856, %v854
    %v1680 = vpack.c.bf16 %v945, %v943
    %v1681 = vpack.c.bf16 %v1034, %v1032
    %v1682 = vpack.c.bf16 %v1123, %v1121
    %v1715 = vunpack.c.l.b16 %v193
    %v1716 = vunpack.c.h.b16 %v193
    %v1717 = vunpack.c.l.b16 %v194
    %v1718 = vunpack.c.h.b16 %v194
    %v1719 = vunpack.c.l.b16 %v195
    %v1720 = vunpack.c.h.b16 %v195
    %v1721 = vunpack.c.l.b16 %v196
    %v1722 = vunpack.c.h.b16 %v196
    %v1723 = vunpack.c.l.b16 %v197
    %v1724 = vunpack.c.h.b16 %v197
    %v1725 = vunpack.c.l.b16 %v198
    %v1726 = vunpack.c.h.b16 %v198
    %v1727 = vunpack.c.l.b16 %v199
    %v1728 = vunpack.c.h.b16 %v199
    %v1729 = vunpack.c.l.b16 %v200
    %v1730 = vunpack.c.h.b16 %v200
    %v1731 = vunpack.c.l.b16 %v201
    %v1732 = vunpack.c.h.b16 %v201
    %v1733 = vunpack.c.l.b16 %v202
    %v1734 = vunpack.c.h.b16 %v202
    %v1735 = vunpack.c.l.b16 %v203
    %v1736 = vunpack.c.h.b16 %v203
    %v1737 = vunpack.c.l.b16 %v204
    %v1738 = vunpack.c.h.b16 %v204
    %v1739 = vunpack.c.l.b16 %v205
    %v1740 = vunpack.c.h.b16 %v205
    %v1741 = vunpack.c.l.b16 %v206
    %v1742 = vunpack.c.h.b16 %v206
    %v1743 = vunpack.c.l.b16 %v207
    %v1744 = vunpack.c.h.b16 %v207
    %v1745 = vunpack.c.l.b16 %v208
    %v1746 = vunpack.c.h.b16 %v208
    %v1747 = vunpack.c.l.b16 %v209
    %v1748 = vunpack.c.h.b16 %v209
    %v1749 = vunpack.c.l.b16 %v210
    %v1750 = vunpack.c.h.b16 %v210
    %v1751 = vunpack.c.l.b16 %v211
    %v1752 = vunpack.c.h.b16 %v211
    %v1753 = vunpack.c.l.b16 %v212
    %v1754 = vunpack.c.h.b16 %v212
    %v1755 = vunpack.c.l.b16 %v213
    %v1756 = vunpack.c.h.b16 %v213
    %v1757 = vunpack.c.l.b16 %v214
    %v1758 = vunpack.c.h.b16 %v214
    %v1759 = vunpack.c.l.b16 %v215
    %v1760 = vunpack.c.h.b16 %v215
    %v1761 = vunpack.c.l.b16 %v216
    %v1762 = vunpack.c.h.b16 %v216
    %v1763 = vunpack.c.l.b16 %v217
    %v1764 = vunpack.c.h.b16 %v217
    %v1765 = vunpack.c.l.b16 %v218
    %v1766 = vunpack.c.h.b16 %v218
    %v1767 = vunpack.c.l.b16 %v219
    %v1768 = vunpack.c.h.b16 %v219
    %v1769 = vunpack.c.l.b16 %v220
    %v1770 = vunpack.c.h.b16 %v220
    %v1771 = vunpack.c.l.b16 %v221
    %v1772 = vunpack.c.h.b16 %v221
    %v1773 = vunpack.c.l.b16 %v222
    %v1774 = vunpack.c.h.b16 %v222
    %v1775 = vunpack.c.l.b16 %v223
    %v1776 = vunpack.c.h.b16 %v223
    %v1777 = vunpack.c.l.b16 %v224
    %v1778 = vunpack.c.h.b16 %v224
    %v1779 = vpack.c.b16 %v1717, %v1715
    %v1780 = vpack.c.b16 %v1718, %v1716
    %v1781 = vpack.c.b16 %v1721, %v1719
    %v1782 = vpack.c.b16 %v1722, %v1720
    %v1783 = vpack.c.b16 %v1725, %v1723
    %v1784 = vpack.c.b16 %v1726, %v1724
    %v1785 = vpack.c.b16 %v1729, %v1727
    %v1786 = vpack.c.b16 %v1730, %v1728
    %v1787 = vpack.c.b16 %v1733, %v1731
    %v1788 = vpack.c.b16 %v1734, %v1732
    %v1789 = vpack.c.b16 %v1737, %v1735
    %v1790 = vpack.c.b16 %v1738, %v1736
    %v1791 = vpack.c.b16 %v1741, %v1739
    %v1792 = vpack.c.b16 %v1742, %v1740
    %v1793 = vpack.c.b16 %v1745, %v1743
    %v1794 = vpack.c.b16 %v1746, %v1744
    %v1795 = vpack.c.b16 %v1749, %v1747
    %v1796 = vpack.c.b16 %v1750, %v1748
    %v1797 = vpack.c.b16 %v1753, %v1751
    %v1798 = vpack.c.b16 %v1754, %v1752
    %v1799 = vpack.c.b16 %v1757, %v1755
    %v1800 = vpack.c.b16 %v1758, %v1756
    %v1801 = vpack.c.b16 %v1761, %v1759
    %v1802 = vpack.c.b16 %v1762, %v1760
    %v1803 = vpack.c.b16 %v1765, %v1763
    %v1804 = vpack.c.b16 %v1766, %v1764
    %v1805 = vpack.c.b16 %v1769, %v1767
    %v1806 = vpack.c.b16 %v1770, %v1768
    %v1807 = vpack.c.b16 %v1773, %v1771
    %v1808 = vpack.c.b16 %v1774, %v1772
    %v1809 = vpack.c.b16 %v1777, %v1775
    %v1810 = vpack.c.b16 %v1778, %v1776
    %1843 = vmatpush.bf16.msra.mxu0 %v1647
    %1844 = vmatpush.bf16.msra.mxu0 %v1643
    %1845 = vmatpush.bf16.msra.mxu0 %v1639
    %1846 = vmatpush.bf16.msra.mxu0 %v1635
    %1847 = vmatpush.bf16.msra.mxu0 %v1631
    %1848 = vmatpush.bf16.msra.mxu0 %v1627
    %1849 = vmatpush.bf16.msra.mxu0 %v1623
    %1850 = vmatpush.bf16.msra.mxu0 %v1619
    %1851 = vmatmul.bf16.gmra.mxu0 %v1779
    %v1852 = vpop.f32.mrf.mxu0
    %v1853 = vadd.f32 0.0, %v1852
    %v1854 = vpop.f32.mrf.mxu0
    %v1855 = vadd.f32 0.0, %v1854
    %1856 = vmatmul.bf16.gmra.mxu0 %v1781
    %v1857 = vpop.f32.mrf.mxu0
    %v1858 = vadd.f32 0.0, %v1857
    %v1859 = vpop.f32.mrf.mxu0
    %v1860 = vadd.f32 0.0, %v1859
    %1861 = vmatmul.bf16.gmra.mxu0 %v1783
    %v1862 = vpop.f32.mrf.mxu0
    %v1863 = vadd.f32 0.0, %v1862
    %v1864 = vpop.f32.mrf.mxu0
    %v1865 = vadd.f32 0.0, %v1864
    %1866 = vmatmul.bf16.gmra.mxu0 %v1785
    %v1867 = vpop.f32.mrf.mxu0
    %v1868 = vadd.f32 0.0, %v1867
    %v1869 = vpop.f32.mrf.mxu0
    %v1870 = vadd.f32 0.0, %v1869
    %1871 = vmatmul.bf16.gmra.mxu0 %v1787
    %v1872 = vpop.f32.mrf.mxu0
    %v1873 = vadd.f32 0.0, %v1872
    %v1874 = vpop.f32.mrf.mxu0
    %v1875 = vadd.f32 0.0, %v1874
    %1876 = vmatmul.bf16.gmra.mxu0 %v1789
    %v1877 = vpop.f32.mrf.mxu0
    %v1878 = vadd.f32 0.0, %v1877
    %v1879 = vpop.f32.mrf.mxu0
    %v1880 = vadd.f32 0.0, %v1879
    %1881 = vmatmul.bf16.gmra.mxu0 %v1791
    %v1882 = vpop.f32.mrf.mxu0
    %v1883 = vadd.f32 0.0, %v1882
    %v1884 = vpop.f32.mrf.mxu0
    %v1885 = vadd.f32 0.0, %v1884
    %1886 = vmatmul.bf16.gmra.mxu0 %v1793
    %v1887 = vpop.f32.mrf.mxu0
    %v1888 = vadd.f32 0.0, %v1887
    %v1889 = vpop.f32.mrf.mxu0
    %v1890 = vadd.f32 0.0, %v1889
    %1891 = vmatmul.bf16.gmra.mxu0 %v1795
    %v1892 = vpop.f32.mrf.mxu0
    %v1893 = vadd.f32 0.0, %v1892
    %v1894 = vpop.f32.mrf.mxu0
    %v1895 = vadd.f32 0.0, %v1894
    %1896 = vmatmul.bf16.gmra.mxu0 %v1797
    %v1897 = vpop.f32.mrf.mxu0
    %v1898 = vadd.f32 0.0, %v1897
    %v1899 = vpop.f32.mrf.mxu0
    %v1900 = vadd.f32 0.0, %v1899
    %1901 = vmatmul.bf16.gmra.mxu0 %v1799
    %v1902 = vpop.f32.mrf.mxu0
    %v1903 = vadd.f32 0.0, %v1902
    %v1904 = vpop.f32.mrf.mxu0
    %v1905 = vadd.f32 0.0, %v1904
    %1906 = vmatmul.bf16.gmra.mxu0 %v1801
    %v1907 = vpop.f32.mrf.mxu0
    %v1908 = vadd.f32 0.0, %v1907
    %v1909 = vpop.f32.mrf.mxu0
    %v1910 = vadd.f32 0.0, %v1909
    %1911 = vmatmul.bf16.gmra.mxu0 %v1803
    %v1912 = vpop.f32.mrf.mxu0
    %v1913 = vadd.f32 0.0, %v1912
    %v1914 = vpop.f32.mrf.mxu0
    %v1915 = vadd.f32 0.0, %v1914
    %1916 = vmatmul.bf16.gmra.mxu0 %v1805
    %v1917 = vpop.f32.mrf.mxu0
    %v1918 = vadd.f32 0.0, %v1917
    %v1919 = vpop.f32.mrf.mxu0
    %v1920 = vadd.f32 0.0, %v1919
    %1921 = vmatmul.bf16.gmra.mxu0 %v1807
    %v1922 = vpop.f32.mrf.mxu0
    %v1923 = vadd.f32 0.0, %v1922
    %v1924 = vpop.f32.mrf.mxu0
    %v1925 = vadd.f32 0.0, %v1924
    %1926 = vmatmul.bf16.gmra.mxu0 %v1809
    %v1927 = vpop.f32.mrf.mxu0
    %v1928 = vadd.f32 0.0, %v1927
    %v1929 = vpop.f32.mrf.mxu0
    %v1930 = vadd.f32 0.0, %v1929
    %1931 = vdwg.mxu0
    %1932 = vmatpush.bf16.msra.mxu0 %v1679
    %1933 = vmatpush.bf16.msra.mxu0 %v1675
    %1934 = vmatpush.bf16.msra.mxu0 %v1671
    %1935 = vmatpush.bf16.msra.mxu0 %v1667
    %1936 = vmatpush.bf16.msra.mxu0 %v1663
    %1937 = vmatpush.bf16.msra.mxu0 %v1659
    %1938 = vmatpush.bf16.msra.mxu0 %v1655
    %1939 = vmatpush.bf16.msra.mxu0 %v1651
    %1940 = vmatmul.bf16.gmra.mxu0 %v1780
    %v1941 = vpop.f32.mrf.mxu0
    %v1942 = vadd.f32 %v1853, %v1941
    %v1943 = vpop.f32.mrf.mxu0
    %v1944 = vadd.f32 %v1855, %v1943
    %1945 = vmatmul.bf16.gmra.mxu0 %v1782
    %v1946 = vpop.f32.mrf.mxu0
    %v1947 = vadd.f32 %v1858, %v1946
    %v1948 = vpop.f32.mrf.mxu0
    %v1949 = vadd.f32 %v1860, %v1948
    %1950 = vmatmul.bf16.gmra.mxu0 %v1784
    %v1951 = vpop.f32.mrf.mxu0
    %v1952 = vadd.f32 %v1863, %v1951
    %v1953 = vpop.f32.mrf.mxu0
    %v1954 = vadd.f32 %v1865, %v1953
    %1955 = vmatmul.bf16.gmra.mxu0 %v1786
    %v1956 = vpop.f32.mrf.mxu0
    %v1957 = vadd.f32 %v1868, %v1956
    %v1958 = vpop.f32.mrf.mxu0
    %v1959 = vadd.f32 %v1870, %v1958
    %1960 = vmatmul.bf16.gmra.mxu0 %v1788
    %v1961 = vpop.f32.mrf.mxu0
    %v1962 = vadd.f32 %v1873, %v1961
    %v1963 = vpop.f32.mrf.mxu0
    %v1964 = vadd.f32 %v1875, %v1963
    %1965 = vmatmul.bf16.gmra.mxu0 %v1790
    %v1966 = vpop.f32.mrf.mxu0
    %v1967 = vadd.f32 %v1878, %v1966
    %v1968 = vpop.f32.mrf.mxu0
    %v1969 = vadd.f32 %v1880, %v1968
    %1970 = vmatmul.bf16.gmra.mxu0 %v1792
    %v1971 = vpop.f32.mrf.mxu0
    %v1972 = vadd.f32 %v1883, %v1971
    %v1973 = vpop.f32.mrf.mxu0
    %v1974 = vadd.f32 %v1885, %v1973
    %1975 = vmatmul.bf16.gmra.mxu0 %v1794
    %v1976 = vpop.f32.mrf.mxu0
    %v1977 = vadd.f32 %v1888, %v1976
    %v1978 = vpop.f32.mrf.mxu0
    %v1979 = vadd.f32 %v1890, %v1978
    %1980 = vmatmul.bf16.gmra.mxu0 %v1796
    %v1981 = vpop.f32.mrf.mxu0
    %v1982 = vadd.f32 %v1893, %v1981
    %v1983 = vpop.f32.mrf.mxu0
    %v1984 = vadd.f32 %v1895, %v1983
    %1985 = vmatmul.bf16.gmra.mxu0 %v1798
    %v1986 = vpop.f32.mrf.mxu0
    %v1987 = vadd.f32 %v1898, %v1986
    %v1988 = vpop.f32.mrf.mxu0
    %v1989 = vadd.f32 %v1900, %v1988
    %1990 = vmatmul.bf16.gmra.mxu0 %v1800
    %v1991 = vpop.f32.mrf.mxu0
    %v1992 = vadd.f32 %v1903, %v1991
    %v1993 = vpop.f32.mrf.mxu0
    %v1994 = vadd.f32 %v1905, %v1993
    %1995 = vmatmul.bf16.gmra.mxu0 %v1802
    %v1996 = vpop.f32.mrf.mxu0
    %v1997 = vadd.f32 %v1908, %v1996
    %v1998 = vpop.f32.mrf.mxu0
    %v1999 = vadd.f32 %v1910, %v1998
    %2000 = vmatmul.bf16.gmra.mxu0 %v1804
    %v2001 = vpop.f32.mrf.mxu0
    %v2002 = vadd.f32 %v1913, %v2001
    %v2003 = vpop.f32.mrf.mxu0
    %v2004 = vadd.f32 %v1915, %v2003
    %2005 = vmatmul.bf16.gmra.mxu0 %v1806
    %v2006 = vpop.f32.mrf.mxu0
    %v2007 = vadd.f32 %v1918, %v2006
    %v2008 = vpop.f32.mrf.mxu0
    %v2009 = vadd.f32 %v1920, %v2008
    %2010 = vmatmul.bf16.gmra.mxu0 %v1808
    %v2011 = vpop.f32.mrf.mxu0
    %v2012 = vadd.f32 %v1923, %v2011
    %v2013 = vpop.f32.mrf.mxu0
    %v2014 = vadd.f32 %v1925, %v2013
    %2015 = vmatmul.bf16.gmra.mxu0 %v1810
    %v2016 = vpop.f32.mrf.mxu0
    %v2017 = vadd.f32 %v1928, %v2016
    %v2018 = vpop.f32.mrf.mxu0
    %v2019 = vadd.f32 %v1930, %v2018
    %2020 = vdwg.mxu0
    %2021 = vmatpush.bf16.msra.mxu0 %v1648
    %2022 = vmatpush.bf16.msra.mxu0 %v1644
    %2023 = vmatpush.bf16.msra.mxu0 %v1640
    %2024 = vmatpush.bf16.msra.mxu0 %v1636
    %2025 = vmatpush.bf16.msra.mxu0 %v1632
    %2026 = vmatpush.bf16.msra.mxu0 %v1628
    %2027 = vmatpush.bf16.msra.mxu0 %v1624
    %2028 = vmatpush.bf16.msra.mxu0 %v1620
    %2029 = vmatmul.bf16.gmra.mxu0 %v1779
    %v2030 = vpop.f32.mrf.mxu0
    %v2031 = vadd.f32 0.0, %v2030
    %v2032 = vpop.f32.mrf.mxu0
    %v2033 = vadd.f32 0.0, %v2032
    %2034 = vmatmul.bf16.gmra.mxu0 %v1781
    %v2035 = vpop.f32.mrf.mxu0
    %v2036 = vadd.f32 0.0, %v2035
    %v2037 = vpop.f32.mrf.mxu0
    %v2038 = vadd.f32 0.0, %v2037
    %2039 = vmatmul.bf16.gmra.mxu0 %v1783
    %v2040 = vpop.f32.mrf.mxu0
    %v2041 = vadd.f32 0.0, %v2040
    %v2042 = vpop.f32.mrf.mxu0
    %v2043 = vadd.f32 0.0, %v2042
    %2044 = vmatmul.bf16.gmra.mxu0 %v1785
    %v2045 = vpop.f32.mrf.mxu0
    %v2046 = vadd.f32 0.0, %v2045
    %v2047 = vpop.f32.mrf.mxu0
    %v2048 = vadd.f32 0.0, %v2047
    %2049 = vmatmul.bf16.gmra.mxu0 %v1787
    %v2050 = vpop.f32.mrf.mxu0
    %v2051 = vadd.f32 0.0, %v2050
    %v2052 = vpop.f32.mrf.mxu0
    %v2053 = vadd.f32 0.0, %v2052
    %2054 = vmatmul.bf16.gmra.mxu0 %v1789
    %v2055 = vpop.f32.mrf.mxu0
    %v2056 = vadd.f32 0.0, %v2055
    %v2057 = vpop.f32.mrf.mxu0
    %v2058 = vadd.f32 0.0, %v2057
    %2059 = vmatmul.bf16.gmra.mxu0 %v1791
    %v2060 = vpop.f32.mrf.mxu0
    %v2061 = vadd.f32 0.0, %v2060
    %v2062 = vpop.f32.mrf.mxu0
    %v2063 = vadd.f32 0.0, %v2062
    %2064 = vmatmul.bf16.gmra.mxu0 %v1793
    %v2065 = vpop.f32.mrf.mxu0
    %v2066 = vadd.f32 0.0, %v2065
    %v2067 = vpop.f32.mrf.mxu0
    %v2068 = vadd.f32 0.0, %v2067
    %2069 = vmatmul.bf16.gmra.mxu0 %v1795
    %v2070 = vpop.f32.mrf.mxu0
    %v2071 = vadd.f32 0.0, %v2070
    %v2072 = vpop.f32.mrf.mxu0
    %v2073 = vadd.f32 0.0, %v2072
    %2074 = vmatmul.bf16.gmra.mxu0 %v1797
    %v2075 = vpop.f32.mrf.mxu0
    %v2076 = vadd.f32 0.0, %v2075
    %v2077 = vpop.f32.mrf.mxu0
    %v2078 = vadd.f32 0.0, %v2077
    %2079 = vmatmul.bf16.gmra.mxu0 %v1799
    %v2080 = vpop.f32.mrf.mxu0
    %v2081 = vadd.f32 0.0, %v2080
    %v2082 = vpop.f32.mrf.mxu0
    %v2083 = vadd.f32 0.0, %v2082
    %2084 = vmatmul.bf16.gmra.mxu0 %v1801
    %v2085 = vpop.f32.mrf.mxu0
    %v2086 = vadd.f32 0.0, %v2085
    %v2087 = vpop.f32.mrf.mxu0
    %v2088 = vadd.f32 0.0, %v2087
    %2089 = vmatmul.bf16.gmra.mxu0 %v1803
    %v2090 = vpop.f32.mrf.mxu0
    %v2091 = vadd.f32 0.0, %v2090
    %v2092 = vpop.f32.mrf.mxu0
    %v2093 = vadd.f32 0.0, %v2092
    %2094 = vmatmul.bf16.gmra.mxu0 %v1805
    %v2095 = vpop.f32.mrf.mxu0
    %v2096 = vadd.f32 0.0, %v2095
    %v2097 = vpop.f32.mrf.mxu0
    %v2098 = vadd.f32 0.0, %v2097
    %2099 = vmatmul.bf16.gmra.mxu0 %v1807
    %v2100 = vpop.f32.mrf.mxu0
    %v2101 = vadd.f32 0.0, %v2100
    %v2102 = vpop.f32.mrf.mxu0
    %v2103 = vadd.f32 0.0, %v2102
    %2104 = vmatmul.bf16.gmra.mxu0 %v1809
    %v2105 = vpop.f32.mrf.mxu0
    %v2106 = vadd.f32 0.0, %v2105
    %v2107 = vpop.f32.mrf.mxu0
    %v2108 = vadd.f32 0.0, %v2107
    %2109 = vdwg.mxu0
    %2110 = vmatpush.bf16.msra.mxu0 %v1680
    %2111 = vmatpush.bf16.msra.mxu0 %v1676
    %2112 = vmatpush.bf16.msra.mxu0 %v1672
    %2113 = vmatpush.bf16.msra.mxu0 %v1668
    %2114 = vmatpush.bf16.msra.mxu0 %v1664
    %2115 = vmatpush.bf16.msra.mxu0 %v1660
    %2116 = vmatpush.bf16.msra.mxu0 %v1656
    %2117 = vmatpush.bf16.msra.mxu0 %v1652
    %2118 = vmatmul.bf16.gmra.mxu0 %v1780
    %v2119 = vpop.f32.mrf.mxu0
    %v2120 = vadd.f32 %v2031, %v2119
    %v2121 = vpop.f32.mrf.mxu0
    %v2122 = vadd.f32 %v2033, %v2121
    %2123 = vmatmul.bf16.gmra.mxu0 %v1782
    %v2124 = vpop.f32.mrf.mxu0
    %v2125 = vadd.f32 %v2036, %v2124
    %v2126 = vpop.f32.mrf.mxu0
    %v2127 = vadd.f32 %v2038, %v2126
    %2128 = vmatmul.bf16.gmra.mxu0 %v1784
    %v2129 = vpop.f32.mrf.mxu0
    %v2130 = vadd.f32 %v2041, %v2129
    %v2131 = vpop.f32.mrf.mxu0
    %v2132 = vadd.f32 %v2043, %v2131
    %2133 = vmatmul.bf16.gmra.mxu0 %v1786
    %v2134 = vpop.f32.mrf.mxu0
    %v2135 = vadd.f32 %v2046, %v2134
    %v2136 = vpop.f32.mrf.mxu0
    %v2137 = vadd.f32 %v2048, %v2136
    %2138 = vmatmul.bf16.gmra.mxu0 %v1788
    %v2139 = vpop.f32.mrf.mxu0
    %v2140 = vadd.f32 %v2051, %v2139
    %v2141 = vpop.f32.mrf.mxu0
    %v2142 = vadd.f32 %v2053, %v2141
    %2143 = vmatmul.bf16.gmra.mxu0 %v1790
    %v2144 = vpop.f32.mrf.mxu0
    %v2145 = vadd.f32 %v2056, %v2144
    %v2146 = vpop.f32.mrf.mxu0
    %v2147 = vadd.f32 %v2058, %v2146
    %2148 = vmatmul.bf16.gmra.mxu0 %v1792
    %v2149 = vpop.f32.mrf.mxu0
    %v2150 = vadd.f32 %v2061, %v2149
    %v2151 = vpop.f32.mrf.mxu0
    %v2152 = vadd.f32 %v2063, %v2151
    %2153 = vmatmul.bf16.gmra.mxu0 %v1794
    %v2154 = vpop.f32.mrf.mxu0
    %v2155 = vadd.f32 %v2066, %v2154
    %v2156 = vpop.f32.mrf.mxu0
    %v2157 = vadd.f32 %v2068, %v2156
    %2158 = vmatmul.bf16.gmra.mxu0 %v1796
    %v2159 = vpop.f32.mrf.mxu0
    %v2160 = vadd.f32 %v2071, %v2159
    %v2161 = vpop.f32.mrf.mxu0
    %v2162 = vadd.f32 %v2073, %v2161
    %2163 = vmatmul.bf16.gmra.mxu0 %v1798
    %v2164 = vpop.f32.mrf.mxu0
    %v2165 = vadd.f32 %v2076, %v2164
    %v2166 = vpop.f32.mrf.mxu0
    %v2167 = vadd.f32 %v2078, %v2166
    %2168 = vmatmul.bf16.gmra.mxu0 %v1800
    %v2169 = vpop.f32.mrf.mxu0
    %v2170 = vadd.f32 %v2081, %v2169
    %v2171 = vpop.f32.mrf.mxu0
    %v2172 = vadd.f32 %v2083, %v2171
    %2173 = vmatmul.bf16.gmra.mxu0 %v1802
    %v2174 = vpop.f32.mrf.mxu0
    %v2175 = vadd.f32 %v2086, %v2174
    %v2176 = vpop.f32.mrf.mxu0
    %v2177 = vadd.f32 %v2088, %v2176
    %2178 = vmatmul.bf16.gmra.mxu0 %v1804
    %v2179 = vpop.f32.mrf.mxu0
    %v2180 = vadd.f32 %v2091, %v2179
    %v2181 = vpop.f32.mrf.mxu0
    %v2182 = vadd.f32 %v2093, %v2181
    %2183 = vmatmul.bf16.gmra.mxu0 %v1806
    %v2184 = vpop.f32.mrf.mxu0
    %v2185 = vadd.f32 %v2096, %v2184
    %v2186 = vpop.f32.mrf.mxu0
    %v2187 = vadd.f32 %v2098, %v2186
    %2188 = vmatmul.bf16.gmra.mxu0 %v1808
    %v2189 = vpop.f32.mrf.mxu0
    %v2190 = vadd.f32 %v2101, %v2189
    %v2191 = vpop.f32.mrf.mxu0
    %v2192 = vadd.f32 %v2103, %v2191
    %2193 = vmatmul.bf16.gmra.mxu0 %v1810
    %v2194 = vpop.f32.mrf.mxu0
    %v2195 = vadd.f32 %v2106, %v2194
    %v2196 = vpop.f32.mrf.mxu0
    %v2197 = vadd.f32 %v2108, %v2196
    %2198 = vdwg.mxu0
    %2199 = vmatpush.bf16.msra.mxu0 %v1649
    %2200 = vmatpush.bf16.msra.mxu0 %v1645
    %2201 = vmatpush.bf16.msra.mxu0 %v1641
    %2202 = vmatpush.bf16.msra.mxu0 %v1637
    %2203 = vmatpush.bf16.msra.mxu0 %v1633
    %2204 = vmatpush.bf16.msra.mxu0 %v1629
    %2205 = vmatpush.bf16.msra.mxu0 %v1625
    %2206 = vmatpush.bf16.msra.mxu0 %v1621
    %2207 = vmatmul.bf16.gmra.mxu0 %v1779
    %v2208 = vpop.f32.mrf.mxu0
    %v2209 = vadd.f32 0.0, %v2208
    %v2210 = vpop.f32.mrf.mxu0
    %v2211 = vadd.f32 0.0, %v2210
    %2212 = vmatmul.bf16.gmra.mxu0 %v1781
    %v2213 = vpop.f32.mrf.mxu0
    %v2214 = vadd.f32 0.0, %v2213
    %v2215 = vpop.f32.mrf.mxu0
    %v2216 = vadd.f32 0.0, %v2215
    %2217 = vmatmul.bf16.gmra.mxu0 %v1783
    %v2218 = vpop.f32.mrf.mxu0
    %v2219 = vadd.f32 0.0, %v2218
    %v2220 = vpop.f32.mrf.mxu0
    %v2221 = vadd.f32 0.0, %v2220
    %2222 = vmatmul.bf16.gmra.mxu0 %v1785
    %v2223 = vpop.f32.mrf.mxu0
    %v2224 = vadd.f32 0.0, %v2223
    %v2225 = vpop.f32.mrf.mxu0
    %v2226 = vadd.f32 0.0, %v2225
    %2227 = vmatmul.bf16.gmra.mxu0 %v1787
    %v2228 = vpop.f32.mrf.mxu0
    %v2229 = vadd.f32 0.0, %v2228
    %v2230 = vpop.f32.mrf.mxu0
    %v2231 = vadd.f32 0.0, %v2230
    %2232 = vmatmul.bf16.gmra.mxu0 %v1789
    %v2233 = vpop.f32.mrf.mxu0
    %v2234 = vadd.f32 0.0, %v2233
    %v2235 = vpop.f32.mrf.mxu0
    %v2236 = vadd.f32 0.0, %v2235
    %2237 = vmatmul.bf16.gmra.mxu0 %v1791
    %v2238 = vpop.f32.mrf.mxu0
    %v2239 = vadd.f32 0.0, %v2238
    %v2240 = vpop.f32.mrf.mxu0
    %v2241 = vadd.f32 0.0, %v2240
    %2242 = vmatmul.bf16.gmra.mxu0 %v1793
    %v2243 = vpop.f32.mrf.mxu0
    %v2244 = vadd.f32 0.0, %v2243
    %v2245 = vpop.f32.mrf.mxu0
    %v2246 = vadd.f32 0.0, %v2245
    %2247 = vmatmul.bf16.gmra.mxu0 %v1795
    %v2248 = vpop.f32.mrf.mxu0
    %v2249 = vadd.f32 0.0, %v2248
    %v2250 = vpop.f32.mrf.mxu0
    %v2251 = vadd.f32 0.0, %v2250
    %2252 = vmatmul.bf16.gmra.mxu0 %v1797
    %v2253 = vpop.f32.mrf.mxu0
    %v2254 = vadd.f32 0.0, %v2253
    %v2255 = vpop.f32.mrf.mxu0
    %v2256 = vadd.f32 0.0, %v2255
    %2257 = vmatmul.bf16.gmra.mxu0 %v1799
    %v2258 = vpop.f32.mrf.mxu0
    %v2259 = vadd.f32 0.0, %v2258
    %v2260 = vpop.f32.mrf.mxu0
    %v2261 = vadd.f32 0.0, %v2260
    %2262 = vmatmul.bf16.gmra.mxu0 %v1801
    %v2263 = vpop.f32.mrf.mxu0
    %v2264 = vadd.f32 0.0, %v2263
    %v2265 = vpop.f32.mrf.mxu0
    %v2266 = vadd.f32 0.0, %v2265
    %2267 = vmatmul.bf16.gmra.mxu0 %v1803
    %v2268 = vpop.f32.mrf.mxu0
    %v2269 = vadd.f32 0.0, %v2268
    %v2270 = vpop.f32.mrf.mxu0
    %v2271 = vadd.f32 0.0, %v2270
    %2272 = vmatmul.bf16.gmra.mxu0 %v1805
    %v2273 = vpop.f32.mrf.mxu0
    %v2274 = vadd.f32 0.0, %v2273
    %v2275 = vpop.f32.mrf.mxu0
    %v2276 = vadd.f32 0.0, %v2275
    %2277 = vmatmul.bf16.gmra.mxu0 %v1807
    %v2278 = vpop.f32.mrf.mxu0
    %v2279 = vadd.f32 0.0, %v2278
    %v2280 = vpop.f32.mrf.mxu0
    %v2281 = vadd.f32 0.0, %v2280
    %2282 = vmatmul.bf16.gmra.mxu0 %v1809
    %v2283 = vpop.f32.mrf.mxu0
    %v2284 = vadd.f32 0.0, %v2283
    %v2285 = vpop.f32.mrf.mxu0
    %v2286 = vadd.f32 0.0, %v2285
    %2287 = vdwg.mxu0
    %2288 = vmatpush.bf16.msra.mxu0 %v1681
    %2289 = vmatpush.bf16.msra.mxu0 %v1677
    %2290 = vmatpush.bf16.msra.mxu0 %v1673
    %2291 = vmatpush.bf16.msra.mxu0 %v1669
    %2292 = vmatpush.bf16.msra.mxu0 %v1665
    %2293 = vmatpush.bf16.msra.mxu0 %v1661
    %2294 = vmatpush.bf16.msra.mxu0 %v1657
    %2295 = vmatpush.bf16.msra.mxu0 %v1653
    %2296 = vmatmul.bf16.gmra.mxu0 %v1780
    %v2297 = vpop.f32.mrf.mxu0
    %v2298 = vadd.f32 %v2209, %v2297
    %v2299 = vpop.f32.mrf.mxu0
    %v2300 = vadd.f32 %v2211, %v2299
    %2301 = vmatmul.bf16.gmra.mxu0 %v1782
    %v2302 = vpop.f32.mrf.mxu0
    %v2303 = vadd.f32 %v2214, %v2302
    %v2304 = vpop.f32.mrf.mxu0
    %v2305 = vadd.f32 %v2216, %v2304
    %2306 = vmatmul.bf16.gmra.mxu0 %v1784
    %v2307 = vpop.f32.mrf.mxu0
    %v2308 = vadd.f32 %v2219, %v2307
    %v2309 = vpop.f32.mrf.mxu0
    %v2310 = vadd.f32 %v2221, %v2309
    %2311 = vmatmul.bf16.gmra.mxu0 %v1786
    %v2312 = vpop.f32.mrf.mxu0
    %v2313 = vadd.f32 %v2224, %v2312
    %v2314 = vpop.f32.mrf.mxu0
    %v2315 = vadd.f32 %v2226, %v2314
    %2316 = vmatmul.bf16.gmra.mxu0 %v1788
    %v2317 = vpop.f32.mrf.mxu0
    %v2318 = vadd.f32 %v2229, %v2317
    %v2319 = vpop.f32.mrf.mxu0
    %v2320 = vadd.f32 %v2231, %v2319
    %2321 = vmatmul.bf16.gmra.mxu0 %v1790
    %v2322 = vpop.f32.mrf.mxu0
    %v2323 = vadd.f32 %v2234, %v2322
    %v2324 = vpop.f32.mrf.mxu0
    %v2325 = vadd.f32 %v2236, %v2324
    %2326 = vmatmul.bf16.gmra.mxu0 %v1792
    %v2327 = vpop.f32.mrf.mxu0
    %v2328 = vadd.f32 %v2239, %v2327
    %v2329 = vpop.f32.mrf.mxu0
    %v2330 = vadd.f32 %v2241, %v2329
    %2331 = vmatmul.bf16.gmra.mxu0 %v1794
    %v2332 = vpop.f32.mrf.mxu0
    %v2333 = vadd.f32 %v2244, %v2332
    %v2334 = vpop.f32.mrf.mxu0
    %v2335 = vadd.f32 %v2246, %v2334
    %2336 = vmatmul.bf16.gmra.mxu0 %v1796
    %v2337 = vpop.f32.mrf.mxu0
    %v2338 = vadd.f32 %v2249, %v2337
    %v2339 = vpop.f32.mrf.mxu0
    %v2340 = vadd.f32 %v2251, %v2339
    %2341 = vmatmul.bf16.gmra.mxu0 %v1798
    %v2342 = vpop.f32.mrf.mxu0
    %v2343 = vadd.f32 %v2254, %v2342
    %v2344 = vpop.f32.mrf.mxu0
    %v2345 = vadd.f32 %v2256, %v2344
    %2346 = vmatmul.bf16.gmra.mxu0 %v1800
    %v2347 = vpop.f32.mrf.mxu0
    %v2348 = vadd.f32 %v2259, %v2347
    %v2349 = vpop.f32.mrf.mxu0
    %v2350 = vadd.f32 %v2261, %v2349
    %2351 = vmatmul.bf16.gmra.mxu0 %v1802
    %v2352 = vpop.f32.mrf.mxu0
    %v2353 = vadd.f32 %v2264, %v2352
    %v2354 = vpop.f32.mrf.mxu0
    %v2355 = vadd.f32 %v2266, %v2354
    %2356 = vmatmul.bf16.gmra.mxu0 %v1804
    %v2357 = vpop.f32.mrf.mxu0
    %v2358 = vadd.f32 %v2269, %v2357
    %v2359 = vpop.f32.mrf.mxu0
    %v2360 = vadd.f32 %v2271, %v2359
    %2361 = vmatmul.bf16.gmra.mxu0 %v1806
    %v2362 = vpop.f32.mrf.mxu0
    %v2363 = vadd.f32 %v2274, %v2362
    %v2364 = vpop.f32.mrf.mxu0
    %v2365 = vadd.f32 %v2276, %v2364
    %2366 = vmatmul.bf16.gmra.mxu0 %v1808
    %v2367 = vpop.f32.mrf.mxu0
    %v2368 = vadd.f32 %v2279, %v2367
    %v2369 = vpop.f32.mrf.mxu0
    %v2370 = vadd.f32 %v2281, %v2369
    %2371 = vmatmul.bf16.gmra.mxu0 %v1810
    %v2372 = vpop.f32.mrf.mxu0
    %v2373 = vadd.f32 %v2284, %v2372
    %v2374 = vpop.f32.mrf.mxu0
    %v2375 = vadd.f32 %v2286, %v2374
    %2376 = vdwg.mxu0
    %2377 = vmatpush.bf16.msra.mxu0 %v1650
    %2378 = vmatpush.bf16.msra.mxu0 %v1646
    %2379 = vmatpush.bf16.msra.mxu0 %v1642
    %2380 = vmatpush.bf16.msra.mxu0 %v1638
    %2381 = vmatpush.bf16.msra.mxu0 %v1634
    %2382 = vmatpush.bf16.msra.mxu0 %v1630
    %2383 = vmatpush.bf16.msra.mxu0 %v1626
    %2384 = vmatpush.bf16.msra.mxu0 %v1622
    %2385 = vmatmul.bf16.gmra.mxu0 %v1779
    %v2386 = vpop.f32.mrf.mxu0
    %v2387 = vadd.f32 0.0, %v2386
    %v2388 = vpop.f32.mrf.mxu0
    %v2389 = vadd.f32 0.0, %v2388
    %2390 = vmatmul.bf16.gmra.mxu0 %v1781
    %v2391 = vpop.f32.mrf.mxu0
    %v2392 = vadd.f32 0.0, %v2391
    %v2393 = vpop.f32.mrf.mxu0
    %v2394 = vadd.f32 0.0, %v2393
    %2395 = vmatmul.bf16.gmra.mxu0 %v1783
    %v2396 = vpop.f32.mrf.mxu0
    %v2397 = vadd.f32 0.0, %v2396
    %v2398 = vpop.f32.mrf.mxu0
    %v2399 = vadd.f32 0.0, %v2398
    %2400 = vmatmul.bf16.gmra.mxu0 %v1785
    %v2401 = vpop.f32.mrf.mxu0
    %v2402 = vadd.f32 0.0, %v2401
    %v2403 = vpop.f32.mrf.mxu0
    %v2404 = vadd.f32 0.0, %v2403
    %2405 = vmatmul.bf16.gmra.mxu0 %v1787
    %v2406 = vpop.f32.mrf.mxu0
    %v2407 = vadd.f32 0.0, %v2406
    %v2408 = vpop.f32.mrf.mxu0
    %v2409 = vadd.f32 0.0, %v2408
    %2410 = vmatmul.bf16.gmra.mxu0 %v1789
    %v2411 = vpop.f32.mrf.mxu0
    %v2412 = vadd.f32 0.0, %v2411
    %v2413 = vpop.f32.mrf.mxu0
    %v2414 = vadd.f32 0.0, %v2413
    %2415 = vmatmul.bf16.gmra.mxu0 %v1791
    %v2416 = vpop.f32.mrf.mxu0
    %v2417 = vadd.f32 0.0, %v2416
    %v2418 = vpop.f32.mrf.mxu0
    %v2419 = vadd.f32 0.0, %v2418
    %2420 = vmatmul.bf16.gmra.mxu0 %v1793
    %v2421 = vpop.f32.mrf.mxu0
    %v2422 = vadd.f32 0.0, %v2421
    %v2423 = vpop.f32.mrf.mxu0
    %v2424 = vadd.f32 0.0, %v2423
    %2425 = vmatmul.bf16.gmra.mxu0 %v1795
    %v2426 = vpop.f32.mrf.mxu0
    %v2427 = vadd.f32 0.0, %v2426
    %v2428 = vpop.f32.mrf.mxu0
    %v2429 = vadd.f32 0.0, %v2428
    %2430 = vmatmul.bf16.gmra.mxu0 %v1797
    %v2431 = vpop.f32.mrf.mxu0
    %v2432 = vadd.f32 0.0, %v2431
    %v2433 = vpop.f32.mrf.mxu0
    %v2434 = vadd.f32 0.0, %v2433
    %2435 = vmatmul.bf16.gmra.mxu0 %v1799
    %v2436 = vpop.f32.mrf.mxu0
    %v2437 = vadd.f32 0.0, %v2436
    %v2438 = vpop.f32.mrf.mxu0
    %v2439 = vadd.f32 0.0, %v2438
    %2440 = vmatmul.bf16.gmra.mxu0 %v1801
    %v2441 = vpop.f32.mrf.mxu0
    %v2442 = vadd.f32 0.0, %v2441
    %v2443 = vpop.f32.mrf.mxu0
    %v2444 = vadd.f32 0.0, %v2443
    %2445 = vmatmul.bf16.gmra.mxu0 %v1803
    %v2446 = vpop.f32.mrf.mxu0
    %v2447 = vadd.f32 0.0, %v2446
    %v2448 = vpop.f32.mrf.mxu0
    %v2449 = vadd.f32 0.0, %v2448
    %2450 = vmatmul.bf16.gmra.mxu0 %v1805
    %v2451 = vpop.f32.mrf.mxu0
    %v2452 = vadd.f32 0.0, %v2451
    %v2453 = vpop.f32.mrf.mxu0
    %v2454 = vadd.f32 0.0, %v2453
    %2455 = vmatmul.bf16.gmra.mxu0 %v1807
    %v2456 = vpop.f32.mrf.mxu0
    %v2457 = vadd.f32 0.0, %v2456
    %v2458 = vpop.f32.mrf.mxu0
    %v2459 = vadd.f32 0.0, %v2458
    %2460 = vmatmul.bf16.gmra.mxu0 %v1809
    %v2461 = vpop.f32.mrf.mxu0
    %v2462 = vadd.f32 0.0, %v2461
    %v2463 = vpop.f32.mrf.mxu0
    %v2464 = vadd.f32 0.0, %v2463
    %2465 = vdwg.mxu0
    %2466 = vmatpush.bf16.msra.mxu0 %v1682
    %2467 = vmatpush.bf16.msra.mxu0 %v1678
    %2468 = vmatpush.bf16.msra.mxu0 %v1674
    %2469 = vmatpush.bf16.msra.mxu0 %v1670
    %2470 = vmatpush.bf16.msra.mxu0 %v1666
    %2471 = vmatpush.bf16.msra.mxu0 %v1662
    %2472 = vmatpush.bf16.msra.mxu0 %v1658
    %2473 = vmatpush.bf16.msra.mxu0 %v1654
    %2474 = vmatmul.bf16.gmra.mxu0 %v1780
    %v2475 = vpop.f32.mrf.mxu0
    %v2476 = vadd.f32 %v2387, %v2475
    %v2477 = vpop.f32.mrf.mxu0
    %v2478 = vadd.f32 %v2389, %v2477
    %2479 = vmatmul.bf16.gmra.mxu0 %v1782
    %v2480 = vpop.f32.mrf.mxu0
    %v2481 = vadd.f32 %v2392, %v2480
    %v2482 = vpop.f32.mrf.mxu0
    %v2483 = vadd.f32 %v2394, %v2482
    %2484 = vmatmul.bf16.gmra.mxu0 %v1784
    %v2485 = vpop.f32.mrf.mxu0
    %v2486 = vadd.f32 %v2397, %v2485
    %v2487 = vpop.f32.mrf.mxu0
    %v2488 = vadd.f32 %v2399, %v2487
    %2489 = vmatmul.bf16.gmra.mxu0 %v1786
    %v2490 = vpop.f32.mrf.mxu0
    %v2491 = vadd.f32 %v2402, %v2490
    %v2492 = vpop.f32.mrf.mxu0
    %v2493 = vadd.f32 %v2404, %v2492
    %2494 = vmatmul.bf16.gmra.mxu0 %v1788
    %v2495 = vpop.f32.mrf.mxu0
    %v2496 = vadd.f32 %v2407, %v2495
    %v2497 = vpop.f32.mrf.mxu0
    %v2498 = vadd.f32 %v2409, %v2497
    %2499 = vmatmul.bf16.gmra.mxu0 %v1790
    %v2500 = vpop.f32.mrf.mxu0
    %v2501 = vadd.f32 %v2412, %v2500
    %v2502 = vpop.f32.mrf.mxu0
    %v2503 = vadd.f32 %v2414, %v2502
    %2504 = vmatmul.bf16.gmra.mxu0 %v1792
    %v2505 = vpop.f32.mrf.mxu0
    %v2506 = vadd.f32 %v2417, %v2505
    %v2507 = vpop.f32.mrf.mxu0
    %v2508 = vadd.f32 %v2419, %v2507
    %2509 = vmatmul.bf16.gmra.mxu0 %v1794
    %v2510 = vpop.f32.mrf.mxu0
    %v2511 = vadd.f32 %v2422, %v2510
    %v2512 = vpop.f32.mrf.mxu0
    %v2513 = vadd.f32 %v2424, %v2512
    %2514 = vmatmul.bf16.gmra.mxu0 %v1796
    %v2515 = vpop.f32.mrf.mxu0
    %v2516 = vadd.f32 %v2427, %v2515
    %v2517 = vpop.f32.mrf.mxu0
    %v2518 = vadd.f32 %v2429, %v2517
    %2519 = vmatmul.bf16.gmra.mxu0 %v1798
    %v2520 = vpop.f32.mrf.mxu0
    %v2521 = vadd.f32 %v2432, %v2520
    %v2522 = vpop.f32.mrf.mxu0
    %v2523 = vadd.f32 %v2434, %v2522
    %2524 = vmatmul.bf16.gmra.mxu0 %v1800
    %v2525 = vpop.f32.mrf.mxu0
    %v2526 = vadd.f32 %v2437, %v2525
    %v2527 = vpop.f32.mrf.mxu0
    %v2528 = vadd.f32 %v2439, %v2527
    %2529 = vmatmul.bf16.gmra.mxu0 %v1802
    %v2530 = vpop.f32.mrf.mxu0
    %v2531 = vadd.f32 %v2442, %v2530
    %v2532 = vpop.f32.mrf.mxu0
    %v2533 = vadd.f32 %v2444, %v2532
    %2534 = vmatmul.bf16.gmra.mxu0 %v1804
    %v2535 = vpop.f32.mrf.mxu0
    %v2536 = vadd.f32 %v2447, %v2535
    %v2537 = vpop.f32.mrf.mxu0
    %v2538 = vadd.f32 %v2449, %v2537
    %2539 = vmatmul.bf16.gmra.mxu0 %v1806
    %v2540 = vpop.f32.mrf.mxu0
    %v2541 = vadd.f32 %v2452, %v2540
    %v2542 = vpop.f32.mrf.mxu0
    %v2543 = vadd.f32 %v2454, %v2542
    %2544 = vmatmul.bf16.gmra.mxu0 %v1808
    %v2545 = vpop.f32.mrf.mxu0
    %v2546 = vadd.f32 %v2457, %v2545
    %v2547 = vpop.f32.mrf.mxu0
    %v2548 = vadd.f32 %v2459, %v2547
    %2549 = vmatmul.bf16.gmra.mxu0 %v1810
    %v2550 = vpop.f32.mrf.mxu0
    %v2551 = vadd.f32 %v2462, %v2550
    %v2552 = vpop.f32.mrf.mxu0
    %v2553 = vadd.f32 %v2464, %v2552
    %2554 = vdwg.mxu0
    %v2555 = vmul.f32 %v1491, %v1942
    %v2556 = vmul.f32 %v1492, %v2120
    %v2557 = vmul.f32 %v1493, %v2298
    %v2558 = vmul.f32 %v1494, %v2476
    %v2559 = vmul.f32 %v1495, %v1944
    %v2560 = vmul.f32 %v1496, %v2122
    %v2561 = vmul.f32 %v1497, %v2300
    %v2562 = vmul.f32 %v1498, %v2478
    %v2563 = vmul.f32 %v1499, %v1947
    %v2564 = vmul.f32 %v1500, %v2125
    %v2565 = vmul.f32 %v1501, %v2303
    %v2566 = vmul.f32 %v1502, %v2481
    %v2567 = vmul.f32 %v1503, %v1949
    %v2568 = vmul.f32 %v1504, %v2127
    %v2569 = vmul.f32 %v1505, %v2305
    %v2570 = vmul.f32 %v1506, %v2483
    %v2571 = vmul.f32 %v1507, %v1952
    %v2572 = vmul.f32 %v1508, %v2130
    %v2573 = vmul.f32 %v1509, %v2308
    %v2574 = vmul.f32 %v1510, %v2486
    %v2575 = vmul.f32 %v1511, %v1954
    %v2576 = vmul.f32 %v1512, %v2132
    %v2577 = vmul.f32 %v1513, %v2310
    %v2578 = vmul.f32 %v1514, %v2488
    %v2579 = vmul.f32 %v1515, %v1957
    %v2580 = vmul.f32 %v1516, %v2135
    %v2581 = vmul.f32 %v1517, %v2313
    %v2582 = vmul.f32 %v1518, %v2491
    %v2583 = vmul.f32 %v1519, %v1959
    %v2584 = vmul.f32 %v1520, %v2137
    %v2585 = vmul.f32 %v1521, %v2315
    %v2586 = vmul.f32 %v1522, %v2493
    %v2587 = vmul.f32 %v1523, %v1962
    %v2588 = vmul.f32 %v1524, %v2140
    %v2589 = vmul.f32 %v1525, %v2318
    %v2590 = vmul.f32 %v1526, %v2496
    %v2591 = vmul.f32 %v1527, %v1964
    %v2592 = vmul.f32 %v1528, %v2142
    %v2593 = vmul.f32 %v1529, %v2320
    %v2594 = vmul.f32 %v1530, %v2498
    %v2595 = vmul.f32 %v1531, %v1967
    %v2596 = vmul.f32 %v1532, %v2145
    %v2597 = vmul.f32 %v1533, %v2323
    %v2598 = vmul.f32 %v1534, %v2501
    %v2599 = vmul.f32 %v1535, %v1969
    %v2600 = vmul.f32 %v1536, %v2147
    %v2601 = vmul.f32 %v1537, %v2325
    %v2602 = vmul.f32 %v1538, %v2503
    %v2603 = vmul.f32 %v1539, %v1972
    %v2604 = vmul.f32 %v1540, %v2150
    %v2605 = vmul.f32 %v1541, %v2328
    %v2606 = vmul.f32 %v1542, %v2506
    %v2607 = vmul.f32 %v1543, %v1974
    %v2608 = vmul.f32 %v1544, %v2152
    %v2609 = vmul.f32 %v1545, %v2330
    %v2610 = vmul.f32 %v1546, %v2508
    %v2611 = vmul.f32 %v1547, %v1977
    %v2612 = vmul.f32 %v1548, %v2155
    %v2613 = vmul.f32 %v1549, %v2333
    %v2614 = vmul.f32 %v1550, %v2511
    %v2615 = vmul.f32 %v1551, %v1979
    %v2616 = vmul.f32 %v1552, %v2157
    %v2617 = vmul.f32 %v1553, %v2335
    %v2618 = vmul.f32 %v1554, %v2513
    %v2619 = vmul.f32 %v1555, %v1982
    %v2620 = vmul.f32 %v1556, %v2160
    %v2621 = vmul.f32 %v1557, %v2338
    %v2622 = vmul.f32 %v1558, %v2516
    %v2623 = vmul.f32 %v1559, %v1984
    %v2624 = vmul.f32 %v1560, %v2162
    %v2625 = vmul.f32 %v1561, %v2340
    %v2626 = vmul.f32 %v1562, %v2518
    %v2627 = vmul.f32 %v1563, %v1987
    %v2628 = vmul.f32 %v1564, %v2165
    %v2629 = vmul.f32 %v1565, %v2343
    %v2630 = vmul.f32 %v1566, %v2521
    %v2631 = vmul.f32 %v1567, %v1989
    %v2632 = vmul.f32 %v1568, %v2167
    %v2633 = vmul.f32 %v1569, %v2345
    %v2634 = vmul.f32 %v1570, %v2523
    %v2635 = vmul.f32 %v1571, %v1992
    %v2636 = vmul.f32 %v1572, %v2170
    %v2637 = vmul.f32 %v1573, %v2348
    %v2638 = vmul.f32 %v1574, %v2526
    %v2639 = vmul.f32 %v1575, %v1994
    %v2640 = vmul.f32 %v1576, %v2172
    %v2641 = vmul.f32 %v1577, %v2350
    %v2642 = vmul.f32 %v1578, %v2528
    %v2643 = vmul.f32 %v1579, %v1997
    %v2644 = vmul.f32 %v1580, %v2175
    %v2645 = vmul.f32 %v1581, %v2353
    %v2646 = vmul.f32 %v1582, %v2531
    %v2647 = vmul.f32 %v1583, %v1999
    %v2648 = vmul.f32 %v1584, %v2177
    %v2649 = vmul.f32 %v1585, %v2355
    %v2650 = vmul.f32 %v1586, %v2533
    %v2651 = vmul.f32 %v1587, %v2002
    %v2652 = vmul.f32 %v1588, %v2180
    %v2653 = vmul.f32 %v1589, %v2358
    %v2654 = vmul.f32 %v1590, %v2536
    %v2655 = vmul.f32 %v1591, %v2004
    %v2656 = vmul.f32 %v1592, %v2182
    %v2657 = vmul.f32 %v1593, %v2360
    %v2658 = vmul.f32 %v1594, %v2538
    %v2659 = vmul.f32 %v1595, %v2007
    %v2660 = vmul.f32 %v1596, %v2185
    %v2661 = vmul.f32 %v1597, %v2363
    %v2662 = vmul.f32 %v1598, %v2541
    %v2663 = vmul.f32 %v1599, %v2009
    %v2664 = vmul.f32 %v1600, %v2187
    %v2665 = vmul.f32 %v1601, %v2365
    %v2666 = vmul.f32 %v1602, %v2543
    %v2667 = vmul.f32 %v1603, %v2012
    %v2668 = vmul.f32 %v1604, %v2190
    %v2669 = vmul.f32 %v1605, %v2368
    %v2670 = vmul.f32 %v1606, %v2546
    %v2671 = vmul.f32 %v1607, %v2014
    %v2672 = vmul.f32 %v1608, %v2192
    %v2673 = vmul.f32 %v1609, %v2370
    %v2674 = vmul.f32 %v1610, %v2548
    %v2675 = vmul.f32 %v1611, %v2017
    %v2676 = vmul.f32 %v1612, %v2195
    %v2677 = vmul.f32 %v1613, %v2373
    %v2678 = vmul.f32 %v1614, %v2551
    %v2679 = vmul.f32 %v1615, %v2019
    %v2680 = vmul.f32 %v1616, %v2197
    %v2681 = vmul.f32 %v1617, %v2375
    %v2682 = vmul.f32 %v1618, %v2553
    %v2683 = vadd.f32 %v2555, %v2556
    %v2684 = vadd.f32 %v2559, %v2560
    %v2685 = vadd.f32 %v2563, %v2564
    %v2686 = vadd.f32 %v2567, %v2568
    %v2687 = vadd.f32 %v2571, %v2572
    %v2688 = vadd.f32 %v2575, %v2576
    %v2689 = vadd.f32 %v2579, %v2580
    %v2690 = vadd.f32 %v2583, %v2584
    %v2691 = vadd.f32 %v2587, %v2588
    %v2692 = vadd.f32 %v2591, %v2592
    %v2693 = vadd.f32 %v2595, %v2596
    %v2694 = vadd.f32 %v2599, %v2600
    %v2695 = vadd.f32 %v2603, %v2604
    %v2696 = vadd.f32 %v2607, %v2608
    %v2697 = vadd.f32 %v2611, %v2612
    %v2698 = vadd.f32 %v2615, %v2616
    %v2699 = vadd.f32 %v2619, %v2620
    %v2700 = vadd.f32 %v2623, %v2624
    %v2701 = vadd.f32 %v2627, %v2628
    %v2702 = vadd.f32 %v2631, %v2632
    %v2703 = vadd.f32 %v2635, %v2636
    %v2704 = vadd.f32 %v2639, %v2640
    %v2705 = vadd.f32 %v2643, %v2644
    %v2706 = vadd.f32 %v2647, %v2648
    %v2707 = vadd.f32 %v2651, %v2652
    %v2708 = vadd.f32 %v2655, %v2656
    %v2709 = vadd.f32 %v2659, %v2660
    %v2710 = vadd.f32 %v2663, %v2664
    %v2711 = vadd.f32 %v2667, %v2668
    %v2712 = vadd.f32 %v2671, %v2672
    %v2713 = vadd.f32 %v2675, %v2676
    %v2714 = vadd.f32 %v2679, %v2680
    %v2715 = vadd.f32 %v2683, %v2557
    %v2716 = vadd.f32 %v2684, %v2561
    %v2717 = vadd.f32 %v2685, %v2565
    %v2718 = vadd.f32 %v2686, %v2569
    %v2719 = vadd.f32 %v2687, %v2573
    %v2720 = vadd.f32 %v2688, %v2577
    %v2721 = vadd.f32 %v2689, %v2581
    %v2722 = vadd.f32 %v2690, %v2585
    %v2723 = vadd.f32 %v2691, %v2589
    %v2724 = vadd.f32 %v2692, %v2593
    %v2725 = vadd.f32 %v2693, %v2597
    %v2726 = vadd.f32 %v2694, %v2601
    %v2727 = vadd.f32 %v2695, %v2605
    %v2728 = vadd.f32 %v2696, %v2609
    %v2729 = vadd.f32 %v2697, %v2613
    %v2730 = vadd.f32 %v2698, %v2617
    %v2731 = vadd.f32 %v2699, %v2621
    %v2732 = vadd.f32 %v2700, %v2625
    %v2733 = vadd.f32 %v2701, %v2629
    %v2734 = vadd.f32 %v2702, %v2633
    %v2735 = vadd.f32 %v2703, %v2637
    %v2736 = vadd.f32 %v2704, %v2641
    %v2737 = vadd.f32 %v2705, %v2645
    %v2738 = vadd.f32 %v2706, %v2649
    %v2739 = vadd.f32 %v2707, %v2653
    %v2740 = vadd.f32 %v2708, %v2657
    %v2741 = vadd.f32 %v2709, %v2661
    %v2742 = vadd.f32 %v2710, %v2665
    %v2743 = vadd.f32 %v2711, %v2669
    %v2744 = vadd.f32 %v2712, %v2673
    %v2745 = vadd.f32 %v2713, %v2677
    %v2746 = vadd.f32 %v2714, %v2681
    %v2747 = vadd.f32 %v2715, %v2558
    %v2748 = vadd.f32 %v2716, %v2562
    %v2749 = vadd.f32 %v2717, %v2566
    %v2750 = vadd.f32 %v2718, %v2570
    %v2751 = vadd.f32 %v2719, %v2574
    %v2752 = vadd.f32 %v2720, %v2578
    %v2753 = vadd.f32 %v2721, %v2582
    %v2754 = vadd.f32 %v2722, %v2586
    %v2755 = vadd.f32 %v2723, %v2590
    %v2756 = vadd.f32 %v2724, %v2594
    %v2757 = vadd.f32 %v2725, %v2598
    %v2758 = vadd.f32 %v2726, %v2602
    %v2759 = vadd.f32 %v2727, %v2606
    %v2760 = vadd.f32 %v2728, %v2610
    %v2761 = vadd.f32 %v2729, %v2614
    %v2762 = vadd.f32 %v2730, %v2618
    %v2763 = vadd.f32 %v2731, %v2622
    %v2764 = vadd.f32 %v2732, %v2626
    %v2765 = vadd.f32 %v2733, %v2630
    %v2766 = vadd.f32 %v2734, %v2634
    %v2767 = vadd.f32 %v2735, %v2638
    %v2768 = vadd.f32 %v2736, %v2642
    %v2769 = vadd.f32 %v2737, %v2646
    %v2770 = vadd.f32 %v2738, %v2650
    %v2771 = vadd.f32 %v2739, %v2654
    %v2772 = vadd.f32 %v2740, %v2658
    %v2773 = vadd.f32 %v2741, %v2662
    %v2774 = vadd.f32 %v2742, %v2666
    %v2775 = vadd.f32 %v2743, %v2670
    %v2776 = vadd.f32 %v2744, %v2674
    %v2777 = vadd.f32 %v2745, %v2678
    %v2778 = vadd.f32 %v2746, %v2682
    %v2779 = vld [vmem:[#allocation9] sm:$0x1]
    %v2781 = vperm.slane %v2779, 0
    %v2783 = vadd.f32 %v2747, %v2781
    %v2784 = vadd.f32 %v2748, %v2781
    %v2785 = vadd.f32 %v2749, %v2781
    %v2786 = vadd.f32 %v2750, %v2781
    %v2787 = vadd.f32 %v2751, %v2781
    %v2788 = vadd.f32 %v2752, %v2781
    %v2789 = vadd.f32 %v2753, %v2781
    %v2790 = vadd.f32 %v2754, %v2781
    %v2791 = vadd.f32 %v2755, %v2781
    %v2792 = vadd.f32 %v2756, %v2781
    %v2793 = vadd.f32 %v2757, %v2781
    %v2794 = vadd.f32 %v2758, %v2781
    %v2795 = vadd.f32 %v2759, %v2781
    %v2796 = vadd.f32 %v2760, %v2781
    %v2797 = vadd.f32 %v2761, %v2781
    %v2798 = vadd.f32 %v2762, %v2781
    %v2799 = vadd.f32 %v2763, %v2781
    %v2800 = vadd.f32 %v2764, %v2781
    %v2801 = vadd.f32 %v2765, %v2781
    %v2802 = vadd.f32 %v2766, %v2781
    %v2803 = vadd.f32 %v2767, %v2781
    %v2804 = vadd.f32 %v2768, %v2781
    %v2805 = vadd.f32 %v2769, %v2781
    %v2806 = vadd.f32 %v2770, %v2781
    %v2807 = vadd.f32 %v2771, %v2781
    %v2808 = vadd.f32 %v2772, %v2781
    %v2809 = vadd.f32 %v2773, %v2781
    %v2810 = vadd.f32 %v2774, %v2781
    %v2811 = vadd.f32 %v2775, %v2781
    %v2812 = vadd.f32 %v2776, %v2781
    %v2813 = vadd.f32 %v2777, %v2781
    %v2814 = vadd.f32 %v2778, %v2781
    %vm2815 = vcmp.ge.f32.partialorder %v2783, 0.0
    %vm2816 = vcmp.ge.f32.partialorder %v2784, 0.0
    %vm2817 = vcmp.ge.f32.partialorder %v2785, 0.0
    %vm2818 = vcmp.ge.f32.partialorder %v2786, 0.0
    %vm2819 = vcmp.ge.f32.partialorder %v2787, 0.0
    %vm2820 = vcmp.ge.f32.partialorder %v2788, 0.0
    %vm2821 = vcmp.ge.f32.partialorder %v2789, 0.0
    %vm2822 = vcmp.ge.f32.partialorder %v2790, 0.0
    %vm2823 = vcmp.ge.f32.partialorder %v2791, 0.0
    %vm2824 = vcmp.ge.f32.partialorder %v2792, 0.0
    %vm2825 = vcmp.ge.f32.partialorder %v2793, 0.0
    %vm2826 = vcmp.ge.f32.partialorder %v2794, 0.0
    %vm2827 = vcmp.ge.f32.partialorder %v2795, 0.0
    %vm2828 = vcmp.ge.f32.partialorder %v2796, 0.0
    %vm2829 = vcmp.ge.f32.partialorder %v2797, 0.0
    %vm2830 = vcmp.ge.f32.partialorder %v2798, 0.0
    %vm2831 = vcmp.ge.f32.partialorder %v2799, 0.0
    %vm2832 = vcmp.ge.f32.partialorder %v2800, 0.0
    %vm2833 = vcmp.ge.f32.partialorder %v2801, 0.0
    %vm2834 = vcmp.ge.f32.partialorder %v2802, 0.0
    %vm2835 = vcmp.ge.f32.partialorder %v2803, 0.0
    %vm2836 = vcmp.ge.f32.partialorder %v2804, 0.0
    %vm2837 = vcmp.ge.f32.partialorder %v2805, 0.0
    %vm2838 = vcmp.ge.f32.partialorder %v2806, 0.0
    %vm2839 = vcmp.ge.f32.partialorder %v2807, 0.0
    %vm2840 = vcmp.ge.f32.partialorder %v2808, 0.0
    %vm2841 = vcmp.ge.f32.partialorder %v2809, 0.0
    %vm2842 = vcmp.ge.f32.partialorder %v2810, 0.0
    %vm2843 = vcmp.ge.f32.partialorder %v2811, 0.0
    %vm2844 = vcmp.ge.f32.partialorder %v2812, 0.0
    %vm2845 = vcmp.ge.f32.partialorder %v2813, 0.0
    %vm2846 = vcmp.ge.f32.partialorder %v2814, 0.0
    %v2847 = vmul.f32 %v2783, 0.01
    %v2848 = vmul.f32 %v2784, 0.01
    %v2849 = vmul.f32 %v2785, 0.01
    %v2850 = vmul.f32 %v2786, 0.01
    %v2851 = vmul.f32 %v2787, 0.01
    %v2852 = vmul.f32 %v2788, 0.01
    %v2853 = vmul.f32 %v2789, 0.01
    %v2854 = vmul.f32 %v2790, 0.01
    %v2855 = vmul.f32 %v2791, 0.01
    %v2856 = vmul.f32 %v2792, 0.01
    %v2857 = vmul.f32 %v2793, 0.01
    %v2858 = vmul.f32 %v2794, 0.01
    %v2859 = vmul.f32 %v2795, 0.01
    %v2860 = vmul.f32 %v2796, 0.01
    %v2861 = vmul.f32 %v2797, 0.01
    %v2862 = vmul.f32 %v2798, 0.01
    %v2863 = vmul.f32 %v2799, 0.01
    %v2864 = vmul.f32 %v2800, 0.01
    %v2865 = vmul.f32 %v2801, 0.01
    %v2866 = vmul.f32 %v2802, 0.01
    %v2867 = vmul.f32 %v2803, 0.01
    %v2868 = vmul.f32 %v2804, 0.01
    %v2869 = vmul.f32 %v2805, 0.01
    %v2870 = vmul.f32 %v2806, 0.01
    %v2871 = vmul.f32 %v2807, 0.01
    %v2872 = vmul.f32 %v2808, 0.01
    %v2873 = vmul.f32 %v2809, 0.01
    %v2874 = vmul.f32 %v2810, 0.01
    %v2875 = vmul.f32 %v2811, 0.01
    %v2876 = vmul.f32 %v2812, 0.01
    %v2877 = vmul.f32 %v2813, 0.01
    %v2878 = vmul.f32 %v2814, 0.01
    %v2879 = vsel %vm2815, %v2783, %v2847
    %v2880 = vsel %vm2816, %v2784, %v2848
    %v2881 = vsel %vm2817, %v2785, %v2849
    %v2882 = vsel %vm2818, %v2786, %v2850
    %v2883 = vsel %vm2819, %v2787, %v2851
    %v2884 = vsel %vm2820, %v2788, %v2852
    %v2885 = vsel %vm2821, %v2789, %v2853
    %v2886 = vsel %vm2822, %v2790, %v2854
    %v2887 = vsel %vm2823, %v2791, %v2855
    %v2888 = vsel %vm2824, %v2792, %v2856
    %v2889 = vsel %vm2825, %v2793, %v2857
    %v2890 = vsel %vm2826, %v2794, %v2858
    %v2891 = vsel %vm2827, %v2795, %v2859
    %v2892 = vsel %vm2828, %v2796, %v2860
    %v2893 = vsel %vm2829, %v2797, %v2861
    %v2894 = vsel %vm2830, %v2798, %v2862
    %v2895 = vsel %vm2831, %v2799, %v2863
    %v2896 = vsel %vm2832, %v2800, %v2864
    %v2897 = vsel %vm2833, %v2801, %v2865
    %v2898 = vsel %vm2834, %v2802, %v2866
    %v2899 = vsel %vm2835, %v2803, %v2867
    %v2900 = vsel %vm2836, %v2804, %v2868
    %v2901 = vsel %vm2837, %v2805, %v2869
    %v2902 = vsel %vm2838, %v2806, %v2870
    %v2903 = vsel %vm2839, %v2807, %v2871
    %v2904 = vsel %vm2840, %v2808, %v2872
    %v2905 = vsel %vm2841, %v2809, %v2873
    %v2906 = vsel %vm2842, %v2810, %v2874
    %v2907 = vsel %vm2843, %v2811, %v2875
    %v2908 = vsel %vm2844, %v2812, %v2876
    %v2909 = vsel %vm2845, %v2813, %v2877
    %v2910 = vsel %vm2846, %v2814, %v2878
    %v2911 = vpack.c.bf16 %v2879, %v2879
    %v2912 = vpack.c.bf16 %v2880, %v2880
    %v2913 = vpack.c.bf16 %v2881, %v2881
    %v2914 = vpack.c.bf16 %v2882, %v2882
    %v2915 = vpack.c.bf16 %v2883, %v2883
    %v2916 = vpack.c.bf16 %v2884, %v2884
    %v2917 = vpack.c.bf16 %v2885, %v2885
    %v2918 = vpack.c.bf16 %v2886, %v2886
    %v2919 = vpack.c.bf16 %v2887, %v2887
    %v2920 = vpack.c.bf16 %v2888, %v2888
    %v2921 = vpack.c.bf16 %v2889, %v2889
    %v2922 = vpack.c.bf16 %v2890, %v2890
    %v2923 = vpack.c.bf16 %v2891, %v2891
    %v2924 = vpack.c.bf16 %v2892, %v2892
    %v2925 = vpack.c.bf16 %v2893, %v2893
    %v2926 = vpack.c.bf16 %v2894, %v2894
    %v2927 = vpack.c.bf16 %v2895, %v2895
    %v2928 = vpack.c.bf16 %v2896, %v2896
    %v2929 = vpack.c.bf16 %v2897, %v2897
    %v2930 = vpack.c.bf16 %v2898, %v2898
    %v2931 = vpack.c.bf16 %v2899, %v2899
    %v2932 = vpack.c.bf16 %v2900, %v2900
    %v2933 = vpack.c.bf16 %v2901, %v2901
    %v2934 = vpack.c.bf16 %v2902, %v2902
    %v2935 = vpack.c.bf16 %v2903, %v2903
    %v2936 = vpack.c.bf16 %v2904, %v2904
    %v2937 = vpack.c.bf16 %v2905, %v2905
    %v2938 = vpack.c.bf16 %v2906, %v2906
    %v2939 = vpack.c.bf16 %v2907, %v2907
    %v2940 = vpack.c.bf16 %v2908, %v2908
    %v2941 = vpack.c.bf16 %v2909, %v2909
    %v2942 = vpack.c.bf16 %v2910, %v2910
    %2943 = vst [vmem:[#allocation2 + $0x4] sm:$0xf] %v2911
    %2944 = vst [vmem:[#allocation2 + $0x10] sm:$0xf] %v2912
    %2945 = vst [vmem:[#allocation2 + $0x1c] sm:$0xf] %v2913
    %2946 = vst [vmem:[#allocation2 + $0x28] sm:$0xf] %v2914
    %2947 = vst [vmem:[#allocation2 + $0x34] sm:$0xf] %v2915
    %2948 = vst [vmem:[#allocation2 + $0x40] sm:$0xf] %v2916
    %2949 = vst [vmem:[#allocation2 + $0x4c] sm:$0xf] %v2917
    %2950 = vst [vmem:[#allocation2 + $0x58] sm:$0xf] %v2918
    %2951 = vst [vmem:[#allocation2 + $0x64] sm:$0xf] %v2919
    %2952 = vst [vmem:[#allocation2 + $0x70] sm:$0xf] %v2920
    %2953 = vst [vmem:[#allocation2 + $0x7c] sm:$0xf] %v2921
    %2954 = vst [vmem:[#allocation2 + $0x88] sm:$0xf] %v2922
    %2955 = vst [vmem:[#allocation2 + $0x94] sm:$0xf] %v2923
    %2956 = vst [vmem:[#allocation2 + $0xa0] sm:$0xf] %v2924
    %2957 = vst [vmem:[#allocation2 + $0xac] sm:$0xf] %v2925
    %2958 = vst [vmem:[#allocation2 + $0xb8] sm:$0xf] %v2926
    %2959 = vst [vmem:[#allocation2 + $0xc4] sm:$0xf] %v2927
    %2960 = vst [vmem:[#allocation2 + $0xd0] sm:$0xf] %v2928
    %2961 = vst [vmem:[#allocation2 + $0xdc] sm:$0xf] %v2929
    %2962 = vst [vmem:[#allocation2 + $0xe8] sm:$0xf] %v2930
    %2963 = vst [vmem:[#allocation2 + $0xf4] sm:$0xf] %v2931
    %2964 = vst [vmem:[#allocation2 + $0x100] sm:$0xf] %v2932
    %2965 = vst [vmem:[#allocation2 + $0x10c] sm:$0xf] %v2933
    %2966 = vst [vmem:[#allocation2 + $0x118] sm:$0xf] %v2934
    %2967 = vst [vmem:[#allocation2 + $0x124] sm:$0xf] %v2935
    %2968 = vst [vmem:[#allocation2 + $0x130] sm:$0xf] %v2936
    %2969 = vst [vmem:[#allocation2 + $0x13c] sm:$0xf] %v2937
    %2970 = vst [vmem:[#allocation2 + $0x148] sm:$0xf] %v2938
    %2971 = vst [vmem:[#allocation2 + $0x154] sm:$0xf] %v2939
    %2972 = vst [vmem:[#allocation2 + $0x160] sm:$0xf] %v2940
    %2973 = vst [vmem:[#allocation2 + $0x16c] sm:$0xf] %v2941
    %2974 = vst [vmem:[#allocation2 + $0x178] sm:$0xf] %v2942
    %v2975 = vld [vmem:[#allocation11] sm:$0xff]
    %v2976 = vld [vmem:[#allocation11 + $0x8] sm:$0xff]
    %v2977 = vld [vmem:[#allocation11 + $0x10] sm:$0xff]
    %v2978 = vld [vmem:[#allocation11 + $0x18] sm:$0xff]
    %v2979 = vld [vmem:[#allocation11 + $0x20] sm:$0xff]
    %v2980 = vld [vmem:[#allocation11 + $0x28] sm:$0xff]
    %v2981 = vld [vmem:[#allocation11 + $0x30] sm:$0xff]
    %v2982 = vld [vmem:[#allocation11 + $0x38] sm:$0xff]
    %v2983 = vld [vmem:[#allocation11 + $0x40] sm:$0xff]
    %v2984 = vld [vmem:[#allocation11 + $0x48] sm:$0xff]
    %v2985 = vld [vmem:[#allocation11 + $0x50] sm:$0xff]
    %v2986 = vld [vmem:[#allocation11 + $0x58] sm:$0xff]
    %v2987 = vld [vmem:[#allocation11 + $0x60] sm:$0xff]
    %v2988 = vld [vmem:[#allocation11 + $0x68] sm:$0xff]
    %v2989 = vld [vmem:[#allocation11 + $0x70] sm:$0xff]
    %v2990 = vld [vmem:[#allocation11 + $0x78] sm:$0xff]
    %v2991 = vld [vmem:[#allocation11 + $0x80] sm:$0xff]
    %v2992 = vld [vmem:[#allocation11 + $0x88] sm:$0xff]
    %v2993 = vld [vmem:[#allocation11 + $0x90] sm:$0xff]
    %v2994 = vld [vmem:[#allocation11 + $0x98] sm:$0xff]
    %v2995 = vld [vmem:[#allocation11 + $0xa0] sm:$0xff]
    %v2996 = vld [vmem:[#allocation11 + $0xa8] sm:$0xff]
    %v2997 = vld [vmem:[#allocation11 + $0xb0] sm:$0xff]
    %v2998 = vld [vmem:[#allocation11 + $0xb8] sm:$0xff]
    %v2999 = vld [vmem:[#allocation11 + $0xc0] sm:$0xff]
    %v3000 = vld [vmem:[#allocation11 + $0xc8] sm:$0xff]
    %v3001 = vld [vmem:[#allocation11 + $0xd0] sm:$0xff]
    %v3002 = vld [vmem:[#allocation11 + $0xd8] sm:$0xff]
    %v3003 = vld [vmem:[#allocation11 + $0xe0] sm:$0xff]
    %v3004 = vld [vmem:[#allocation11 + $0xe8] sm:$0xff]
    %v3005 = vld [vmem:[#allocation11 + $0xf0] sm:$0xff]
    %v3006 = vld [vmem:[#allocation11 + $0xf8] sm:$0xff]
    %v3007 = vld [vmem:[#allocation11 + $0x100] sm:$0xff]
    %v3008 = vld [vmem:[#allocation11 + $0x108] sm:$0xff]
    %v3009 = vld [vmem:[#allocation11 + $0x110] sm:$0xff]
    %v3010 = vld [vmem:[#allocation11 + $0x118] sm:$0xff]
    %v3011 = vld [vmem:[#allocation11 + $0x120] sm:$0xff]
    %v3012 = vld [vmem:[#allocation11 + $0x128] sm:$0xff]
    %v3013 = vld [vmem:[#allocation11 + $0x130] sm:$0xff]
    %v3014 = vld [vmem:[#allocation11 + $0x138] sm:$0xff]
    %v3015 = vld [vmem:[#allocation11 + $0x140] sm:$0xff]
    %v3016 = vld [vmem:[#allocation11 + $0x148] sm:$0xff]
    %v3017 = vld [vmem:[#allocation11 + $0x150] sm:$0xff]
    %v3018 = vld [vmem:[#allocation11 + $0x158] sm:$0xff]
    %v3019 = vld [vmem:[#allocation11 + $0x160] sm:$0xff]
    %v3020 = vld [vmem:[#allocation11 + $0x168] sm:$0xff]
    %v3021 = vld [vmem:[#allocation11 + $0x170] sm:$0xff]
    %v3022 = vld [vmem:[#allocation11 + $0x178] sm:$0xff]
    %v3023 = vld [vmem:[#allocation11 + $0x180] sm:$0xff]
    %v3024 = vld [vmem:[#allocation11 + $0x188] sm:$0xff]
    %v3025 = vld [vmem:[#allocation11 + $0x190] sm:$0xff]
    %v3026 = vld [vmem:[#allocation11 + $0x198] sm:$0xff]
    %v3027 = vld [vmem:[#allocation11 + $0x1a0] sm:$0xff]
    %v3028 = vld [vmem:[#allocation11 + $0x1a8] sm:$0xff]
    %v3029 = vld [vmem:[#allocation11 + $0x1b0] sm:$0xff]
    %v3030 = vld [vmem:[#allocation11 + $0x1b8] sm:$0xff]
    %v3031 = vld [vmem:[#allocation11 + $0x1c0] sm:$0xff]
    %v3032 = vld [vmem:[#allocation11 + $0x1c8] sm:$0xff]
    %v3033 = vld [vmem:[#allocation11 + $0x1d0] sm:$0xff]
    %v3034 = vld [vmem:[#allocation11 + $0x1d8] sm:$0xff]
    %v3035 = vld [vmem:[#allocation11 + $0x1e0] sm:$0xff]
    %v3036 = vld [vmem:[#allocation11 + $0x1e8] sm:$0xff]
    %v3037 = vld [vmem:[#allocation11 + $0x1f0] sm:$0xff]
    %v3038 = vld [vmem:[#allocation11 + $0x1f8] sm:$0xff]
    %v3071 = vunpack.c.l.b16 %v2911
    %v3072 = vunpack.c.l.b16 %v2912
    %v3073 = vunpack.c.l.b16 %v2913
    %v3074 = vunpack.c.l.b16 %v2914
    %v3075 = vunpack.c.l.b16 %v2915
    %v3076 = vunpack.c.l.b16 %v2916
    %v3077 = vunpack.c.l.b16 %v2917
    %v3078 = vunpack.c.l.b16 %v2918
    %v3079 = vunpack.c.l.b16 %v2919
    %v3080 = vunpack.c.l.b16 %v2920
    %v3081 = vunpack.c.l.b16 %v2921
    %v3082 = vunpack.c.l.b16 %v2922
    %v3083 = vunpack.c.l.b16 %v2923
    %v3084 = vunpack.c.l.b16 %v2924
    %v3085 = vunpack.c.l.b16 %v2925
    %v3086 = vunpack.c.l.b16 %v2926
    %v3087 = vunpack.c.l.b16 %v2927
    %v3088 = vunpack.c.l.b16 %v2928
    %v3089 = vunpack.c.l.b16 %v2929
    %v3090 = vunpack.c.l.b16 %v2930
    %v3091 = vunpack.c.l.b16 %v2931
    %v3092 = vunpack.c.l.b16 %v2932
    %v3093 = vunpack.c.l.b16 %v2933
    %v3094 = vunpack.c.l.b16 %v2934
    %v3095 = vunpack.c.l.b16 %v2935
    %v3096 = vunpack.c.l.b16 %v2936
    %v3097 = vunpack.c.l.b16 %v2937
    %v3098 = vunpack.c.l.b16 %v2938
    %v3099 = vunpack.c.l.b16 %v2939
    %v3100 = vunpack.c.l.b16 %v2940
    %v3101 = vunpack.c.l.b16 %v2941
    %v3102 = vunpack.c.l.b16 %v2942
    %v3103 = vpack.c.b16 %v3072, %v3071
    %v3104 = vpack.c.b16 %v3074, %v3073
    %v3105 = vpack.c.b16 %v3076, %v3075
    %v3106 = vpack.c.b16 %v3078, %v3077
    %v3107 = vpack.c.b16 %v3080, %v3079
    %v3108 = vpack.c.b16 %v3082, %v3081
    %v3109 = vpack.c.b16 %v3084, %v3083
    %v3110 = vpack.c.b16 %v3086, %v3085
    %v3111 = vpack.c.b16 %v3088, %v3087
    %v3112 = vpack.c.b16 %v3090, %v3089
    %v3113 = vpack.c.b16 %v3092, %v3091
    %v3114 = vpack.c.b16 %v3094, %v3093
    %v3115 = vpack.c.b16 %v3096, %v3095
    %v3116 = vpack.c.b16 %v3098, %v3097
    %v3117 = vpack.c.b16 %v3100, %v3099
    %v3118 = vpack.c.b16 %v3102, %v3101
    %v3199 = vunpack.c.l.b16 %v2975
    %v3200 = vunpack.c.h.b16 %v2975
    %v3201 = vunpack.c.l.b16 %v2976
    %v3202 = vunpack.c.h.b16 %v2976
    %v3203 = vunpack.c.l.b16 %v2977
    %v3204 = vunpack.c.h.b16 %v2977
    %v3205 = vunpack.c.l.b16 %v2978
    %v3206 = vunpack.c.h.b16 %v2978
    %v3207 = vunpack.c.l.b16 %v2979
    %v3208 = vunpack.c.h.b16 %v2979
    %v3209 = vunpack.c.l.b16 %v2980
    %v3210 = vunpack.c.h.b16 %v2980
    %v3211 = vunpack.c.l.b16 %v2981
    %v3212 = vunpack.c.h.b16 %v2981
    %v3213 = vunpack.c.l.b16 %v2982
    %v3214 = vunpack.c.h.b16 %v2982
    %v3215 = vunpack.c.l.b16 %v2983
    %v3216 = vunpack.c.h.b16 %v2983
    %v3217 = vunpack.c.l.b16 %v2984
    %v3218 = vunpack.c.h.b16 %v2984
    %v3219 = vunpack.c.l.b16 %v2985
    %v3220 = vunpack.c.h.b16 %v2985
    %v3221 = vunpack.c.l.b16 %v2986
    %v3222 = vunpack.c.h.b16 %v2986
    %v3223 = vunpack.c.l.b16 %v2987
    %v3224 = vunpack.c.h.b16 %v2987
    %v3225 = vunpack.c.l.b16 %v2988
    %v3226 = vunpack.c.h.b16 %v2988
    %v3227 = vunpack.c.l.b16 %v2989
    %v3228 = vunpack.c.h.b16 %v2989
    %v3229 = vunpack.c.l.b16 %v2990
    %v3230 = vunpack.c.h.b16 %v2990
    %v3231 = vunpack.c.l.b16 %v2991
    %v3232 = vunpack.c.h.b16 %v2991
    %v3233 = vunpack.c.l.b16 %v2992
    %v3234 = vunpack.c.h.b16 %v2992
    %v3235 = vunpack.c.l.b16 %v2993
    %v3236 = vunpack.c.h.b16 %v2993
    %v3237 = vunpack.c.l.b16 %v2994
    %v3238 = vunpack.c.h.b16 %v2994
    %v3239 = vunpack.c.l.b16 %v2995
    %v3240 = vunpack.c.h.b16 %v2995
    %v3241 = vunpack.c.l.b16 %v2996
    %v3242 = vunpack.c.h.b16 %v2996
    %v3243 = vunpack.c.l.b16 %v2997
    %v3244 = vunpack.c.h.b16 %v2997
    %v3245 = vunpack.c.l.b16 %v2998
    %v3246 = vunpack.c.h.b16 %v2998
    %v3247 = vunpack.c.l.b16 %v2999
    %v3248 = vunpack.c.h.b16 %v2999
    %v3249 = vunpack.c.l.b16 %v3000
    %v3250 = vunpack.c.h.b16 %v3000
    %v3251 = vunpack.c.l.b16 %v3001
    %v3252 = vunpack.c.h.b16 %v3001
    %v3253 = vunpack.c.l.b16 %v3002
    %v3254 = vunpack.c.h.b16 %v3002
    %v3255 = vunpack.c.l.b16 %v3003
    %v3256 = vunpack.c.h.b16 %v3003
    %v3257 = vunpack.c.l.b16 %v3004
    %v3258 = vunpack.c.h.b16 %v3004
    %v3259 = vunpack.c.l.b16 %v3005
    %v3260 = vunpack.c.h.b16 %v3005
    %v3261 = vunpack.c.l.b16 %v3006
    %v3262 = vunpack.c.h.b16 %v3006
    %v3263 = vunpack.c.l.b16 %v3007
    %v3264 = vunpack.c.h.b16 %v3007
    %v3265 = vunpack.c.l.b16 %v3008
    %v3266 = vunpack.c.h.b16 %v3008
    %v3267 = vunpack.c.l.b16 %v3009
    %v3268 = vunpack.c.h.b16 %v3009
    %v3269 = vunpack.c.l.b16 %v3010
    %v3270 = vunpack.c.h.b16 %v3010
    %v3271 = vunpack.c.l.b16 %v3011
    %v3272 = vunpack.c.h.b16 %v3011
    %v3273 = vunpack.c.l.b16 %v3012
    %v3274 = vunpack.c.h.b16 %v3012
    %v3275 = vunpack.c.l.b16 %v3013
    %v3276 = vunpack.c.h.b16 %v3013
    %v3277 = vunpack.c.l.b16 %v3014
    %v3278 = vunpack.c.h.b16 %v3014
    %v3279 = vunpack.c.l.b16 %v3015
    %v3280 = vunpack.c.h.b16 %v3015
    %v3281 = vunpack.c.l.b16 %v3016
    %v3282 = vunpack.c.h.b16 %v3016
    %v3283 = vunpack.c.l.b16 %v3017
    %v3284 = vunpack.c.h.b16 %v3017
    %v3285 = vunpack.c.l.b16 %v3018
    %v3286 = vunpack.c.h.b16 %v3018
    %v3287 = vunpack.c.l.b16 %v3019
    %v3288 = vunpack.c.h.b16 %v3019
    %v3289 = vunpack.c.l.b16 %v3020
    %v3290 = vunpack.c.h.b16 %v3020
    %v3291 = vunpack.c.l.b16 %v3021
    %v3292 = vunpack.c.h.b16 %v3021
    %v3293 = vunpack.c.l.b16 %v3022
    %v3294 = vunpack.c.h.b16 %v3022
    %v3295 = vunpack.c.l.b16 %v3023
    %v3296 = vunpack.c.h.b16 %v3023
    %v3297 = vunpack.c.l.b16 %v3024
    %v3298 = vunpack.c.h.b16 %v3024
    %v3299 = vunpack.c.l.b16 %v3025
    %v3300 = vunpack.c.h.b16 %v3025
    %v3301 = vunpack.c.l.b16 %v3026
    %v3302 = vunpack.c.h.b16 %v3026
    %v3303 = vunpack.c.l.b16 %v3027
    %v3304 = vunpack.c.h.b16 %v3027
    %v3305 = vunpack.c.l.b16 %v3028
    %v3306 = vunpack.c.h.b16 %v3028
    %v3307 = vunpack.c.l.b16 %v3029
    %v3308 = vunpack.c.h.b16 %v3029
    %v3309 = vunpack.c.l.b16 %v3030
    %v3310 = vunpack.c.h.b16 %v3030
    %v3311 = vunpack.c.l.b16 %v3031
    %v3312 = vunpack.c.h.b16 %v3031
    %v3313 = vunpack.c.l.b16 %v3032
    %v3314 = vunpack.c.h.b16 %v3032
    %v3315 = vunpack.c.l.b16 %v3033
    %v3316 = vunpack.c.h.b16 %v3033
    %v3317 = vunpack.c.l.b16 %v3034
    %v3318 = vunpack.c.h.b16 %v3034
    %v3319 = vunpack.c.l.b16 %v3035
    %v3320 = vunpack.c.h.b16 %v3035
    %v3321 = vunpack.c.l.b16 %v3036
    %v3322 = vunpack.c.h.b16 %v3036
    %v3323 = vunpack.c.l.b16 %v3037
    %v3324 = vunpack.c.h.b16 %v3037
    %v3325 = vunpack.c.l.b16 %v3038
    %v3326 = vunpack.c.h.b16 %v3038
    %v3327 = vpack.c.b16 %v3207, %v3199
    %v3328 = vpack.c.b16 %v3208, %v3200
    %v3329 = vpack.c.b16 %v3209, %v3201
    %v3330 = vpack.c.b16 %v3210, %v3202
    %v3331 = vpack.c.b16 %v3211, %v3203
    %v3332 = vpack.c.b16 %v3212, %v3204
    %v3333 = vpack.c.b16 %v3213, %v3205
    %v3334 = vpack.c.b16 %v3214, %v3206
    %v3335 = vpack.c.b16 %v3223, %v3215
    %v3336 = vpack.c.b16 %v3224, %v3216
    %v3337 = vpack.c.b16 %v3225, %v3217
    %v3338 = vpack.c.b16 %v3226, %v3218
    %v3339 = vpack.c.b16 %v3227, %v3219
    %v3340 = vpack.c.b16 %v3228, %v3220
    %v3341 = vpack.c.b16 %v3229, %v3221
    %v3342 = vpack.c.b16 %v3230, %v3222
    %v3343 = vpack.c.b16 %v3239, %v3231
    %v3344 = vpack.c.b16 %v3240, %v3232
    %v3345 = vpack.c.b16 %v3241, %v3233
    %v3346 = vpack.c.b16 %v3242, %v3234
    %v3347 = vpack.c.b16 %v3243, %v3235
    %v3348 = vpack.c.b16 %v3244, %v3236
    %v3349 = vpack.c.b16 %v3245, %v3237
    %v3350 = vpack.c.b16 %v3246, %v3238
    %v3351 = vpack.c.b16 %v3255, %v3247
    %v3352 = vpack.c.b16 %v3256, %v3248
    %v3353 = vpack.c.b16 %v3257, %v3249
    %v3354 = vpack.c.b16 %v3258, %v3250
    %v3355 = vpack.c.b16 %v3259, %v3251
    %v3356 = vpack.c.b16 %v3260, %v3252
    %v3357 = vpack.c.b16 %v3261, %v3253
    %v3358 = vpack.c.b16 %v3262, %v3254
    %v3359 = vpack.c.b16 %v3271, %v3263
    %v3360 = vpack.c.b16 %v3272, %v3264
    %v3361 = vpack.c.b16 %v3273, %v3265
    %v3362 = vpack.c.b16 %v3274, %v3266
    %v3363 = vpack.c.b16 %v3275, %v3267
    %v3364 = vpack.c.b16 %v3276, %v3268
    %v3365 = vpack.c.b16 %v3277, %v3269
    %v3366 = vpack.c.b16 %v3278, %v3270
    %v3367 = vpack.c.b16 %v3287, %v3279
    %v3368 = vpack.c.b16 %v3288, %v3280
    %v3369 = vpack.c.b16 %v3289, %v3281
    %v3370 = vpack.c.b16 %v3290, %v3282
    %v3371 = vpack.c.b16 %v3291, %v3283
    %v3372 = vpack.c.b16 %v3292, %v3284
    %v3373 = vpack.c.b16 %v3293, %v3285
    %v3374 = vpack.c.b16 %v3294, %v3286
    %v3375 = vpack.c.b16 %v3303, %v3295
    %v3376 = vpack.c.b16 %v3304, %v3296
    %v3377 = vpack.c.b16 %v3305, %v3297
    %v3378 = vpack.c.b16 %v3306, %v3298
    %v3379 = vpack.c.b16 %v3307, %v3299
    %v3380 = vpack.c.b16 %v3308, %v3300
    %v3381 = vpack.c.b16 %v3309, %v3301
    %v3382 = vpack.c.b16 %v3310, %v3302
    %v3383 = vpack.c.b16 %v3319, %v3311
    %v3384 = vpack.c.b16 %v3320, %v3312
    %v3385 = vpack.c.b16 %v3321, %v3313
    %v3386 = vpack.c.b16 %v3322, %v3314
    %v3387 = vpack.c.b16 %v3323, %v3315
    %v3388 = vpack.c.b16 %v3324, %v3316
    %v3389 = vpack.c.b16 %v3325, %v3317
    %v3390 = vpack.c.b16 %v3326, %v3318
    %3455 = vmatpush.bf16.msra.mxu0 %v3383
    %3456 = vmatpush.bf16.msra.mxu0 %v3375
    %3457 = vmatpush.bf16.msra.mxu0 %v3367
    %3458 = vmatpush.bf16.msra.mxu0 %v3359
    %3459 = vmatpush.bf16.msra.mxu0 %v3351
    %3460 = vmatpush.bf16.msra.mxu0 %v3343
    %3461 = vmatpush.bf16.msra.mxu0 %v3335
    %3462 = vmatpush.bf16.msra.mxu0 %v3327
    %3463 = vmatmul.bf16.gmra.mxu0 %v3103
    %v3464 = vpop.f32.mrf.mxu0
    %v3465 = vadd.f32 0.0, %v3464
    %v3466 = vpop.f32.mrf.mxu0
    %v3467 = vadd.f32 0.0, %v3466
    %3468 = vmatmul.bf16.gmra.mxu0 %v3104
    %v3469 = vpop.f32.mrf.mxu0
    %v3470 = vadd.f32 0.0, %v3469
    %v3471 = vpop.f32.mrf.mxu0
    %v3472 = vadd.f32 0.0, %v3471
    %3473 = vmatmul.bf16.gmra.mxu0 %v3105
    %v3474 = vpop.f32.mrf.mxu0
    %v3475 = vadd.f32 0.0, %v3474
    %v3476 = vpop.f32.mrf.mxu0
    %v3477 = vadd.f32 0.0, %v3476
    %3478 = vmatmul.bf16.gmra.mxu0 %v3106
    %v3479 = vpop.f32.mrf.mxu0
    %v3480 = vadd.f32 0.0, %v3479
    %v3481 = vpop.f32.mrf.mxu0
    %v3482 = vadd.f32 0.0, %v3481
    %3483 = vmatmul.bf16.gmra.mxu0 %v3107
    %v3484 = vpop.f32.mrf.mxu0
    %v3485 = vadd.f32 0.0, %v3484
    %v3486 = vpop.f32.mrf.mxu0
    %v3487 = vadd.f32 0.0, %v3486
    %3488 = vmatmul.bf16.gmra.mxu0 %v3108
    %v3489 = vpop.f32.mrf.mxu0
    %v3490 = vadd.f32 0.0, %v3489
    %v3491 = vpop.f32.mrf.mxu0
    %v3492 = vadd.f32 0.0, %v3491
    %3493 = vmatmul.bf16.gmra.mxu0 %v3109
    %v3494 = vpop.f32.mrf.mxu0
    %v3495 = vadd.f32 0.0, %v3494
    %v3496 = vpop.f32.mrf.mxu0
    %v3497 = vadd.f32 0.0, %v3496
    %3498 = vmatmul.bf16.gmra.mxu0 %v3110
    %v3499 = vpop.f32.mrf.mxu0
    %v3500 = vadd.f32 0.0, %v3499
    %v3501 = vpop.f32.mrf.mxu0
    %v3502 = vadd.f32 0.0, %v3501
    %3503 = vmatmul.bf16.gmra.mxu0 %v3111
    %v3504 = vpop.f32.mrf.mxu0
    %v3505 = vadd.f32 0.0, %v3504
    %v3506 = vpop.f32.mrf.mxu0
    %v3507 = vadd.f32 0.0, %v3506
    %3508 = vmatmul.bf16.gmra.mxu0 %v3112
    %v3509 = vpop.f32.mrf.mxu0
    %v3510 = vadd.f32 0.0, %v3509
    %v3511 = vpop.f32.mrf.mxu0
    %v3512 = vadd.f32 0.0, %v3511
    %3513 = vmatmul.bf16.gmra.mxu0 %v3113
    %v3514 = vpop.f32.mrf.mxu0
    %v3515 = vadd.f32 0.0, %v3514
    %v3516 = vpop.f32.mrf.mxu0
    %v3517 = vadd.f32 0.0, %v3516
    %3518 = vmatmul.bf16.gmra.mxu0 %v3114
    %v3519 = vpop.f32.mrf.mxu0
    %v3520 = vadd.f32 0.0, %v3519
    %v3521 = vpop.f32.mrf.mxu0
    %v3522 = vadd.f32 0.0, %v3521
    %3523 = vmatmul.bf16.gmra.mxu0 %v3115
    %v3524 = vpop.f32.mrf.mxu0
    %v3525 = vadd.f32 0.0, %v3524
    %v3526 = vpop.f32.mrf.mxu0
    %v3527 = vadd.f32 0.0, %v3526
    %3528 = vmatmul.bf16.gmra.mxu0 %v3116
    %v3529 = vpop.f32.mrf.mxu0
    %v3530 = vadd.f32 0.0, %v3529
    %v3531 = vpop.f32.mrf.mxu0
    %v3532 = vadd.f32 0.0, %v3531
    %3533 = vmatmul.bf16.gmra.mxu0 %v3117
    %v3534 = vpop.f32.mrf.mxu0
    %v3535 = vadd.f32 0.0, %v3534
    %v3536 = vpop.f32.mrf.mxu0
    %v3537 = vadd.f32 0.0, %v3536
    %3538 = vmatmul.bf16.gmra.mxu0 %v3118
    %v3539 = vpop.f32.mrf.mxu0
    %v3540 = vadd.f32 0.0, %v3539
    %v3541 = vpop.f32.mrf.mxu0
    %v3542 = vadd.f32 0.0, %v3541
    %3543 = vdwg.mxu0
    %3544 = vmatpush.bf16.msra.mxu0 %v3384
    %3545 = vmatpush.bf16.msra.mxu0 %v3376
    %3546 = vmatpush.bf16.msra.mxu0 %v3368
    %3547 = vmatpush.bf16.msra.mxu0 %v3360
    %3548 = vmatpush.bf16.msra.mxu0 %v3352
    %3549 = vmatpush.bf16.msra.mxu0 %v3344
    %3550 = vmatpush.bf16.msra.mxu0 %v3336
    %3551 = vmatpush.bf16.msra.mxu0 %v3328
    %3552 = vmatmul.bf16.gmra.mxu0 %v3103
    %v3553 = vpop.f32.mrf.mxu0
    %v3554 = vadd.f32 0.0, %v3553
    %v3555 = vpop.f32.mrf.mxu0
    %v3556 = vadd.f32 0.0, %v3555
    %3557 = vmatmul.bf16.gmra.mxu0 %v3104
    %v3558 = vpop.f32.mrf.mxu0
    %v3559 = vadd.f32 0.0, %v3558
    %v3560 = vpop.f32.mrf.mxu0
    %v3561 = vadd.f32 0.0, %v3560
    %3562 = vmatmul.bf16.gmra.mxu0 %v3105
    %v3563 = vpop.f32.mrf.mxu0
    %v3564 = vadd.f32 0.0, %v3563
    %v3565 = vpop.f32.mrf.mxu0
    %v3566 = vadd.f32 0.0, %v3565
    %3567 = vmatmul.bf16.gmra.mxu0 %v3106
    %v3568 = vpop.f32.mrf.mxu0
    %v3569 = vadd.f32 0.0, %v3568
    %v3570 = vpop.f32.mrf.mxu0
    %v3571 = vadd.f32 0.0, %v3570
    %3572 = vmatmul.bf16.gmra.mxu0 %v3107
    %v3573 = vpop.f32.mrf.mxu0
    %v3574 = vadd.f32 0.0, %v3573
    %v3575 = vpop.f32.mrf.mxu0
    %v3576 = vadd.f32 0.0, %v3575
    %3577 = vmatmul.bf16.gmra.mxu0 %v3108
    %v3578 = vpop.f32.mrf.mxu0
    %v3579 = vadd.f32 0.0, %v3578
    %v3580 = vpop.f32.mrf.mxu0
    %v3581 = vadd.f32 0.0, %v3580
    %3582 = vmatmul.bf16.gmra.mxu0 %v3109
    %v3583 = vpop.f32.mrf.mxu0
    %v3584 = vadd.f32 0.0, %v3583
    %v3585 = vpop.f32.mrf.mxu0
    %v3586 = vadd.f32 0.0, %v3585
    %3587 = vmatmul.bf16.gmra.mxu0 %v3110
    %v3588 = vpop.f32.mrf.mxu0
    %v3589 = vadd.f32 0.0, %v3588
    %v3590 = vpop.f32.mrf.mxu0
    %v3591 = vadd.f32 0.0, %v3590
    %3592 = vmatmul.bf16.gmra.mxu0 %v3111
    %v3593 = vpop.f32.mrf.mxu0
    %v3594 = vadd.f32 0.0, %v3593
    %v3595 = vpop.f32.mrf.mxu0
    %v3596 = vadd.f32 0.0, %v3595
    %3597 = vmatmul.bf16.gmra.mxu0 %v3112
    %v3598 = vpop.f32.mrf.mxu0
    %v3599 = vadd.f32 0.0, %v3598
    %v3600 = vpop.f32.mrf.mxu0
    %v3601 = vadd.f32 0.0, %v3600
    %3602 = vmatmul.bf16.gmra.mxu0 %v3113
    %v3603 = vpop.f32.mrf.mxu0
    %v3604 = vadd.f32 0.0, %v3603
    %v3605 = vpop.f32.mrf.mxu0
    %v3606 = vadd.f32 0.0, %v3605
    %3607 = vmatmul.bf16.gmra.mxu0 %v3114
    %v3608 = vpop.f32.mrf.mxu0
    %v3609 = vadd.f32 0.0, %v3608
    %v3610 = vpop.f32.mrf.mxu0
    %v3611 = vadd.f32 0.0, %v3610
    %3612 = vmatmul.bf16.gmra.mxu0 %v3115
    %v3613 = vpop.f32.mrf.mxu0
    %v3614 = vadd.f32 0.0, %v3613
    %v3615 = vpop.f32.mrf.mxu0
    %v3616 = vadd.f32 0.0, %v3615
    %3617 = vmatmul.bf16.gmra.mxu0 %v3116
    %v3618 = vpop.f32.mrf.mxu0
    %v3619 = vadd.f32 0.0, %v3618
    %v3620 = vpop.f32.mrf.mxu0
    %v3621 = vadd.f32 0.0, %v3620
    %3622 = vmatmul.bf16.gmra.mxu0 %v3117
    %v3623 = vpop.f32.mrf.mxu0
    %v3624 = vadd.f32 0.0, %v3623
    %v3625 = vpop.f32.mrf.mxu0
    %v3626 = vadd.f32 0.0, %v3625
    %3627 = vmatmul.bf16.gmra.mxu0 %v3118
    %v3628 = vpop.f32.mrf.mxu0
    %v3629 = vadd.f32 0.0, %v3628
    %v3630 = vpop.f32.mrf.mxu0
    %v3631 = vadd.f32 0.0, %v3630
    %3632 = vdwg.mxu0
    %3633 = vmatpush.bf16.msra.mxu0 %v3385
    %3634 = vmatpush.bf16.msra.mxu0 %v3377
    %3635 = vmatpush.bf16.msra.mxu0 %v3369
    %3636 = vmatpush.bf16.msra.mxu0 %v3361
    %3637 = vmatpush.bf16.msra.mxu0 %v3353
    %3638 = vmatpush.bf16.msra.mxu0 %v3345
    %3639 = vmatpush.bf16.msra.mxu0 %v3337
    %3640 = vmatpush.bf16.msra.mxu0 %v3329
    %3641 = vmatmul.bf16.gmra.mxu0 %v3103
    %v3642 = vpop.f32.mrf.mxu0
    %v3643 = vadd.f32 0.0, %v3642
    %v3644 = vpop.f32.mrf.mxu0
    %v3645 = vadd.f32 0.0, %v3644
    %3646 = vmatmul.bf16.gmra.mxu0 %v3104
    %v3647 = vpop.f32.mrf.mxu0
    %v3648 = vadd.f32 0.0, %v3647
    %v3649 = vpop.f32.mrf.mxu0
    %v3650 = vadd.f32 0.0, %v3649
    %3651 = vmatmul.bf16.gmra.mxu0 %v3105
    %v3652 = vpop.f32.mrf.mxu0
    %v3653 = vadd.f32 0.0, %v3652
    %v3654 = vpop.f32.mrf.mxu0
    %v3655 = vadd.f32 0.0, %v3654
    %3656 = vmatmul.bf16.gmra.mxu0 %v3106
    %v3657 = vpop.f32.mrf.mxu0
    %v3658 = vadd.f32 0.0, %v3657
    %v3659 = vpop.f32.mrf.mxu0
    %v3660 = vadd.f32 0.0, %v3659
    %3661 = vmatmul.bf16.gmra.mxu0 %v3107
    %v3662 = vpop.f32.mrf.mxu0
    %v3663 = vadd.f32 0.0, %v3662
    %v3664 = vpop.f32.mrf.mxu0
    %v3665 = vadd.f32 0.0, %v3664
    %3666 = vmatmul.bf16.gmra.mxu0 %v3108
    %v3667 = vpop.f32.mrf.mxu0
    %v3668 = vadd.f32 0.0, %v3667
    %v3669 = vpop.f32.mrf.mxu0
    %v3670 = vadd.f32 0.0, %v3669
    %3671 = vmatmul.bf16.gmra.mxu0 %v3109
    %v3672 = vpop.f32.mrf.mxu0
    %v3673 = vadd.f32 0.0, %v3672
    %v3674 = vpop.f32.mrf.mxu0
    %v3675 = vadd.f32 0.0, %v3674
    %3676 = vmatmul.bf16.gmra.mxu0 %v3110
    %v3677 = vpop.f32.mrf.mxu0
    %v3678 = vadd.f32 0.0, %v3677
    %v3679 = vpop.f32.mrf.mxu0
    %v3680 = vadd.f32 0.0, %v3679
    %3681 = vmatmul.bf16.gmra.mxu0 %v3111
    %v3682 = vpop.f32.mrf.mxu0
    %v3683 = vadd.f32 0.0, %v3682
    %v3684 = vpop.f32.mrf.mxu0
    %v3685 = vadd.f32 0.0, %v3684
    %3686 = vmatmul.bf16.gmra.mxu0 %v3112
    %v3687 = vpop.f32.mrf.mxu0
    %v3688 = vadd.f32 0.0, %v3687
    %v3689 = vpop.f32.mrf.mxu0
    %v3690 = vadd.f32 0.0, %v3689
    %3691 = vmatmul.bf16.gmra.mxu0 %v3113
    %v3692 = vpop.f32.mrf.mxu0
    %v3693 = vadd.f32 0.0, %v3692
    %v3694 = vpop.f32.mrf.mxu0
    %v3695 = vadd.f32 0.0, %v3694
    %3696 = vmatmul.bf16.gmra.mxu0 %v3114
    %v3697 = vpop.f32.mrf.mxu0
    %v3698 = vadd.f32 0.0, %v3697
    %v3699 = vpop.f32.mrf.mxu0
    %v3700 = vadd.f32 0.0, %v3699
    %3701 = vmatmul.bf16.gmra.mxu0 %v3115
    %v3702 = vpop.f32.mrf.mxu0
    %v3703 = vadd.f32 0.0, %v3702
    %v3704 = vpop.f32.mrf.mxu0
    %v3705 = vadd.f32 0.0, %v3704
    %3706 = vmatmul.bf16.gmra.mxu0 %v3116
    %v3707 = vpop.f32.mrf.mxu0
    %v3708 = vadd.f32 0.0, %v3707
    %v3709 = vpop.f32.mrf.mxu0
    %v3710 = vadd.f32 0.0, %v3709
    %3711 = vmatmul.bf16.gmra.mxu0 %v3117
    %v3712 = vpop.f32.mrf.mxu0
    %v3713 = vadd.f32 0.0, %v3712
    %v3714 = vpop.f32.mrf.mxu0
    %v3715 = vadd.f32 0.0, %v3714
    %3716 = vmatmul.bf16.gmra.mxu0 %v3118
    %v3717 = vpop.f32.mrf.mxu0
    %v3718 = vadd.f32 0.0, %v3717
    %v3719 = vpop.f32.mrf.mxu0
    %v3720 = vadd.f32 0.0, %v3719
    %3721 = vdwg.mxu0
    %3722 = vmatpush.bf16.msra.mxu0 %v3386
    %3723 = vmatpush.bf16.msra.mxu0 %v3378
    %3724 = vmatpush.bf16.msra.mxu0 %v3370
    %3725 = vmatpush.bf16.msra.mxu0 %v3362
    %3726 = vmatpush.bf16.msra.mxu0 %v3354
    %3727 = vmatpush.bf16.msra.mxu0 %v3346
    %3728 = vmatpush.bf16.msra.mxu0 %v3338
    %3729 = vmatpush.bf16.msra.mxu0 %v3330
    %3730 = vmatmul.bf16.gmra.mxu0 %v3103
    %v3731 = vpop.f32.mrf.mxu0
    %v3732 = vadd.f32 0.0, %v3731
    %v3733 = vpop.f32.mrf.mxu0
    %v3734 = vadd.f32 0.0, %v3733
    %3735 = vmatmul.bf16.gmra.mxu0 %v3104
    %v3736 = vpop.f32.mrf.mxu0
    %v3737 = vadd.f32 0.0, %v3736
    %v3738 = vpop.f32.mrf.mxu0
    %v3739 = vadd.f32 0.0, %v3738
    %3740 = vmatmul.bf16.gmra.mxu0 %v3105
    %v3741 = vpop.f32.mrf.mxu0
    %v3742 = vadd.f32 0.0, %v3741
    %v3743 = vpop.f32.mrf.mxu0
    %v3744 = vadd.f32 0.0, %v3743
    %3745 = vmatmul.bf16.gmra.mxu0 %v3106
    %v3746 = vpop.f32.mrf.mxu0
    %v3747 = vadd.f32 0.0, %v3746
    %v3748 = vpop.f32.mrf.mxu0
    %v3749 = vadd.f32 0.0, %v3748
    %3750 = vmatmul.bf16.gmra.mxu0 %v3107
    %v3751 = vpop.f32.mrf.mxu0
    %v3752 = vadd.f32 0.0, %v3751
    %v3753 = vpop.f32.mrf.mxu0
    %v3754 = vadd.f32 0.0, %v3753
    %3755 = vmatmul.bf16.gmra.mxu0 %v3108
    %v3756 = vpop.f32.mrf.mxu0
    %v3757 = vadd.f32 0.0, %v3756
    %v3758 = vpop.f32.mrf.mxu0
    %v3759 = vadd.f32 0.0, %v3758
    %3760 = vmatmul.bf16.gmra.mxu0 %v3109
    %v3761 = vpop.f32.mrf.mxu0
    %v3762 = vadd.f32 0.0, %v3761
    %v3763 = vpop.f32.mrf.mxu0
    %v3764 = vadd.f32 0.0, %v3763
    %3765 = vmatmul.bf16.gmra.mxu0 %v3110
    %v3766 = vpop.f32.mrf.mxu0
    %v3767 = vadd.f32 0.0, %v3766
    %v3768 = vpop.f32.mrf.mxu0
    %v3769 = vadd.f32 0.0, %v3768
    %3770 = vmatmul.bf16.gmra.mxu0 %v3111
    %v3771 = vpop.f32.mrf.mxu0
    %v3772 = vadd.f32 0.0, %v3771
    %v3773 = vpop.f32.mrf.mxu0
    %v3774 = vadd.f32 0.0, %v3773
    %3775 = vmatmul.bf16.gmra.mxu0 %v3112
    %v3776 = vpop.f32.mrf.mxu0
    %v3777 = vadd.f32 0.0, %v3776
    %v3778 = vpop.f32.mrf.mxu0
    %v3779 = vadd.f32 0.0, %v3778
    %3780 = vmatmul.bf16.gmra.mxu0 %v3113
    %v3781 = vpop.f32.mrf.mxu0
    %v3782 = vadd.f32 0.0, %v3781
    %v3783 = vpop.f32.mrf.mxu0
    %v3784 = vadd.f32 0.0, %v3783
    %3785 = vmatmul.bf16.gmra.mxu0 %v3114
    %v3786 = vpop.f32.mrf.mxu0
    %v3787 = vadd.f32 0.0, %v3786
    %v3788 = vpop.f32.mrf.mxu0
    %v3789 = vadd.f32 0.0, %v3788
    %3790 = vmatmul.bf16.gmra.mxu0 %v3115
    %v3791 = vpop.f32.mrf.mxu0
    %v3792 = vadd.f32 0.0, %v3791
    %v3793 = vpop.f32.mrf.mxu0
    %v3794 = vadd.f32 0.0, %v3793
    %3795 = vmatmul.bf16.gmra.mxu0 %v3116
    %v3796 = vpop.f32.mrf.mxu0
    %v3797 = vadd.f32 0.0, %v3796
    %v3798 = vpop.f32.mrf.mxu0
    %v3799 = vadd.f32 0.0, %v3798
    %3800 = vmatmul.bf16.gmra.mxu0 %v3117
    %v3801 = vpop.f32.mrf.mxu0
    %v3802 = vadd.f32 0.0, %v3801
    %v3803 = vpop.f32.mrf.mxu0
    %v3804 = vadd.f32 0.0, %v3803
    %3805 = vmatmul.bf16.gmra.mxu0 %v3118
    %v3806 = vpop.f32.mrf.mxu0
    %v3807 = vadd.f32 0.0, %v3806
    %v3808 = vpop.f32.mrf.mxu0
    %v3809 = vadd.f32 0.0, %v3808
    %3810 = vdwg.mxu0
    %3811 = vmatpush.bf16.msra.mxu0 %v3387
    %3812 = vmatpush.bf16.msra.mxu0 %v3379
    %3813 = vmatpush.bf16.msra.mxu0 %v3371
    %3814 = vmatpush.bf16.msra.mxu0 %v3363
    %3815 = vmatpush.bf16.msra.mxu0 %v3355
    %3816 = vmatpush.bf16.msra.mxu0 %v3347
    %3817 = vmatpush.bf16.msra.mxu0 %v3339
    %3818 = vmatpush.bf16.msra.mxu0 %v3331
    %3819 = vmatmul.bf16.gmra.mxu0 %v3103
    %v3820 = vpop.f32.mrf.mxu0
    %v3821 = vadd.f32 0.0, %v3820
    %v3822 = vpop.f32.mrf.mxu0
    %v3823 = vadd.f32 0.0, %v3822
    %3824 = vmatmul.bf16.gmra.mxu0 %v3104
    %v3825 = vpop.f32.mrf.mxu0
    %v3826 = vadd.f32 0.0, %v3825
    %v3827 = vpop.f32.mrf.mxu0
    %v3828 = vadd.f32 0.0, %v3827
    %3829 = vmatmul.bf16.gmra.mxu0 %v3105
    %v3830 = vpop.f32.mrf.mxu0
    %v3831 = vadd.f32 0.0, %v3830
    %v3832 = vpop.f32.mrf.mxu0
    %v3833 = vadd.f32 0.0, %v3832
    %3834 = vmatmul.bf16.gmra.mxu0 %v3106
    %v3835 = vpop.f32.mrf.mxu0
    %v3836 = vadd.f32 0.0, %v3835
    %v3837 = vpop.f32.mrf.mxu0
    %v3838 = vadd.f32 0.0, %v3837
    %3839 = vmatmul.bf16.gmra.mxu0 %v3107
    %v3840 = vpop.f32.mrf.mxu0
    %v3841 = vadd.f32 0.0, %v3840
    %v3842 = vpop.f32.mrf.mxu0
    %v3843 = vadd.f32 0.0, %v3842
    %3844 = vmatmul.bf16.gmra.mxu0 %v3108
    %v3845 = vpop.f32.mrf.mxu0
    %v3846 = vadd.f32 0.0, %v3845
    %v3847 = vpop.f32.mrf.mxu0
    %v3848 = vadd.f32 0.0, %v3847
    %3849 = vmatmul.bf16.gmra.mxu0 %v3109
    %v3850 = vpop.f32.mrf.mxu0
    %v3851 = vadd.f32 0.0, %v3850
    %v3852 = vpop.f32.mrf.mxu0
    %v3853 = vadd.f32 0.0, %v3852
    %3854 = vmatmul.bf16.gmra.mxu0 %v3110
    %v3855 = vpop.f32.mrf.mxu0
    %v3856 = vadd.f32 0.0, %v3855
    %v3857 = vpop.f32.mrf.mxu0
    %v3858 = vadd.f32 0.0, %v3857
    %3859 = vmatmul.bf16.gmra.mxu0 %v3111
    %v3860 = vpop.f32.mrf.mxu0
    %v3861 = vadd.f32 0.0, %v3860
    %v3862 = vpop.f32.mrf.mxu0
    %v3863 = vadd.f32 0.0, %v3862
    %3864 = vmatmul.bf16.gmra.mxu0 %v3112
    %v3865 = vpop.f32.mrf.mxu0
    %v3866 = vadd.f32 0.0, %v3865
    %v3867 = vpop.f32.mrf.mxu0
    %v3868 = vadd.f32 0.0, %v3867
    %3869 = vmatmul.bf16.gmra.mxu0 %v3113
    %v3870 = vpop.f32.mrf.mxu0
    %v3871 = vadd.f32 0.0, %v3870
    %v3872 = vpop.f32.mrf.mxu0
    %v3873 = vadd.f32 0.0, %v3872
    %3874 = vmatmul.bf16.gmra.mxu0 %v3114
    %v3875 = vpop.f32.mrf.mxu0
    %v3876 = vadd.f32 0.0, %v3875
    %v3877 = vpop.f32.mrf.mxu0
    %v3878 = vadd.f32 0.0, %v3877
    %3879 = vmatmul.bf16.gmra.mxu0 %v3115
    %v3880 = vpop.f32.mrf.mxu0
    %v3881 = vadd.f32 0.0, %v3880
    %v3882 = vpop.f32.mrf.mxu0
    %v3883 = vadd.f32 0.0, %v3882
    %3884 = vmatmul.bf16.gmra.mxu0 %v3116
    %v3885 = vpop.f32.mrf.mxu0
    %v3886 = vadd.f32 0.0, %v3885
    %v3887 = vpop.f32.mrf.mxu0
    %v3888 = vadd.f32 0.0, %v3887
    %3889 = vmatmul.bf16.gmra.mxu0 %v3117
    %v3890 = vpop.f32.mrf.mxu0
    %v3891 = vadd.f32 0.0, %v3890
    %v3892 = vpop.f32.mrf.mxu0
    %v3893 = vadd.f32 0.0, %v3892
    %3894 = vmatmul.bf16.gmra.mxu0 %v3118
    %v3895 = vpop.f32.mrf.mxu0
    %v3896 = vadd.f32 0.0, %v3895
    %v3897 = vpop.f32.mrf.mxu0
    %v3898 = vadd.f32 0.0, %v3897
    %3899 = vdwg.mxu0
    %3900 = vmatpush.bf16.msra.mxu0 %v3388
    %3901 = vmatpush.bf16.msra.mxu0 %v3380
    %3902 = vmatpush.bf16.msra.mxu0 %v3372
    %3903 = vmatpush.bf16.msra.mxu0 %v3364
    %3904 = vmatpush.bf16.msra.mxu0 %v3356
    %3905 = vmatpush.bf16.msra.mxu0 %v3348
    %3906 = vmatpush.bf16.msra.mxu0 %v3340
    %3907 = vmatpush.bf16.msra.mxu0 %v3332
    %3908 = vmatmul.bf16.gmra.mxu0 %v3103
    %v3909 = vpop.f32.mrf.mxu0
    %v3910 = vadd.f32 0.0, %v3909
    %v3911 = vpop.f32.mrf.mxu0
    %v3912 = vadd.f32 0.0, %v3911
    %3913 = vmatmul.bf16.gmra.mxu0 %v3104
    %v3914 = vpop.f32.mrf.mxu0
    %v3915 = vadd.f32 0.0, %v3914
    %v3916 = vpop.f32.mrf.mxu0
    %v3917 = vadd.f32 0.0, %v3916
    %3918 = vmatmul.bf16.gmra.mxu0 %v3105
    %v3919 = vpop.f32.mrf.mxu0
    %v3920 = vadd.f32 0.0, %v3919
    %v3921 = vpop.f32.mrf.mxu0
    %v3922 = vadd.f32 0.0, %v3921
    %3923 = vmatmul.bf16.gmra.mxu0 %v3106
    %v3924 = vpop.f32.mrf.mxu0
    %v3925 = vadd.f32 0.0, %v3924
    %v3926 = vpop.f32.mrf.mxu0
    %v3927 = vadd.f32 0.0, %v3926
    %3928 = vmatmul.bf16.gmra.mxu0 %v3107
    %v3929 = vpop.f32.mrf.mxu0
    %v3930 = vadd.f32 0.0, %v3929
    %v3931 = vpop.f32.mrf.mxu0
    %v3932 = vadd.f32 0.0, %v3931
    %3933 = vmatmul.bf16.gmra.mxu0 %v3108
    %v3934 = vpop.f32.mrf.mxu0
    %v3935 = vadd.f32 0.0, %v3934
    %v3936 = vpop.f32.mrf.mxu0
    %v3937 = vadd.f32 0.0, %v3936
    %3938 = vmatmul.bf16.gmra.mxu0 %v3109
    %v3939 = vpop.f32.mrf.mxu0
    %v3940 = vadd.f32 0.0, %v3939
    %v3941 = vpop.f32.mrf.mxu0
    %v3942 = vadd.f32 0.0, %v3941
    %3943 = vmatmul.bf16.gmra.mxu0 %v3110
    %v3944 = vpop.f32.mrf.mxu0
    %v3945 = vadd.f32 0.0, %v3944
    %v3946 = vpop.f32.mrf.mxu0
    %v3947 = vadd.f32 0.0, %v3946
    %3948 = vmatmul.bf16.gmra.mxu0 %v3111
    %v3949 = vpop.f32.mrf.mxu0
    %v3950 = vadd.f32 0.0, %v3949
    %v3951 = vpop.f32.mrf.mxu0
    %v3952 = vadd.f32 0.0, %v3951
    %3953 = vmatmul.bf16.gmra.mxu0 %v3112
    %v3954 = vpop.f32.mrf.mxu0
    %v3955 = vadd.f32 0.0, %v3954
    %v3956 = vpop.f32.mrf.mxu0
    %v3957 = vadd.f32 0.0, %v3956
    %3958 = vmatmul.bf16.gmra.mxu0 %v3113
    %v3959 = vpop.f32.mrf.mxu0
    %v3960 = vadd.f32 0.0, %v3959
    %v3961 = vpop.f32.mrf.mxu0
    %v3962 = vadd.f32 0.0, %v3961
    %3963 = vmatmul.bf16.gmra.mxu0 %v3114
    %v3964 = vpop.f32.mrf.mxu0
    %v3965 = vadd.f32 0.0, %v3964
    %v3966 = vpop.f32.mrf.mxu0
    %v3967 = vadd.f32 0.0, %v3966
    %3968 = vmatmul.bf16.gmra.mxu0 %v3115
    %v3969 = vpop.f32.mrf.mxu0
    %v3970 = vadd.f32 0.0, %v3969
    %v3971 = vpop.f32.mrf.mxu0
    %v3972 = vadd.f32 0.0, %v3971
    %3973 = vmatmul.bf16.gmra.mxu0 %v3116
    %v3974 = vpop.f32.mrf.mxu0
    %v3975 = vadd.f32 0.0, %v3974
    %v3976 = vpop.f32.mrf.mxu0
    %v3977 = vadd.f32 0.0, %v3976
    %3978 = vmatmul.bf16.gmra.mxu0 %v3117
    %v3979 = vpop.f32.mrf.mxu0
    %v3980 = vadd.f32 0.0, %v3979
    %v3981 = vpop.f32.mrf.mxu0
    %v3982 = vadd.f32 0.0, %v3981
    %3983 = vmatmul.bf16.gmra.mxu0 %v3118
    %v3984 = vpop.f32.mrf.mxu0
    %v3985 = vadd.f32 0.0, %v3984
    %v3986 = vpop.f32.mrf.mxu0
    %v3987 = vadd.f32 0.0, %v3986
    %3988 = vdwg.mxu0
    %3989 = vmatpush.bf16.msra.mxu0 %v3389
    %3990 = vmatpush.bf16.msra.mxu0 %v3381
    %3991 = vmatpush.bf16.msra.mxu0 %v3373
    %3992 = vmatpush.bf16.msra.mxu0 %v3365
    %3993 = vmatpush.bf16.msra.mxu0 %v3357
    %3994 = vmatpush.bf16.msra.mxu0 %v3349
    %3995 = vmatpush.bf16.msra.mxu0 %v3341
    %3996 = vmatpush.bf16.msra.mxu0 %v3333
    %3997 = vmatmul.bf16.gmra.mxu0 %v3103
    %v3998 = vpop.f32.mrf.mxu0
    %v3999 = vadd.f32 0.0, %v3998
    %v4000 = vpop.f32.mrf.mxu0
    %v4001 = vadd.f32 0.0, %v4000
    %4002 = vmatmul.bf16.gmra.mxu0 %v3104
    %v4003 = vpop.f32.mrf.mxu0
    %v4004 = vadd.f32 0.0, %v4003
    %v4005 = vpop.f32.mrf.mxu0
    %v4006 = vadd.f32 0.0, %v4005
    %4007 = vmatmul.bf16.gmra.mxu0 %v3105
    %v4008 = vpop.f32.mrf.mxu0
    %v4009 = vadd.f32 0.0, %v4008
    %v4010 = vpop.f32.mrf.mxu0
    %v4011 = vadd.f32 0.0, %v4010
    %4012 = vmatmul.bf16.gmra.mxu0 %v3106
    %v4013 = vpop.f32.mrf.mxu0
    %v4014 = vadd.f32 0.0, %v4013
    %v4015 = vpop.f32.mrf.mxu0
    %v4016 = vadd.f32 0.0, %v4015
    %4017 = vmatmul.bf16.gmra.mxu0 %v3107
    %v4018 = vpop.f32.mrf.mxu0
    %v4019 = vadd.f32 0.0, %v4018
    %v4020 = vpop.f32.mrf.mxu0
    %v4021 = vadd.f32 0.0, %v4020
    %4022 = vmatmul.bf16.gmra.mxu0 %v3108
    %v4023 = vpop.f32.mrf.mxu0
    %v4024 = vadd.f32 0.0, %v4023
    %v4025 = vpop.f32.mrf.mxu0
    %v4026 = vadd.f32 0.0, %v4025
    %4027 = vmatmul.bf16.gmra.mxu0 %v3109
    %v4028 = vpop.f32.mrf.mxu0
    %v4029 = vadd.f32 0.0, %v4028
    %v4030 = vpop.f32.mrf.mxu0
    %v4031 = vadd.f32 0.0, %v4030
    %4032 = vmatmul.bf16.gmra.mxu0 %v3110
    %v4033 = vpop.f32.mrf.mxu0
    %v4034 = vadd.f32 0.0, %v4033
    %v4035 = vpop.f32.mrf.mxu0
    %v4036 = vadd.f32 0.0, %v4035
    %4037 = vmatmul.bf16.gmra.mxu0 %v3111
    %v4038 = vpop.f32.mrf.mxu0
    %v4039 = vadd.f32 0.0, %v4038
    %v4040 = vpop.f32.mrf.mxu0
    %v4041 = vadd.f32 0.0, %v4040
    %4042 = vmatmul.bf16.gmra.mxu0 %v3112
    %v4043 = vpop.f32.mrf.mxu0
    %v4044 = vadd.f32 0.0, %v4043
    %v4045 = vpop.f32.mrf.mxu0
    %v4046 = vadd.f32 0.0, %v4045
    %4047 = vmatmul.bf16.gmra.mxu0 %v3113
    %v4048 = vpop.f32.mrf.mxu0
    %v4049 = vadd.f32 0.0, %v4048
    %v4050 = vpop.f32.mrf.mxu0
    %v4051 = vadd.f32 0.0, %v4050
    %4052 = vmatmul.bf16.gmra.mxu0 %v3114
    %v4053 = vpop.f32.mrf.mxu0
    %v4054 = vadd.f32 0.0, %v4053
    %v4055 = vpop.f32.mrf.mxu0
    %v4056 = vadd.f32 0.0, %v4055
    %4057 = vmatmul.bf16.gmra.mxu0 %v3115
    %v4058 = vpop.f32.mrf.mxu0
    %v4059 = vadd.f32 0.0, %v4058
    %v4060 = vpop.f32.mrf.mxu0
    %v4061 = vadd.f32 0.0, %v4060
    %4062 = vmatmul.bf16.gmra.mxu0 %v3116
    %v4063 = vpop.f32.mrf.mxu0
    %v4064 = vadd.f32 0.0, %v4063
    %v4065 = vpop.f32.mrf.mxu0
    %v4066 = vadd.f32 0.0, %v4065
    %4067 = vmatmul.bf16.gmra.mxu0 %v3117
    %v4068 = vpop.f32.mrf.mxu0
    %v4069 = vadd.f32 0.0, %v4068
    %v4070 = vpop.f32.mrf.mxu0
    %v4071 = vadd.f32 0.0, %v4070
    %4072 = vmatmul.bf16.gmra.mxu0 %v3118
    %v4073 = vpop.f32.mrf.mxu0
    %v4074 = vadd.f32 0.0, %v4073
    %v4075 = vpop.f32.mrf.mxu0
    %v4076 = vadd.f32 0.0, %v4075
    %4077 = vdwg.mxu0
    %4078 = vmatpush.bf16.msra.mxu0 %v3390
    %4079 = vmatpush.bf16.msra.mxu0 %v3382
    %4080 = vmatpush.bf16.msra.mxu0 %v3374
    %4081 = vmatpush.bf16.msra.mxu0 %v3366
    %4082 = vmatpush.bf16.msra.mxu0 %v3358
    %4083 = vmatpush.bf16.msra.mxu0 %v3350
    %4084 = vmatpush.bf16.msra.mxu0 %v3342
    %4085 = vmatpush.bf16.msra.mxu0 %v3334
    %4086 = vmatmul.bf16.gmra.mxu0 %v3103
    %v4087 = vpop.f32.mrf.mxu0
    %v4088 = vadd.f32 0.0, %v4087
    %v4089 = vpop.f32.mrf.mxu0
    %v4090 = vadd.f32 0.0, %v4089
    %4091 = vmatmul.bf16.gmra.mxu0 %v3104
    %v4092 = vpop.f32.mrf.mxu0
    %v4093 = vadd.f32 0.0, %v4092
    %v4094 = vpop.f32.mrf.mxu0
    %v4095 = vadd.f32 0.0, %v4094
    %4096 = vmatmul.bf16.gmra.mxu0 %v3105
    %v4097 = vpop.f32.mrf.mxu0
    %v4098 = vadd.f32 0.0, %v4097
    %v4099 = vpop.f32.mrf.mxu0
    %v4100 = vadd.f32 0.0, %v4099
    %4101 = vmatmul.bf16.gmra.mxu0 %v3106
    %v4102 = vpop.f32.mrf.mxu0
    %v4103 = vadd.f32 0.0, %v4102
    %v4104 = vpop.f32.mrf.mxu0
    %v4105 = vadd.f32 0.0, %v4104
    %4106 = vmatmul.bf16.gmra.mxu0 %v3107
    %v4107 = vpop.f32.mrf.mxu0
    %v4108 = vadd.f32 0.0, %v4107
    %v4109 = vpop.f32.mrf.mxu0
    %v4110 = vadd.f32 0.0, %v4109
    %4111 = vmatmul.bf16.gmra.mxu0 %v3108
    %v4112 = vpop.f32.mrf.mxu0
    %v4113 = vadd.f32 0.0, %v4112
    %v4114 = vpop.f32.mrf.mxu0
    %v4115 = vadd.f32 0.0, %v4114
    %4116 = vmatmul.bf16.gmra.mxu0 %v3109
    %v4117 = vpop.f32.mrf.mxu0
    %v4118 = vadd.f32 0.0, %v4117
    %v4119 = vpop.f32.mrf.mxu0
    %v4120 = vadd.f32 0.0, %v4119
    %4121 = vmatmul.bf16.gmra.mxu0 %v3110
    %v4122 = vpop.f32.mrf.mxu0
    %v4123 = vadd.f32 0.0, %v4122
    %v4124 = vpop.f32.mrf.mxu0
    %v4125 = vadd.f32 0.0, %v4124
    %4126 = vmatmul.bf16.gmra.mxu0 %v3111
    %v4127 = vpop.f32.mrf.mxu0
    %v4128 = vadd.f32 0.0, %v4127
    %v4129 = vpop.f32.mrf.mxu0
    %v4130 = vadd.f32 0.0, %v4129
    %4131 = vmatmul.bf16.gmra.mxu0 %v3112
    %v4132 = vpop.f32.mrf.mxu0
    %v4133 = vadd.f32 0.0, %v4132
    %v4134 = vpop.f32.mrf.mxu0
    %v4135 = vadd.f32 0.0, %v4134
    %4136 = vmatmul.bf16.gmra.mxu0 %v3113
    %v4137 = vpop.f32.mrf.mxu0
    %v4138 = vadd.f32 0.0, %v4137
    %v4139 = vpop.f32.mrf.mxu0
    %v4140 = vadd.f32 0.0, %v4139
    %4141 = vmatmul.bf16.gmra.mxu0 %v3114
    %v4142 = vpop.f32.mrf.mxu0
    %v4143 = vadd.f32 0.0, %v4142
    %v4144 = vpop.f32.mrf.mxu0
    %v4145 = vadd.f32 0.0, %v4144
    %4146 = vmatmul.bf16.gmra.mxu0 %v3115
    %v4147 = vpop.f32.mrf.mxu0
    %v4148 = vadd.f32 0.0, %v4147
    %v4149 = vpop.f32.mrf.mxu0
    %v4150 = vadd.f32 0.0, %v4149
    %4151 = vmatmul.bf16.gmra.mxu0 %v3116
    %v4152 = vpop.f32.mrf.mxu0
    %v4153 = vadd.f32 0.0, %v4152
    %v4154 = vpop.f32.mrf.mxu0
    %v4155 = vadd.f32 0.0, %v4154
    %4156 = vmatmul.bf16.gmra.mxu0 %v3117
    %v4157 = vpop.f32.mrf.mxu0
    %v4158 = vadd.f32 0.0, %v4157
    %v4159 = vpop.f32.mrf.mxu0
    %v4160 = vadd.f32 0.0, %v4159
    %4161 = vmatmul.bf16.gmra.mxu0 %v3118
    %v4162 = vpop.f32.mrf.mxu0
    %v4163 = vadd.f32 0.0, %v4162
    %v4164 = vpop.f32.mrf.mxu0
    %v4165 = vadd.f32 0.0, %v4164
    %4166 = vdwg.mxu0
    %v4167 = vld [vmem:[%s6] sm:$0xf]
    %v4169 = vperm.slane %v4167, 0
    %v4170 = vperm.slane %v4167, 1
    %v4171 = vperm.slane %v4167, 2
    %v4172 = vperm.slane %v4167, 3
    %v4177 = vadd.f32 %v3821, %v4169
    %v4178 = vadd.f32 %v3910, %v4170
    %v4179 = vadd.f32 %v3999, %v4171
    %v4180 = vadd.f32 %v4088, %v4172
    %v4181 = vadd.f32 %v3823, %v4169
    %v4182 = vadd.f32 %v3912, %v4170
    %v4183 = vadd.f32 %v4001, %v4171
    %v4184 = vadd.f32 %v4090, %v4172
    %v4185 = vadd.f32 %v3826, %v4169
    %v4186 = vadd.f32 %v3915, %v4170
    %v4187 = vadd.f32 %v4004, %v4171
    %v4188 = vadd.f32 %v4093, %v4172
    %v4189 = vadd.f32 %v3828, %v4169
    %v4190 = vadd.f32 %v3917, %v4170
    %v4191 = vadd.f32 %v4006, %v4171
    %v4192 = vadd.f32 %v4095, %v4172
    %v4193 = vadd.f32 %v3831, %v4169
    %v4194 = vadd.f32 %v3920, %v4170
    %v4195 = vadd.f32 %v4009, %v4171
    %v4196 = vadd.f32 %v4098, %v4172
    %v4197 = vadd.f32 %v3833, %v4169
    %v4198 = vadd.f32 %v3922, %v4170
    %v4199 = vadd.f32 %v4011, %v4171
    %v4200 = vadd.f32 %v4100, %v4172
    %v4201 = vadd.f32 %v3836, %v4169
    %v4202 = vadd.f32 %v3925, %v4170
    %v4203 = vadd.f32 %v4014, %v4171
    %v4204 = vadd.f32 %v4103, %v4172
    %v4205 = vadd.f32 %v3838, %v4169
    %v4206 = vadd.f32 %v3927, %v4170
    %v4207 = vadd.f32 %v4016, %v4171
    %v4208 = vadd.f32 %v4105, %v4172
    %v4209 = vadd.f32 %v3841, %v4169
    %v4210 = vadd.f32 %v3930, %v4170
    %v4211 = vadd.f32 %v4019, %v4171
    %v4212 = vadd.f32 %v4108, %v4172
    %v4213 = vadd.f32 %v3843, %v4169
    %v4214 = vadd.f32 %v3932, %v4170
    %v4215 = vadd.f32 %v4021, %v4171
    %v4216 = vadd.f32 %v4110, %v4172
    %v4217 = vadd.f32 %v3846, %v4169
    %v4218 = vadd.f32 %v3935, %v4170
    %v4219 = vadd.f32 %v4024, %v4171
    %v4220 = vadd.f32 %v4113, %v4172
    %v4221 = vadd.f32 %v3848, %v4169
    %v4222 = vadd.f32 %v3937, %v4170
    %v4223 = vadd.f32 %v4026, %v4171
    %v4224 = vadd.f32 %v4115, %v4172
    %v4225 = vadd.f32 %v3851, %v4169
    %v4226 = vadd.f32 %v3940, %v4170
    %v4227 = vadd.f32 %v4029, %v4171
    %v4228 = vadd.f32 %v4118, %v4172
    %v4229 = vadd.f32 %v3853, %v4169
    %v4230 = vadd.f32 %v3942, %v4170
    %v4231 = vadd.f32 %v4031, %v4171
    %v4232 = vadd.f32 %v4120, %v4172
    %v4233 = vadd.f32 %v3856, %v4169
    %v4234 = vadd.f32 %v3945, %v4170
    %v4235 = vadd.f32 %v4034, %v4171
    %v4236 = vadd.f32 %v4123, %v4172
    %v4237 = vadd.f32 %v3858, %v4169
    %v4238 = vadd.f32 %v3947, %v4170
    %v4239 = vadd.f32 %v4036, %v4171
    %v4240 = vadd.f32 %v4125, %v4172
    %v4241 = vadd.f32 %v3861, %v4169
    %v4242 = vadd.f32 %v3950, %v4170
    %v4243 = vadd.f32 %v4039, %v4171
    %v4244 = vadd.f32 %v4128, %v4172
    %v4245 = vadd.f32 %v3863, %v4169
    %v4246 = vadd.f32 %v3952, %v4170
    %v4247 = vadd.f32 %v4041, %v4171
    %v4248 = vadd.f32 %v4130, %v4172
    %v4249 = vadd.f32 %v3866, %v4169
    %v4250 = vadd.f32 %v3955, %v4170
    %v4251 = vadd.f32 %v4044, %v4171
    %v4252 = vadd.f32 %v4133, %v4172
    %v4253 = vadd.f32 %v3868, %v4169
    %v4254 = vadd.f32 %v3957, %v4170
    %v4255 = vadd.f32 %v4046, %v4171
    %v4256 = vadd.f32 %v4135, %v4172
    %v4257 = vadd.f32 %v3871, %v4169
    %v4258 = vadd.f32 %v3960, %v4170
    %v4259 = vadd.f32 %v4049, %v4171
    %v4260 = vadd.f32 %v4138, %v4172
    %v4261 = vadd.f32 %v3873, %v4169
    %v4262 = vadd.f32 %v3962, %v4170
    %v4263 = vadd.f32 %v4051, %v4171
    %v4264 = vadd.f32 %v4140, %v4172
    %v4265 = vadd.f32 %v3876, %v4169
    %v4266 = vadd.f32 %v3965, %v4170
    %v4267 = vadd.f32 %v4054, %v4171
    %v4268 = vadd.f32 %v4143, %v4172
    %v4269 = vadd.f32 %v3878, %v4169
    %v4270 = vadd.f32 %v3967, %v4170
    %v4271 = vadd.f32 %v4056, %v4171
    %v4272 = vadd.f32 %v4145, %v4172
    %v4273 = vadd.f32 %v3881, %v4169
    %v4274 = vadd.f32 %v3970, %v4170
    %v4275 = vadd.f32 %v4059, %v4171
    %v4276 = vadd.f32 %v4148, %v4172
    %v4277 = vadd.f32 %v3883, %v4169
    %v4278 = vadd.f32 %v3972, %v4170
    %v4279 = vadd.f32 %v4061, %v4171
    %v4280 = vadd.f32 %v4150, %v4172
    %v4281 = vadd.f32 %v3886, %v4169
    %v4282 = vadd.f32 %v3975, %v4170
    %v4283 = vadd.f32 %v4064, %v4171
    %v4284 = vadd.f32 %v4153, %v4172
    %v4285 = vadd.f32 %v3888, %v4169
    %v4286 = vadd.f32 %v3977, %v4170
    %v4287 = vadd.f32 %v4066, %v4171
    %v4288 = vadd.f32 %v4155, %v4172
    %v4289 = vadd.f32 %v3891, %v4169
    %v4290 = vadd.f32 %v3980, %v4170
    %v4291 = vadd.f32 %v4069, %v4171
    %v4292 = vadd.f32 %v4158, %v4172
    %v4293 = vadd.f32 %v3893, %v4169
    %v4294 = vadd.f32 %v3982, %v4170
    %v4295 = vadd.f32 %v4071, %v4171
    %v4296 = vadd.f32 %v4160, %v4172
    %v4297 = vadd.f32 %v3896, %v4169
    %v4298 = vadd.f32 %v3985, %v4170
    %v4299 = vadd.f32 %v4074, %v4171
    %v4300 = vadd.f32 %v4163, %v4172
    %v4301 = vadd.f32 %v3898, %v4169
    %v4302 = vadd.f32 %v3987, %v4170
    %v4303 = vadd.f32 %v4076, %v4171
    %v4304 = vadd.f32 %v4165, %v4172
    %v4305 = vpack.c.bf16 %v3467, %v3465
    %v4306 = vpack.c.bf16 %v3556, %v3554
    %v4307 = vpack.c.bf16 %v3645, %v3643
    %v4308 = vpack.c.bf16 %v3734, %v3732
    %v4309 = vpack.c.bf16 %v3472, %v3470
    %v4310 = vpack.c.bf16 %v3561, %v3559
    %v4311 = vpack.c.bf16 %v3650, %v3648
    %v4312 = vpack.c.bf16 %v3739, %v3737
    %v4313 = vpack.c.bf16 %v3477, %v3475
    %v4314 = vpack.c.bf16 %v3566, %v3564
    %v4315 = vpack.c.bf16 %v3655, %v3653
    %v4316 = vpack.c.bf16 %v3744, %v3742
    %v4317 = vpack.c.bf16 %v3482, %v3480
    %v4318 = vpack.c.bf16 %v3571, %v3569
    %v4319 = vpack.c.bf16 %v3660, %v3658
    %v4320 = vpack.c.bf16 %v3749, %v3747
    %v4321 = vpack.c.bf16 %v3487, %v3485
    %v4322 = vpack.c.bf16 %v3576, %v3574
    %v4323 = vpack.c.bf16 %v3665, %v3663
    %v4324 = vpack.c.bf16 %v3754, %v3752
    %v4325 = vpack.c.bf16 %v3492, %v3490
    %v4326 = vpack.c.bf16 %v3581, %v3579
    %v4327 = vpack.c.bf16 %v3670, %v3668
    %v4328 = vpack.c.bf16 %v3759, %v3757
    %v4329 = vpack.c.bf16 %v3497, %v3495
    %v4330 = vpack.c.bf16 %v3586, %v3584
    %v4331 = vpack.c.bf16 %v3675, %v3673
    %v4332 = vpack.c.bf16 %v3764, %v3762
    %v4333 = vpack.c.bf16 %v3502, %v3500
    %v4334 = vpack.c.bf16 %v3591, %v3589
    %v4335 = vpack.c.bf16 %v3680, %v3678
    %v4336 = vpack.c.bf16 %v3769, %v3767
    %v4337 = vpack.c.bf16 %v3507, %v3505
    %v4338 = vpack.c.bf16 %v3596, %v3594
    %v4339 = vpack.c.bf16 %v3685, %v3683
    %v4340 = vpack.c.bf16 %v3774, %v3772
    %v4341 = vpack.c.bf16 %v3512, %v3510
    %v4342 = vpack.c.bf16 %v3601, %v3599
    %v4343 = vpack.c.bf16 %v3690, %v3688
    %v4344 = vpack.c.bf16 %v3779, %v3777
    %v4345 = vpack.c.bf16 %v3517, %v3515
    %v4346 = vpack.c.bf16 %v3606, %v3604
    %v4347 = vpack.c.bf16 %v3695, %v3693
    %v4348 = vpack.c.bf16 %v3784, %v3782
    %v4349 = vpack.c.bf16 %v3522, %v3520
    %v4350 = vpack.c.bf16 %v3611, %v3609
    %v4351 = vpack.c.bf16 %v3700, %v3698
    %v4352 = vpack.c.bf16 %v3789, %v3787
    %v4353 = vpack.c.bf16 %v3527, %v3525
    %v4354 = vpack.c.bf16 %v3616, %v3614
    %v4355 = vpack.c.bf16 %v3705, %v3703
    %v4356 = vpack.c.bf16 %v3794, %v3792
    %v4357 = vpack.c.bf16 %v3532, %v3530
    %v4358 = vpack.c.bf16 %v3621, %v3619
    %v4359 = vpack.c.bf16 %v3710, %v3708
    %v4360 = vpack.c.bf16 %v3799, %v3797
    %v4361 = vpack.c.bf16 %v3537, %v3535
    %v4362 = vpack.c.bf16 %v3626, %v3624
    %v4363 = vpack.c.bf16 %v3715, %v3713
    %v4364 = vpack.c.bf16 %v3804, %v3802
    %v4365 = vpack.c.bf16 %v3542, %v3540
    %v4366 = vpack.c.bf16 %v3631, %v3629
    %v4367 = vpack.c.bf16 %v3720, %v3718
    %v4368 = vpack.c.bf16 %v3809, %v3807
    %4369 = vmatpush.bf16.msra.mxu0 %v4333
    %4370 = vmatpush.bf16.msra.mxu0 %v4329
    %4371 = vmatpush.bf16.msra.mxu0 %v4325
    %4372 = vmatpush.bf16.msra.mxu0 %v4321
    %4373 = vmatpush.bf16.msra.mxu0 %v4317
    %4374 = vmatpush.bf16.msra.mxu0 %v4313
    %4375 = vmatpush.bf16.msra.mxu0 %v4309
    %4376 = vmatpush.bf16.msra.mxu0 %v4305
    %4377 = vmatmul.bf16.gmra.mxu0 %v1779
    %v4378 = vpop.f32.mrf.mxu0
    %v4379 = vadd.f32 0.0, %v4378
    %v4380 = vpop.f32.mrf.mxu0
    %v4381 = vadd.f32 0.0, %v4380
    %4382 = vmatmul.bf16.gmra.mxu0 %v1781
    %v4383 = vpop.f32.mrf.mxu0
    %v4384 = vadd.f32 0.0, %v4383
    %v4385 = vpop.f32.mrf.mxu0
    %v4386 = vadd.f32 0.0, %v4385
    %4387 = vmatmul.bf16.gmra.mxu0 %v1783
    %v4388 = vpop.f32.mrf.mxu0
    %v4389 = vadd.f32 0.0, %v4388
    %v4390 = vpop.f32.mrf.mxu0
    %v4391 = vadd.f32 0.0, %v4390
    %4392 = vmatmul.bf16.gmra.mxu0 %v1785
    %v4393 = vpop.f32.mrf.mxu0
    %v4394 = vadd.f32 0.0, %v4393
    %v4395 = vpop.f32.mrf.mxu0
    %v4396 = vadd.f32 0.0, %v4395
    %4397 = vmatmul.bf16.gmra.mxu0 %v1787
    %v4398 = vpop.f32.mrf.mxu0
    %v4399 = vadd.f32 0.0, %v4398
    %v4400 = vpop.f32.mrf.mxu0
    %v4401 = vadd.f32 0.0, %v4400
    %4402 = vmatmul.bf16.gmra.mxu0 %v1789
    %v4403 = vpop.f32.mrf.mxu0
    %v4404 = vadd.f32 0.0, %v4403
    %v4405 = vpop.f32.mrf.mxu0
    %v4406 = vadd.f32 0.0, %v4405
    %4407 = vmatmul.bf16.gmra.mxu0 %v1791
    %v4408 = vpop.f32.mrf.mxu0
    %v4409 = vadd.f32 0.0, %v4408
    %v4410 = vpop.f32.mrf.mxu0
    %v4411 = vadd.f32 0.0, %v4410
    %4412 = vmatmul.bf16.gmra.mxu0 %v1793
    %v4413 = vpop.f32.mrf.mxu0
    %v4414 = vadd.f32 0.0, %v4413
    %v4415 = vpop.f32.mrf.mxu0
    %v4416 = vadd.f32 0.0, %v4415
    %4417 = vmatmul.bf16.gmra.mxu0 %v1795
    %v4418 = vpop.f32.mrf.mxu0
    %v4419 = vadd.f32 0.0, %v4418
    %v4420 = vpop.f32.mrf.mxu0
    %v4421 = vadd.f32 0.0, %v4420
    %4422 = vmatmul.bf16.gmra.mxu0 %v1797
    %v4423 = vpop.f32.mrf.mxu0
    %v4424 = vadd.f32 0.0, %v4423
    %v4425 = vpop.f32.mrf.mxu0
    %v4426 = vadd.f32 0.0, %v4425
    %4427 = vmatmul.bf16.gmra.mxu0 %v1799
    %v4428 = vpop.f32.mrf.mxu0
    %v4429 = vadd.f32 0.0, %v4428
    %v4430 = vpop.f32.mrf.mxu0
    %v4431 = vadd.f32 0.0, %v4430
    %4432 = vmatmul.bf16.gmra.mxu0 %v1801
    %v4433 = vpop.f32.mrf.mxu0
    %v4434 = vadd.f32 0.0, %v4433
    %v4435 = vpop.f32.mrf.mxu0
    %v4436 = vadd.f32 0.0, %v4435
    %4437 = vmatmul.bf16.gmra.mxu0 %v1803
    %v4438 = vpop.f32.mrf.mxu0
    %v4439 = vadd.f32 0.0, %v4438
    %v4440 = vpop.f32.mrf.mxu0
    %v4441 = vadd.f32 0.0, %v4440
    %4442 = vmatmul.bf16.gmra.mxu0 %v1805
    %v4443 = vpop.f32.mrf.mxu0
    %v4444 = vadd.f32 0.0, %v4443
    %v4445 = vpop.f32.mrf.mxu0
    %v4446 = vadd.f32 0.0, %v4445
    %4447 = vmatmul.bf16.gmra.mxu0 %v1807
    %v4448 = vpop.f32.mrf.mxu0
    %v4449 = vadd.f32 0.0, %v4448
    %v4450 = vpop.f32.mrf.mxu0
    %v4451 = vadd.f32 0.0, %v4450
    %4452 = vmatmul.bf16.gmra.mxu0 %v1809
    %v4453 = vpop.f32.mrf.mxu0
    %v4454 = vadd.f32 0.0, %v4453
    %v4455 = vpop.f32.mrf.mxu0
    %v4456 = vadd.f32 0.0, %v4455
    %4457 = vdwg.mxu0
    %4458 = vmatpush.bf16.msra.mxu0 %v4365
    %4459 = vmatpush.bf16.msra.mxu0 %v4361
    %4460 = vmatpush.bf16.msra.mxu0 %v4357
    %4461 = vmatpush.bf16.msra.mxu0 %v4353
    %4462 = vmatpush.bf16.msra.mxu0 %v4349
    %4463 = vmatpush.bf16.msra.mxu0 %v4345
    %4464 = vmatpush.bf16.msra.mxu0 %v4341
    %4465 = vmatpush.bf16.msra.mxu0 %v4337
    %4466 = vmatmul.bf16.gmra.mxu0 %v1780
    %v4467 = vpop.f32.mrf.mxu0
    %v4468 = vadd.f32 %v4379, %v4467
    %v4469 = vpop.f32.mrf.mxu0
    %v4470 = vadd.f32 %v4381, %v4469
    %4471 = vmatmul.bf16.gmra.mxu0 %v1782
    %v4472 = vpop.f32.mrf.mxu0
    %v4473 = vadd.f32 %v4384, %v4472
    %v4474 = vpop.f32.mrf.mxu0
    %v4475 = vadd.f32 %v4386, %v4474
    %4476 = vmatmul.bf16.gmra.mxu0 %v1784
    %v4477 = vpop.f32.mrf.mxu0
    %v4478 = vadd.f32 %v4389, %v4477
    %v4479 = vpop.f32.mrf.mxu0
    %v4480 = vadd.f32 %v4391, %v4479
    %4481 = vmatmul.bf16.gmra.mxu0 %v1786
    %v4482 = vpop.f32.mrf.mxu0
    %v4483 = vadd.f32 %v4394, %v4482
    %v4484 = vpop.f32.mrf.mxu0
    %v4485 = vadd.f32 %v4396, %v4484
    %4486 = vmatmul.bf16.gmra.mxu0 %v1788
    %v4487 = vpop.f32.mrf.mxu0
    %v4488 = vadd.f32 %v4399, %v4487
    %v4489 = vpop.f32.mrf.mxu0
    %v4490 = vadd.f32 %v4401, %v4489
    %4491 = vmatmul.bf16.gmra.mxu0 %v1790
    %v4492 = vpop.f32.mrf.mxu0
    %v4493 = vadd.f32 %v4404, %v4492
    %v4494 = vpop.f32.mrf.mxu0
    %v4495 = vadd.f32 %v4406, %v4494
    %4496 = vmatmul.bf16.gmra.mxu0 %v1792
    %v4497 = vpop.f32.mrf.mxu0
    %v4498 = vadd.f32 %v4409, %v4497
    %v4499 = vpop.f32.mrf.mxu0
    %v4500 = vadd.f32 %v4411, %v4499
    %4501 = vmatmul.bf16.gmra.mxu0 %v1794
    %v4502 = vpop.f32.mrf.mxu0
    %v4503 = vadd.f32 %v4414, %v4502
    %v4504 = vpop.f32.mrf.mxu0
    %v4505 = vadd.f32 %v4416, %v4504
    %4506 = vmatmul.bf16.gmra.mxu0 %v1796
    %v4507 = vpop.f32.mrf.mxu0
    %v4508 = vadd.f32 %v4419, %v4507
    %v4509 = vpop.f32.mrf.mxu0
    %v4510 = vadd.f32 %v4421, %v4509
    %4511 = vmatmul.bf16.gmra.mxu0 %v1798
    %v4512 = vpop.f32.mrf.mxu0
    %v4513 = vadd.f32 %v4424, %v4512
    %v4514 = vpop.f32.mrf.mxu0
    %v4515 = vadd.f32 %v4426, %v4514
    %4516 = vmatmul.bf16.gmra.mxu0 %v1800
    %v4517 = vpop.f32.mrf.mxu0
    %v4518 = vadd.f32 %v4429, %v4517
    %v4519 = vpop.f32.mrf.mxu0
    %v4520 = vadd.f32 %v4431, %v4519
    %4521 = vmatmul.bf16.gmra.mxu0 %v1802
    %v4522 = vpop.f32.mrf.mxu0
    %v4523 = vadd.f32 %v4434, %v4522
    %v4524 = vpop.f32.mrf.mxu0
    %v4525 = vadd.f32 %v4436, %v4524
    %4526 = vmatmul.bf16.gmra.mxu0 %v1804
    %v4527 = vpop.f32.mrf.mxu0
    %v4528 = vadd.f32 %v4439, %v4527
    %v4529 = vpop.f32.mrf.mxu0
    %v4530 = vadd.f32 %v4441, %v4529
    %4531 = vmatmul.bf16.gmra.mxu0 %v1806
    %v4532 = vpop.f32.mrf.mxu0
    %v4533 = vadd.f32 %v4444, %v4532
    %v4534 = vpop.f32.mrf.mxu0
    %v4535 = vadd.f32 %v4446, %v4534
    %4536 = vmatmul.bf16.gmra.mxu0 %v1808
    %v4537 = vpop.f32.mrf.mxu0
    %v4538 = vadd.f32 %v4449, %v4537
    %v4539 = vpop.f32.mrf.mxu0
    %v4540 = vadd.f32 %v4451, %v4539
    %4541 = vmatmul.bf16.gmra.mxu0 %v1810
    %v4542 = vpop.f32.mrf.mxu0
    %v4543 = vadd.f32 %v4454, %v4542
    %v4544 = vpop.f32.mrf.mxu0
    %v4545 = vadd.f32 %v4456, %v4544
    %4546 = vdwg.mxu0
    %4547 = vmatpush.bf16.msra.mxu0 %v4334
    %4548 = vmatpush.bf16.msra.mxu0 %v4330
    %4549 = vmatpush.bf16.msra.mxu0 %v4326
    %4550 = vmatpush.bf16.msra.mxu0 %v4322
    %4551 = vmatpush.bf16.msra.mxu0 %v4318
    %4552 = vmatpush.bf16.msra.mxu0 %v4314
    %4553 = vmatpush.bf16.msra.mxu0 %v4310
    %4554 = vmatpush.bf16.msra.mxu0 %v4306
    %4555 = vmatmul.bf16.gmra.mxu0 %v1779
    %v4556 = vpop.f32.mrf.mxu0
    %v4557 = vadd.f32 0.0, %v4556
    %v4558 = vpop.f32.mrf.mxu0
    %v4559 = vadd.f32 0.0, %v4558
    %4560 = vmatmul.bf16.gmra.mxu0 %v1781
    %v4561 = vpop.f32.mrf.mxu0
    %v4562 = vadd.f32 0.0, %v4561
    %v4563 = vpop.f32.mrf.mxu0
    %v4564 = vadd.f32 0.0, %v4563
    %4565 = vmatmul.bf16.gmra.mxu0 %v1783
    %v4566 = vpop.f32.mrf.mxu0
    %v4567 = vadd.f32 0.0, %v4566
    %v4568 = vpop.f32.mrf.mxu0
    %v4569 = vadd.f32 0.0, %v4568
    %4570 = vmatmul.bf16.gmra.mxu0 %v1785
    %v4571 = vpop.f32.mrf.mxu0
    %v4572 = vadd.f32 0.0, %v4571
    %v4573 = vpop.f32.mrf.mxu0
    %v4574 = vadd.f32 0.0, %v4573
    %4575 = vmatmul.bf16.gmra.mxu0 %v1787
    %v4576 = vpop.f32.mrf.mxu0
    %v4577 = vadd.f32 0.0, %v4576
    %v4578 = vpop.f32.mrf.mxu0
    %v4579 = vadd.f32 0.0, %v4578
    %4580 = vmatmul.bf16.gmra.mxu0 %v1789
    %v4581 = vpop.f32.mrf.mxu0
    %v4582 = vadd.f32 0.0, %v4581
    %v4583 = vpop.f32.mrf.mxu0
    %v4584 = vadd.f32 0.0, %v4583
    %4585 = vmatmul.bf16.gmra.mxu0 %v1791
    %v4586 = vpop.f32.mrf.mxu0
    %v4587 = vadd.f32 0.0, %v4586
    %v4588 = vpop.f32.mrf.mxu0
    %v4589 = vadd.f32 0.0, %v4588
    %4590 = vmatmul.bf16.gmra.mxu0 %v1793
    %v4591 = vpop.f32.mrf.mxu0
    %v4592 = vadd.f32 0.0, %v4591
    %v4593 = vpop.f32.mrf.mxu0
    %v4594 = vadd.f32 0.0, %v4593
    %4595 = vmatmul.bf16.gmra.mxu0 %v1795
    %v4596 = vpop.f32.mrf.mxu0
    %v4597 = vadd.f32 0.0, %v4596
    %v4598 = vpop.f32.mrf.mxu0
    %v4599 = vadd.f32 0.0, %v4598
    %4600 = vmatmul.bf16.gmra.mxu0 %v1797
    %v4601 = vpop.f32.mrf.mxu0
    %v4602 = vadd.f32 0.0, %v4601
    %v4603 = vpop.f32.mrf.mxu0
    %v4604 = vadd.f32 0.0, %v4603
    %4605 = vmatmul.bf16.gmra.mxu0 %v1799
    %v4606 = vpop.f32.mrf.mxu0
    %v4607 = vadd.f32 0.0, %v4606
    %v4608 = vpop.f32.mrf.mxu0
    %v4609 = vadd.f32 0.0, %v4608
    %4610 = vmatmul.bf16.gmra.mxu0 %v1801
    %v4611 = vpop.f32.mrf.mxu0
    %v4612 = vadd.f32 0.0, %v4611
    %v4613 = vpop.f32.mrf.mxu0
    %v4614 = vadd.f32 0.0, %v4613
    %4615 = vmatmul.bf16.gmra.mxu0 %v1803
    %v4616 = vpop.f32.mrf.mxu0
    %v4617 = vadd.f32 0.0, %v4616
    %v4618 = vpop.f32.mrf.mxu0
    %v4619 = vadd.f32 0.0, %v4618
    %4620 = vmatmul.bf16.gmra.mxu0 %v1805
    %v4621 = vpop.f32.mrf.mxu0
    %v4622 = vadd.f32 0.0, %v4621
    %v4623 = vpop.f32.mrf.mxu0
    %v4624 = vadd.f32 0.0, %v4623
    %4625 = vmatmul.bf16.gmra.mxu0 %v1807
    %v4626 = vpop.f32.mrf.mxu0
    %v4627 = vadd.f32 0.0, %v4626
    %v4628 = vpop.f32.mrf.mxu0
    %v4629 = vadd.f32 0.0, %v4628
    %4630 = vmatmul.bf16.gmra.mxu0 %v1809
    %v4631 = vpop.f32.mrf.mxu0
    %v4632 = vadd.f32 0.0, %v4631
    %v4633 = vpop.f32.mrf.mxu0
    %v4634 = vadd.f32 0.0, %v4633
    %4635 = vdwg.mxu0
    %4636 = vmatpush.bf16.msra.mxu0 %v4366
    %4637 = vmatpush.bf16.msra.mxu0 %v4362
    %4638 = vmatpush.bf16.msra.mxu0 %v4358
    %4639 = vmatpush.bf16.msra.mxu0 %v4354
    %4640 = vmatpush.bf16.msra.mxu0 %v4350
    %4641 = vmatpush.bf16.msra.mxu0 %v4346
    %4642 = vmatpush.bf16.msra.mxu0 %v4342
    %4643 = vmatpush.bf16.msra.mxu0 %v4338
    %4644 = vmatmul.bf16.gmra.mxu0 %v1780
    %v4645 = vpop.f32.mrf.mxu0
    %v4646 = vadd.f32 %v4557, %v4645
    %v4647 = vpop.f32.mrf.mxu0
    %v4648 = vadd.f32 %v4559, %v4647
    %4649 = vmatmul.bf16.gmra.mxu0 %v1782
    %v4650 = vpop.f32.mrf.mxu0
    %v4651 = vadd.f32 %v4562, %v4650
    %v4652 = vpop.f32.mrf.mxu0
    %v4653 = vadd.f32 %v4564, %v4652
    %4654 = vmatmul.bf16.gmra.mxu0 %v1784
    %v4655 = vpop.f32.mrf.mxu0
    %v4656 = vadd.f32 %v4567, %v4655
    %v4657 = vpop.f32.mrf.mxu0
    %v4658 = vadd.f32 %v4569, %v4657
    %4659 = vmatmul.bf16.gmra.mxu0 %v1786
    %v4660 = vpop.f32.mrf.mxu0
    %v4661 = vadd.f32 %v4572, %v4660
    %v4662 = vpop.f32.mrf.mxu0
    %v4663 = vadd.f32 %v4574, %v4662
    %4664 = vmatmul.bf16.gmra.mxu0 %v1788
    %v4665 = vpop.f32.mrf.mxu0
    %v4666 = vadd.f32 %v4577, %v4665
    %v4667 = vpop.f32.mrf.mxu0
    %v4668 = vadd.f32 %v4579, %v4667
    %4669 = vmatmul.bf16.gmra.mxu0 %v1790
    %v4670 = vpop.f32.mrf.mxu0
    %v4671 = vadd.f32 %v4582, %v4670
    %v4672 = vpop.f32.mrf.mxu0
    %v4673 = vadd.f32 %v4584, %v4672
    %4674 = vmatmul.bf16.gmra.mxu0 %v1792
    %v4675 = vpop.f32.mrf.mxu0
    %v4676 = vadd.f32 %v4587, %v4675
    %v4677 = vpop.f32.mrf.mxu0
    %v4678 = vadd.f32 %v4589, %v4677
    %4679 = vmatmul.bf16.gmra.mxu0 %v1794
    %v4680 = vpop.f32.mrf.mxu0
    %v4681 = vadd.f32 %v4592, %v4680
    %v4682 = vpop.f32.mrf.mxu0
    %v4683 = vadd.f32 %v4594, %v4682
    %4684 = vmatmul.bf16.gmra.mxu0 %v1796
    %v4685 = vpop.f32.mrf.mxu0
    %v4686 = vadd.f32 %v4597, %v4685
    %v4687 = vpop.f32.mrf.mxu0
    %v4688 = vadd.f32 %v4599, %v4687
    %4689 = vmatmul.bf16.gmra.mxu0 %v1798
    %v4690 = vpop.f32.mrf.mxu0
    %v4691 = vadd.f32 %v4602, %v4690
    %v4692 = vpop.f32.mrf.mxu0
    %v4693 = vadd.f32 %v4604, %v4692
    %4694 = vmatmul.bf16.gmra.mxu0 %v1800
    %v4695 = vpop.f32.mrf.mxu0
    %v4696 = vadd.f32 %v4607, %v4695
    %v4697 = vpop.f32.mrf.mxu0
    %v4698 = vadd.f32 %v4609, %v4697
    %4699 = vmatmul.bf16.gmra.mxu0 %v1802
    %v4700 = vpop.f32.mrf.mxu0
    %v4701 = vadd.f32 %v4612, %v4700
    %v4702 = vpop.f32.mrf.mxu0
    %v4703 = vadd.f32 %v4614, %v4702
    %4704 = vmatmul.bf16.gmra.mxu0 %v1804
    %v4705 = vpop.f32.mrf.mxu0
    %v4706 = vadd.f32 %v4617, %v4705
    %v4707 = vpop.f32.mrf.mxu0
    %v4708 = vadd.f32 %v4619, %v4707
    %4709 = vmatmul.bf16.gmra.mxu0 %v1806
    %v4710 = vpop.f32.mrf.mxu0
    %v4711 = vadd.f32 %v4622, %v4710
    %v4712 = vpop.f32.mrf.mxu0
    %v4713 = vadd.f32 %v4624, %v4712
    %4714 = vmatmul.bf16.gmra.mxu0 %v1808
    %v4715 = vpop.f32.mrf.mxu0
    %v4716 = vadd.f32 %v4627, %v4715
    %v4717 = vpop.f32.mrf.mxu0
    %v4718 = vadd.f32 %v4629, %v4717
    %4719 = vmatmul.bf16.gmra.mxu0 %v1810
    %v4720 = vpop.f32.mrf.mxu0
    %v4721 = vadd.f32 %v4632, %v4720
    %v4722 = vpop.f32.mrf.mxu0
    %v4723 = vadd.f32 %v4634, %v4722
    %4724 = vdwg.mxu0
    %4725 = vmatpush.bf16.msra.mxu0 %v4335
    %4726 = vmatpush.bf16.msra.mxu0 %v4331
    %4727 = vmatpush.bf16.msra.mxu0 %v4327
    %4728 = vmatpush.bf16.msra.mxu0 %v4323
    %4729 = vmatpush.bf16.msra.mxu0 %v4319
    %4730 = vmatpush.bf16.msra.mxu0 %v4315
    %4731 = vmatpush.bf16.msra.mxu0 %v4311
    %4732 = vmatpush.bf16.msra.mxu0 %v4307
    %4733 = vmatmul.bf16.gmra.mxu0 %v1779
    %v4734 = vpop.f32.mrf.mxu0
    %v4735 = vadd.f32 0.0, %v4734
    %v4736 = vpop.f32.mrf.mxu0
    %v4737 = vadd.f32 0.0, %v4736
    %4738 = vmatmul.bf16.gmra.mxu0 %v1781
    %v4739 = vpop.f32.mrf.mxu0
    %v4740 = vadd.f32 0.0, %v4739
    %v4741 = vpop.f32.mrf.mxu0
    %v4742 = vadd.f32 0.0, %v4741
    %4743 = vmatmul.bf16.gmra.mxu0 %v1783
    %v4744 = vpop.f32.mrf.mxu0
    %v4745 = vadd.f32 0.0, %v4744
    %v4746 = vpop.f32.mrf.mxu0
    %v4747 = vadd.f32 0.0, %v4746
    %4748 = vmatmul.bf16.gmra.mxu0 %v1785
    %v4749 = vpop.f32.mrf.mxu0
    %v4750 = vadd.f32 0.0, %v4749
    %v4751 = vpop.f32.mrf.mxu0
    %v4752 = vadd.f32 0.0, %v4751
    %4753 = vmatmul.bf16.gmra.mxu0 %v1787
    %v4754 = vpop.f32.mrf.mxu0
    %v4755 = vadd.f32 0.0, %v4754
    %v4756 = vpop.f32.mrf.mxu0
    %v4757 = vadd.f32 0.0, %v4756
    %4758 = vmatmul.bf16.gmra.mxu0 %v1789
    %v4759 = vpop.f32.mrf.mxu0
    %v4760 = vadd.f32 0.0, %v4759
    %v4761 = vpop.f32.mrf.mxu0
    %v4762 = vadd.f32 0.0, %v4761
    %4763 = vmatmul.bf16.gmra.mxu0 %v1791
    %v4764 = vpop.f32.mrf.mxu0
    %v4765 = vadd.f32 0.0, %v4764
    %v4766 = vpop.f32.mrf.mxu0
    %v4767 = vadd.f32 0.0, %v4766
    %4768 = vmatmul.bf16.gmra.mxu0 %v1793
    %v4769 = vpop.f32.mrf.mxu0
    %v4770 = vadd.f32 0.0, %v4769
    %v4771 = vpop.f32.mrf.mxu0
    %v4772 = vadd.f32 0.0, %v4771
    %4773 = vmatmul.bf16.gmra.mxu0 %v1795
    %v4774 = vpop.f32.mrf.mxu0
    %v4775 = vadd.f32 0.0, %v4774
    %v4776 = vpop.f32.mrf.mxu0
    %v4777 = vadd.f32 0.0, %v4776
    %4778 = vmatmul.bf16.gmra.mxu0 %v1797
    %v4779 = vpop.f32.mrf.mxu0
    %v4780 = vadd.f32 0.0, %v4779
    %v4781 = vpop.f32.mrf.mxu0
    %v4782 = vadd.f32 0.0, %v4781
    %4783 = vmatmul.bf16.gmra.mxu0 %v1799
    %v4784 = vpop.f32.mrf.mxu0
    %v4785 = vadd.f32 0.0, %v4784
    %v4786 = vpop.f32.mrf.mxu0
    %v4787 = vadd.f32 0.0, %v4786
    %4788 = vmatmul.bf16.gmra.mxu0 %v1801
    %v4789 = vpop.f32.mrf.mxu0
    %v4790 = vadd.f32 0.0, %v4789
    %v4791 = vpop.f32.mrf.mxu0
    %v4792 = vadd.f32 0.0, %v4791
    %4793 = vmatmul.bf16.gmra.mxu0 %v1803
    %v4794 = vpop.f32.mrf.mxu0
    %v4795 = vadd.f32 0.0, %v4794
    %v4796 = vpop.f32.mrf.mxu0
    %v4797 = vadd.f32 0.0, %v4796
    %4798 = vmatmul.bf16.gmra.mxu0 %v1805
    %v4799 = vpop.f32.mrf.mxu0
    %v4800 = vadd.f32 0.0, %v4799
    %v4801 = vpop.f32.mrf.mxu0
    %v4802 = vadd.f32 0.0, %v4801
    %4803 = vmatmul.bf16.gmra.mxu0 %v1807
    %v4804 = vpop.f32.mrf.mxu0
    %v4805 = vadd.f32 0.0, %v4804
    %v4806 = vpop.f32.mrf.mxu0
    %v4807 = vadd.f32 0.0, %v4806
    %4808 = vmatmul.bf16.gmra.mxu0 %v1809
    %v4809 = vpop.f32.mrf.mxu0
    %v4810 = vadd.f32 0.0, %v4809
    %v4811 = vpop.f32.mrf.mxu0
    %v4812 = vadd.f32 0.0, %v4811
    %4813 = vdwg.mxu0
    %4814 = vmatpush.bf16.msra.mxu0 %v4367
    %4815 = vmatpush.bf16.msra.mxu0 %v4363
    %4816 = vmatpush.bf16.msra.mxu0 %v4359
    %4817 = vmatpush.bf16.msra.mxu0 %v4355
    %4818 = vmatpush.bf16.msra.mxu0 %v4351
    %4819 = vmatpush.bf16.msra.mxu0 %v4347
    %4820 = vmatpush.bf16.msra.mxu0 %v4343
    %4821 = vmatpush.bf16.msra.mxu0 %v4339
    %4822 = vmatmul.bf16.gmra.mxu0 %v1780
    %v4823 = vpop.f32.mrf.mxu0
    %v4824 = vadd.f32 %v4735, %v4823
    %v4825 = vpop.f32.mrf.mxu0
    %v4826 = vadd.f32 %v4737, %v4825
    %4827 = vmatmul.bf16.gmra.mxu0 %v1782
    %v4828 = vpop.f32.mrf.mxu0
    %v4829 = vadd.f32 %v4740, %v4828
    %v4830 = vpop.f32.mrf.mxu0
    %v4831 = vadd.f32 %v4742, %v4830
    %4832 = vmatmul.bf16.gmra.mxu0 %v1784
    %v4833 = vpop.f32.mrf.mxu0
    %v4834 = vadd.f32 %v4745, %v4833
    %v4835 = vpop.f32.mrf.mxu0
    %v4836 = vadd.f32 %v4747, %v4835
    %4837 = vmatmul.bf16.gmra.mxu0 %v1786
    %v4838 = vpop.f32.mrf.mxu0
    %v4839 = vadd.f32 %v4750, %v4838
    %v4840 = vpop.f32.mrf.mxu0
    %v4841 = vadd.f32 %v4752, %v4840
    %4842 = vmatmul.bf16.gmra.mxu0 %v1788
    %v4843 = vpop.f32.mrf.mxu0
    %v4844 = vadd.f32 %v4755, %v4843
    %v4845 = vpop.f32.mrf.mxu0
    %v4846 = vadd.f32 %v4757, %v4845
    %4847 = vmatmul.bf16.gmra.mxu0 %v1790
    %v4848 = vpop.f32.mrf.mxu0
    %v4849 = vadd.f32 %v4760, %v4848
    %v4850 = vpop.f32.mrf.mxu0
    %v4851 = vadd.f32 %v4762, %v4850
    %4852 = vmatmul.bf16.gmra.mxu0 %v1792
    %v4853 = vpop.f32.mrf.mxu0
    %v4854 = vadd.f32 %v4765, %v4853
    %v4855 = vpop.f32.mrf.mxu0
    %v4856 = vadd.f32 %v4767, %v4855
    %4857 = vmatmul.bf16.gmra.mxu0 %v1794
    %v4858 = vpop.f32.mrf.mxu0
    %v4859 = vadd.f32 %v4770, %v4858
    %v4860 = vpop.f32.mrf.mxu0
    %v4861 = vadd.f32 %v4772, %v4860
    %4862 = vmatmul.bf16.gmra.mxu0 %v1796
    %v4863 = vpop.f32.mrf.mxu0
    %v4864 = vadd.f32 %v4775, %v4863
    %v4865 = vpop.f32.mrf.mxu0
    %v4866 = vadd.f32 %v4777, %v4865
    %4867 = vmatmul.bf16.gmra.mxu0 %v1798
    %v4868 = vpop.f32.mrf.mxu0
    %v4869 = vadd.f32 %v4780, %v4868
    %v4870 = vpop.f32.mrf.mxu0
    %v4871 = vadd.f32 %v4782, %v4870
    %4872 = vmatmul.bf16.gmra.mxu0 %v1800
    %v4873 = vpop.f32.mrf.mxu0
    %v4874 = vadd.f32 %v4785, %v4873
    %v4875 = vpop.f32.mrf.mxu0
    %v4876 = vadd.f32 %v4787, %v4875
    %4877 = vmatmul.bf16.gmra.mxu0 %v1802
    %v4878 = vpop.f32.mrf.mxu0
    %v4879 = vadd.f32 %v4790, %v4878
    %v4880 = vpop.f32.mrf.mxu0
    %v4881 = vadd.f32 %v4792, %v4880
    %4882 = vmatmul.bf16.gmra.mxu0 %v1804
    %v4883 = vpop.f32.mrf.mxu0
    %v4884 = vadd.f32 %v4795, %v4883
    %v4885 = vpop.f32.mrf.mxu0
    %v4886 = vadd.f32 %v4797, %v4885
    %4887 = vmatmul.bf16.gmra.mxu0 %v1806
    %v4888 = vpop.f32.mrf.mxu0
    %v4889 = vadd.f32 %v4800, %v4888
    %v4890 = vpop.f32.mrf.mxu0
    %v4891 = vadd.f32 %v4802, %v4890
    %4892 = vmatmul.bf16.gmra.mxu0 %v1808
    %v4893 = vpop.f32.mrf.mxu0
    %v4894 = vadd.f32 %v4805, %v4893
    %v4895 = vpop.f32.mrf.mxu0
    %v4896 = vadd.f32 %v4807, %v4895
    %4897 = vmatmul.bf16.gmra.mxu0 %v1810
    %v4898 = vpop.f32.mrf.mxu0
    %v4899 = vadd.f32 %v4810, %v4898
    %v4900 = vpop.f32.mrf.mxu0
    %v4901 = vadd.f32 %v4812, %v4900
    %4902 = vdwg.mxu0
    %4903 = vmatpush.bf16.msra.mxu0 %v4336
    %4904 = vmatpush.bf16.msra.mxu0 %v4332
    %4905 = vmatpush.bf16.msra.mxu0 %v4328
    %4906 = vmatpush.bf16.msra.mxu0 %v4324
    %4907 = vmatpush.bf16.msra.mxu0 %v4320
    %4908 = vmatpush.bf16.msra.mxu0 %v4316
    %4909 = vmatpush.bf16.msra.mxu0 %v4312
    %4910 = vmatpush.bf16.msra.mxu0 %v4308
    %4911 = vmatmul.bf16.gmra.mxu0 %v1779
    %v4912 = vpop.f32.mrf.mxu0
    %v4913 = vadd.f32 0.0, %v4912
    %v4914 = vpop.f32.mrf.mxu0
    %v4915 = vadd.f32 0.0, %v4914
    %4916 = vmatmul.bf16.gmra.mxu0 %v1781
    %v4917 = vpop.f32.mrf.mxu0
    %v4918 = vadd.f32 0.0, %v4917
    %v4919 = vpop.f32.mrf.mxu0
    %v4920 = vadd.f32 0.0, %v4919
    %4921 = vmatmul.bf16.gmra.mxu0 %v1783
    %v4922 = vpop.f32.mrf.mxu0
    %v4923 = vadd.f32 0.0, %v4922
    %v4924 = vpop.f32.mrf.mxu0
    %v4925 = vadd.f32 0.0, %v4924
    %4926 = vmatmul.bf16.gmra.mxu0 %v1785
    %v4927 = vpop.f32.mrf.mxu0
    %v4928 = vadd.f32 0.0, %v4927
    %v4929 = vpop.f32.mrf.mxu0
    %v4930 = vadd.f32 0.0, %v4929
    %4931 = vmatmul.bf16.gmra.mxu0 %v1787
    %v4932 = vpop.f32.mrf.mxu0
    %v4933 = vadd.f32 0.0, %v4932
    %v4934 = vpop.f32.mrf.mxu0
    %v4935 = vadd.f32 0.0, %v4934
    %4936 = vmatmul.bf16.gmra.mxu0 %v1789
    %v4937 = vpop.f32.mrf.mxu0
    %v4938 = vadd.f32 0.0, %v4937
    %v4939 = vpop.f32.mrf.mxu0
    %v4940 = vadd.f32 0.0, %v4939
    %4941 = vmatmul.bf16.gmra.mxu0 %v1791
    %v4942 = vpop.f32.mrf.mxu0
    %v4943 = vadd.f32 0.0, %v4942
    %v4944 = vpop.f32.mrf.mxu0
    %v4945 = vadd.f32 0.0, %v4944
    %4946 = vmatmul.bf16.gmra.mxu0 %v1793
    %v4947 = vpop.f32.mrf.mxu0
    %v4948 = vadd.f32 0.0, %v4947
    %v4949 = vpop.f32.mrf.mxu0
    %v4950 = vadd.f32 0.0, %v4949
    %4951 = vmatmul.bf16.gmra.mxu0 %v1795
    %v4952 = vpop.f32.mrf.mxu0
    %v4953 = vadd.f32 0.0, %v4952
    %v4954 = vpop.f32.mrf.mxu0
    %v4955 = vadd.f32 0.0, %v4954
    %4956 = vmatmul.bf16.gmra.mxu0 %v1797
    %v4957 = vpop.f32.mrf.mxu0
    %v4958 = vadd.f32 0.0, %v4957
    %v4959 = vpop.f32.mrf.mxu0
    %v4960 = vadd.f32 0.0, %v4959
    %4961 = vmatmul.bf16.gmra.mxu0 %v1799
    %v4962 = vpop.f32.mrf.mxu0
    %v4963 = vadd.f32 0.0, %v4962
    %v4964 = vpop.f32.mrf.mxu0
    %v4965 = vadd.f32 0.0, %v4964
    %4966 = vmatmul.bf16.gmra.mxu0 %v1801
    %v4967 = vpop.f32.mrf.mxu0
    %v4968 = vadd.f32 0.0, %v4967
    %v4969 = vpop.f32.mrf.mxu0
    %v4970 = vadd.f32 0.0, %v4969
    %4971 = vmatmul.bf16.gmra.mxu0 %v1803
    %v4972 = vpop.f32.mrf.mxu0
    %v4973 = vadd.f32 0.0, %v4972
    %v4974 = vpop.f32.mrf.mxu0
    %v4975 = vadd.f32 0.0, %v4974
    %4976 = vmatmul.bf16.gmra.mxu0 %v1805
    %v4977 = vpop.f32.mrf.mxu0
    %v4978 = vadd.f32 0.0, %v4977
    %v4979 = vpop.f32.mrf.mxu0
    %v4980 = vadd.f32 0.0, %v4979
    %4981 = vmatmul.bf16.gmra.mxu0 %v1807
    %v4982 = vpop.f32.mrf.mxu0
    %v4983 = vadd.f32 0.0, %v4982
    %v4984 = vpop.f32.mrf.mxu0
    %v4985 = vadd.f32 0.0, %v4984
    %4986 = vmatmul.bf16.gmra.mxu0 %v1809
    %v4987 = vpop.f32.mrf.mxu0
    %v4988 = vadd.f32 0.0, %v4987
    %v4989 = vpop.f32.mrf.mxu0
    %v4990 = vadd.f32 0.0, %v4989
    %4991 = vdwg.mxu0
    %4992 = vmatpush.bf16.msra.mxu0 %v4368
    %4993 = vmatpush.bf16.msra.mxu0 %v4364
    %4994 = vmatpush.bf16.msra.mxu0 %v4360
    %4995 = vmatpush.bf16.msra.mxu0 %v4356
    %4996 = vmatpush.bf16.msra.mxu0 %v4352
    %4997 = vmatpush.bf16.msra.mxu0 %v4348
    %4998 = vmatpush.bf16.msra.mxu0 %v4344
    %4999 = vmatpush.bf16.msra.mxu0 %v4340
    %5000 = vmatmul.bf16.gmra.mxu0 %v1780
    %v5001 = vpop.f32.mrf.mxu0
    %v5002 = vadd.f32 %v4913, %v5001
    %v5003 = vpop.f32.mrf.mxu0
    %v5004 = vadd.f32 %v4915, %v5003
    %5005 = vmatmul.bf16.gmra.mxu0 %v1782
    %v5006 = vpop.f32.mrf.mxu0
    %v5007 = vadd.f32 %v4918, %v5006
    %v5008 = vpop.f32.mrf.mxu0
    %v5009 = vadd.f32 %v4920, %v5008
    %5010 = vmatmul.bf16.gmra.mxu0 %v1784
    %v5011 = vpop.f32.mrf.mxu0
    %v5012 = vadd.f32 %v4923, %v5011
    %v5013 = vpop.f32.mrf.mxu0
    %v5014 = vadd.f32 %v4925, %v5013
    %5015 = vmatmul.bf16.gmra.mxu0 %v1786
    %v5016 = vpop.f32.mrf.mxu0
    %v5017 = vadd.f32 %v4928, %v5016
    %v5018 = vpop.f32.mrf.mxu0
    %v5019 = vadd.f32 %v4930, %v5018
    %5020 = vmatmul.bf16.gmra.mxu0 %v1788
    %v5021 = vpop.f32.mrf.mxu0
    %v5022 = vadd.f32 %v4933, %v5021
    %v5023 = vpop.f32.mrf.mxu0
    %v5024 = vadd.f32 %v4935, %v5023
    %5025 = vmatmul.bf16.gmra.mxu0 %v1790
    %v5026 = vpop.f32.mrf.mxu0
    %v5027 = vadd.f32 %v4938, %v5026
    %v5028 = vpop.f32.mrf.mxu0
    %v5029 = vadd.f32 %v4940, %v5028
    %5030 = vmatmul.bf16.gmra.mxu0 %v1792
    %v5031 = vpop.f32.mrf.mxu0
    %v5032 = vadd.f32 %v4943, %v5031
    %v5033 = vpop.f32.mrf.mxu0
    %v5034 = vadd.f32 %v4945, %v5033
    %5035 = vmatmul.bf16.gmra.mxu0 %v1794
    %v5036 = vpop.f32.mrf.mxu0
    %v5037 = vadd.f32 %v4948, %v5036
    %v5038 = vpop.f32.mrf.mxu0
    %v5039 = vadd.f32 %v4950, %v5038
    %5040 = vmatmul.bf16.gmra.mxu0 %v1796
    %v5041 = vpop.f32.mrf.mxu0
    %v5042 = vadd.f32 %v4953, %v5041
    %v5043 = vpop.f32.mrf.mxu0
    %v5044 = vadd.f32 %v4955, %v5043
    %5045 = vmatmul.bf16.gmra.mxu0 %v1798
    %v5046 = vpop.f32.mrf.mxu0
    %v5047 = vadd.f32 %v4958, %v5046
    %v5048 = vpop.f32.mrf.mxu0
    %v5049 = vadd.f32 %v4960, %v5048
    %5050 = vmatmul.bf16.gmra.mxu0 %v1800
    %v5051 = vpop.f32.mrf.mxu0
    %v5052 = vadd.f32 %v4963, %v5051
    %v5053 = vpop.f32.mrf.mxu0
    %v5054 = vadd.f32 %v4965, %v5053
    %5055 = vmatmul.bf16.gmra.mxu0 %v1802
    %v5056 = vpop.f32.mrf.mxu0
    %v5057 = vadd.f32 %v4968, %v5056
    %v5058 = vpop.f32.mrf.mxu0
    %v5059 = vadd.f32 %v4970, %v5058
    %5060 = vmatmul.bf16.gmra.mxu0 %v1804
    %v5061 = vpop.f32.mrf.mxu0
    %v5062 = vadd.f32 %v4973, %v5061
    %v5063 = vpop.f32.mrf.mxu0
    %v5064 = vadd.f32 %v4975, %v5063
    %5065 = vmatmul.bf16.gmra.mxu0 %v1806
    %v5066 = vpop.f32.mrf.mxu0
    %v5067 = vadd.f32 %v4978, %v5066
    %v5068 = vpop.f32.mrf.mxu0
    %v5069 = vadd.f32 %v4980, %v5068
    %5070 = vmatmul.bf16.gmra.mxu0 %v1808
    %v5071 = vpop.f32.mrf.mxu0
    %v5072 = vadd.f32 %v4983, %v5071
    %v5073 = vpop.f32.mrf.mxu0
    %v5074 = vadd.f32 %v4985, %v5073
    %5075 = vmatmul.bf16.gmra.mxu0 %v1810
    %v5076 = vpop.f32.mrf.mxu0
    %v5077 = vadd.f32 %v4988, %v5076
    %v5078 = vpop.f32.mrf.mxu0
    %v5079 = vadd.f32 %v4990, %v5078
    %5080 = vdwg.mxu0
    %v5081 = vmul.f32 %v4177, %v4468
    %v5082 = vmul.f32 %v4178, %v4646
    %v5083 = vmul.f32 %v4179, %v4824
    %v5084 = vmul.f32 %v4180, %v5002
    %v5085 = vmul.f32 %v4181, %v4470
    %v5086 = vmul.f32 %v4182, %v4648
    %v5087 = vmul.f32 %v4183, %v4826
    %v5088 = vmul.f32 %v4184, %v5004
    %v5089 = vmul.f32 %v4185, %v4473
    %v5090 = vmul.f32 %v4186, %v4651
    %v5091 = vmul.f32 %v4187, %v4829
    %v5092 = vmul.f32 %v4188, %v5007
    %v5093 = vmul.f32 %v4189, %v4475
    %v5094 = vmul.f32 %v4190, %v4653
    %v5095 = vmul.f32 %v4191, %v4831
    %v5096 = vmul.f32 %v4192, %v5009
    %v5097 = vmul.f32 %v4193, %v4478
    %v5098 = vmul.f32 %v4194, %v4656
    %v5099 = vmul.f32 %v4195, %v4834
    %v5100 = vmul.f32 %v4196, %v5012
    %v5101 = vmul.f32 %v4197, %v4480
    %v5102 = vmul.f32 %v4198, %v4658
    %v5103 = vmul.f32 %v4199, %v4836
    %v5104 = vmul.f32 %v4200, %v5014
    %v5105 = vmul.f32 %v4201, %v4483
    %v5106 = vmul.f32 %v4202, %v4661
    %v5107 = vmul.f32 %v4203, %v4839
    %v5108 = vmul.f32 %v4204, %v5017
    %v5109 = vmul.f32 %v4205, %v4485
    %v5110 = vmul.f32 %v4206, %v4663
    %v5111 = vmul.f32 %v4207, %v4841
    %v5112 = vmul.f32 %v4208, %v5019
    %v5113 = vmul.f32 %v4209, %v4488
    %v5114 = vmul.f32 %v4210, %v4666
    %v5115 = vmul.f32 %v4211, %v4844
    %v5116 = vmul.f32 %v4212, %v5022
    %v5117 = vmul.f32 %v4213, %v4490
    %v5118 = vmul.f32 %v4214, %v4668
    %v5119 = vmul.f32 %v4215, %v4846
    %v5120 = vmul.f32 %v4216, %v5024
    %v5121 = vmul.f32 %v4217, %v4493
    %v5122 = vmul.f32 %v4218, %v4671
    %v5123 = vmul.f32 %v4219, %v4849
    %v5124 = vmul.f32 %v4220, %v5027
    %v5125 = vmul.f32 %v4221, %v4495
    %v5126 = vmul.f32 %v4222, %v4673
    %v5127 = vmul.f32 %v4223, %v4851
    %v5128 = vmul.f32 %v4224, %v5029
    %v5129 = vmul.f32 %v4225, %v4498
    %v5130 = vmul.f32 %v4226, %v4676
    %v5131 = vmul.f32 %v4227, %v4854
    %v5132 = vmul.f32 %v4228, %v5032
    %v5133 = vmul.f32 %v4229, %v4500
    %v5134 = vmul.f32 %v4230, %v4678
    %v5135 = vmul.f32 %v4231, %v4856
    %v5136 = vmul.f32 %v4232, %v5034
    %v5137 = vmul.f32 %v4233, %v4503
    %v5138 = vmul.f32 %v4234, %v4681
    %v5139 = vmul.f32 %v4235, %v4859
    %v5140 = vmul.f32 %v4236, %v5037
    %v5141 = vmul.f32 %v4237, %v4505
    %v5142 = vmul.f32 %v4238, %v4683
    %v5143 = vmul.f32 %v4239, %v4861
    %v5144 = vmul.f32 %v4240, %v5039
    %v5145 = vmul.f32 %v4241, %v4508
    %v5146 = vmul.f32 %v4242, %v4686
    %v5147 = vmul.f32 %v4243, %v4864
    %v5148 = vmul.f32 %v4244, %v5042
    %v5149 = vmul.f32 %v4245, %v4510
    %v5150 = vmul.f32 %v4246, %v4688
    %v5151 = vmul.f32 %v4247, %v4866
    %v5152 = vmul.f32 %v4248, %v5044
    %v5153 = vmul.f32 %v4249, %v4513
    %v5154 = vmul.f32 %v4250, %v4691
    %v5155 = vmul.f32 %v4251, %v4869
    %v5156 = vmul.f32 %v4252, %v5047
    %v5157 = vmul.f32 %v4253, %v4515
    %v5158 = vmul.f32 %v4254, %v4693
    %v5159 = vmul.f32 %v4255, %v4871
    %v5160 = vmul.f32 %v4256, %v5049
    %v5161 = vmul.f32 %v4257, %v4518
    %v5162 = vmul.f32 %v4258, %v4696
    %v5163 = vmul.f32 %v4259, %v4874
    %v5164 = vmul.f32 %v4260, %v5052
    %v5165 = vmul.f32 %v4261, %v4520
    %v5166 = vmul.f32 %v4262, %v4698
    %v5167 = vmul.f32 %v4263, %v4876
    %v5168 = vmul.f32 %v4264, %v5054
    %v5169 = vmul.f32 %v4265, %v4523
    %v5170 = vmul.f32 %v4266, %v4701
    %v5171 = vmul.f32 %v4267, %v4879
    %v5172 = vmul.f32 %v4268, %v5057
    %v5173 = vmul.f32 %v4269, %v4525
    %v5174 = vmul.f32 %v4270, %v4703
    %v5175 = vmul.f32 %v4271, %v4881
    %v5176 = vmul.f32 %v4272, %v5059
    %v5177 = vmul.f32 %v4273, %v4528
    %v5178 = vmul.f32 %v4274, %v4706
    %v5179 = vmul.f32 %v4275, %v4884
    %v5180 = vmul.f32 %v4276, %v5062
    %v5181 = vmul.f32 %v4277, %v4530
    %v5182 = vmul.f32 %v4278, %v4708
    %v5183 = vmul.f32 %v4279, %v4886
    %v5184 = vmul.f32 %v4280, %v5064
    %v5185 = vmul.f32 %v4281, %v4533
    %v5186 = vmul.f32 %v4282, %v4711
    %v5187 = vmul.f32 %v4283, %v4889
    %v5188 = vmul.f32 %v4284, %v5067
    %v5189 = vmul.f32 %v4285, %v4535
    %v5190 = vmul.f32 %v4286, %v4713
    %v5191 = vmul.f32 %v4287, %v4891
    %v5192 = vmul.f32 %v4288, %v5069
    %v5193 = vmul.f32 %v4289, %v4538
    %v5194 = vmul.f32 %v4290, %v4716
    %v5195 = vmul.f32 %v4291, %v4894
    %v5196 = vmul.f32 %v4292, %v5072
    %v5197 = vmul.f32 %v4293, %v4540
    %v5198 = vmul.f32 %v4294, %v4718
    %v5199 = vmul.f32 %v4295, %v4896
    %v5200 = vmul.f32 %v4296, %v5074
    %v5201 = vmul.f32 %v4297, %v4543
    %v5202 = vmul.f32 %v4298, %v4721
    %v5203 = vmul.f32 %v4299, %v4899
    %v5204 = vmul.f32 %v4300, %v5077
    %v5205 = vmul.f32 %v4301, %v4545
    %v5206 = vmul.f32 %v4302, %v4723
    %v5207 = vmul.f32 %v4303, %v4901
    %v5208 = vmul.f32 %v4304, %v5079
    %v5209 = vadd.f32 %v5081, %v5082
    %v5210 = vadd.f32 %v5085, %v5086
    %v5211 = vadd.f32 %v5089, %v5090
    %v5212 = vadd.f32 %v5093, %v5094
    %v5213 = vadd.f32 %v5097, %v5098
    %v5214 = vadd.f32 %v5101, %v5102
    %v5215 = vadd.f32 %v5105, %v5106
    %v5216 = vadd.f32 %v5109, %v5110
    %v5217 = vadd.f32 %v5113, %v5114
    %v5218 = vadd.f32 %v5117, %v5118
    %v5219 = vadd.f32 %v5121, %v5122
    %v5220 = vadd.f32 %v5125, %v5126
    %v5221 = vadd.f32 %v5129, %v5130
    %v5222 = vadd.f32 %v5133, %v5134
    %v5223 = vadd.f32 %v5137, %v5138
    %v5224 = vadd.f32 %v5141, %v5142
    %v5225 = vadd.f32 %v5145, %v5146
    %v5226 = vadd.f32 %v5149, %v5150
    %v5227 = vadd.f32 %v5153, %v5154
    %v5228 = vadd.f32 %v5157, %v5158
    %v5229 = vadd.f32 %v5161, %v5162
    %v5230 = vadd.f32 %v5165, %v5166
    %v5231 = vadd.f32 %v5169, %v5170
    %v5232 = vadd.f32 %v5173, %v5174
    %v5233 = vadd.f32 %v5177, %v5178
    %v5234 = vadd.f32 %v5181, %v5182
    %v5235 = vadd.f32 %v5185, %v5186
    %v5236 = vadd.f32 %v5189, %v5190
    %v5237 = vadd.f32 %v5193, %v5194
    %v5238 = vadd.f32 %v5197, %v5198
    %v5239 = vadd.f32 %v5201, %v5202
    %v5240 = vadd.f32 %v5205, %v5206
    %v5241 = vadd.f32 %v5209, %v5083
    %v5242 = vadd.f32 %v5210, %v5087
    %v5243 = vadd.f32 %v5211, %v5091
    %v5244 = vadd.f32 %v5212, %v5095
    %v5245 = vadd.f32 %v5213, %v5099
    %v5246 = vadd.f32 %v5214, %v5103
    %v5247 = vadd.f32 %v5215, %v5107
    %v5248 = vadd.f32 %v5216, %v5111
    %v5249 = vadd.f32 %v5217, %v5115
    %v5250 = vadd.f32 %v5218, %v5119
    %v5251 = vadd.f32 %v5219, %v5123
    %v5252 = vadd.f32 %v5220, %v5127
    %v5253 = vadd.f32 %v5221, %v5131
    %v5254 = vadd.f32 %v5222, %v5135
    %v5255 = vadd.f32 %v5223, %v5139
    %v5256 = vadd.f32 %v5224, %v5143
    %v5257 = vadd.f32 %v5225, %v5147
    %v5258 = vadd.f32 %v5226, %v5151
    %v5259 = vadd.f32 %v5227, %v5155
    %v5260 = vadd.f32 %v5228, %v5159
    %v5261 = vadd.f32 %v5229, %v5163
    %v5262 = vadd.f32 %v5230, %v5167
    %v5263 = vadd.f32 %v5231, %v5171
    %v5264 = vadd.f32 %v5232, %v5175
    %v5265 = vadd.f32 %v5233, %v5179
    %v5266 = vadd.f32 %v5234, %v5183
    %v5267 = vadd.f32 %v5235, %v5187
    %v5268 = vadd.f32 %v5236, %v5191
    %v5269 = vadd.f32 %v5237, %v5195
    %v5270 = vadd.f32 %v5238, %v5199
    %v5271 = vadd.f32 %v5239, %v5203
    %v5272 = vadd.f32 %v5240, %v5207
    %v5273 = vadd.f32 %v5241, %v5084
    %v5274 = vadd.f32 %v5242, %v5088
    %v5275 = vadd.f32 %v5243, %v5092
    %v5276 = vadd.f32 %v5244, %v5096
    %v5277 = vadd.f32 %v5245, %v5100
    %v5278 = vadd.f32 %v5246, %v5104
    %v5279 = vadd.f32 %v5247, %v5108
    %v5280 = vadd.f32 %v5248, %v5112
    %v5281 = vadd.f32 %v5249, %v5116
    %v5282 = vadd.f32 %v5250, %v5120
    %v5283 = vadd.f32 %v5251, %v5124
    %v5284 = vadd.f32 %v5252, %v5128
    %v5285 = vadd.f32 %v5253, %v5132
    %v5286 = vadd.f32 %v5254, %v5136
    %v5287 = vadd.f32 %v5255, %v5140
    %v5288 = vadd.f32 %v5256, %v5144
    %v5289 = vadd.f32 %v5257, %v5148
    %v5290 = vadd.f32 %v5258, %v5152
    %v5291 = vadd.f32 %v5259, %v5156
    %v5292 = vadd.f32 %v5260, %v5160
    %v5293 = vadd.f32 %v5261, %v5164
    %v5294 = vadd.f32 %v5262, %v5168
    %v5295 = vadd.f32 %v5263, %v5172
    %v5296 = vadd.f32 %v5264, %v5176
    %v5297 = vadd.f32 %v5265, %v5180
    %v5298 = vadd.f32 %v5266, %v5184
    %v5299 = vadd.f32 %v5267, %v5188
    %v5300 = vadd.f32 %v5268, %v5192
    %v5301 = vadd.f32 %v5269, %v5196
    %v5302 = vadd.f32 %v5270, %v5200
    %v5303 = vadd.f32 %v5271, %v5204
    %v5304 = vadd.f32 %v5272, %v5208
    %v5305 = vld [vmem:[#allocation12] sm:$0x1]
    %v5307 = vperm.slane %v5305, 0
    %v5309 = vadd.f32 %v5273, %v5307
    %v5310 = vadd.f32 %v5274, %v5307
    %v5311 = vadd.f32 %v5275, %v5307
    %v5312 = vadd.f32 %v5276, %v5307
    %v5313 = vadd.f32 %v5277, %v5307
    %v5314 = vadd.f32 %v5278, %v5307
    %v5315 = vadd.f32 %v5279, %v5307
    %v5316 = vadd.f32 %v5280, %v5307
    %v5317 = vadd.f32 %v5281, %v5307
    %v5318 = vadd.f32 %v5282, %v5307
    %v5319 = vadd.f32 %v5283, %v5307
    %v5320 = vadd.f32 %v5284, %v5307
    %v5321 = vadd.f32 %v5285, %v5307
    %v5322 = vadd.f32 %v5286, %v5307
    %v5323 = vadd.f32 %v5287, %v5307
    %v5324 = vadd.f32 %v5288, %v5307
    %v5325 = vadd.f32 %v5289, %v5307
    %v5326 = vadd.f32 %v5290, %v5307
    %v5327 = vadd.f32 %v5291, %v5307
    %v5328 = vadd.f32 %v5292, %v5307
    %v5329 = vadd.f32 %v5293, %v5307
    %v5330 = vadd.f32 %v5294, %v5307
    %v5331 = vadd.f32 %v5295, %v5307
    %v5332 = vadd.f32 %v5296, %v5307
    %v5333 = vadd.f32 %v5297, %v5307
    %v5334 = vadd.f32 %v5298, %v5307
    %v5335 = vadd.f32 %v5299, %v5307
    %v5336 = vadd.f32 %v5300, %v5307
    %v5337 = vadd.f32 %v5301, %v5307
    %v5338 = vadd.f32 %v5302, %v5307
    %v5339 = vadd.f32 %v5303, %v5307
    %v5340 = vadd.f32 %v5304, %v5307
    %vm5341 = vcmp.ge.f32.partialorder %v5309, 0.0
    %vm5342 = vcmp.ge.f32.partialorder %v5310, 0.0
    %vm5343 = vcmp.ge.f32.partialorder %v5311, 0.0
    %vm5344 = vcmp.ge.f32.partialorder %v5312, 0.0
    %vm5345 = vcmp.ge.f32.partialorder %v5313, 0.0
    %vm5346 = vcmp.ge.f32.partialorder %v5314, 0.0
    %vm5347 = vcmp.ge.f32.partialorder %v5315, 0.0
    %vm5348 = vcmp.ge.f32.partialorder %v5316, 0.0
    %vm5349 = vcmp.ge.f32.partialorder %v5317, 0.0
    %vm5350 = vcmp.ge.f32.partialorder %v5318, 0.0
    %vm5351 = vcmp.ge.f32.partialorder %v5319, 0.0
    %vm5352 = vcmp.ge.f32.partialorder %v5320, 0.0
    %vm5353 = vcmp.ge.f32.partialorder %v5321, 0.0
    %vm5354 = vcmp.ge.f32.partialorder %v5322, 0.0
    %vm5355 = vcmp.ge.f32.partialorder %v5323, 0.0
    %vm5356 = vcmp.ge.f32.partialorder %v5324, 0.0
    %vm5357 = vcmp.ge.f32.partialorder %v5325, 0.0
    %vm5358 = vcmp.ge.f32.partialorder %v5326, 0.0
    %vm5359 = vcmp.ge.f32.partialorder %v5327, 0.0
    %vm5360 = vcmp.ge.f32.partialorder %v5328, 0.0
    %vm5361 = vcmp.ge.f32.partialorder %v5329, 0.0
    %vm5362 = vcmp.ge.f32.partialorder %v5330, 0.0
    %vm5363 = vcmp.ge.f32.partialorder %v5331, 0.0
    %vm5364 = vcmp.ge.f32.partialorder %v5332, 0.0
    %vm5365 = vcmp.ge.f32.partialorder %v5333, 0.0
    %vm5366 = vcmp.ge.f32.partialorder %v5334, 0.0
    %vm5367 = vcmp.ge.f32.partialorder %v5335, 0.0
    %vm5368 = vcmp.ge.f32.partialorder %v5336, 0.0
    %vm5369 = vcmp.ge.f32.partialorder %v5337, 0.0
    %vm5370 = vcmp.ge.f32.partialorder %v5338, 0.0
    %vm5371 = vcmp.ge.f32.partialorder %v5339, 0.0
    %vm5372 = vcmp.ge.f32.partialorder %v5340, 0.0
    %v5373 = vmul.f32 %v5309, 0.01
    %v5374 = vmul.f32 %v5310, 0.01
    %v5375 = vmul.f32 %v5311, 0.01
    %v5376 = vmul.f32 %v5312, 0.01
    %v5377 = vmul.f32 %v5313, 0.01
    %v5378 = vmul.f32 %v5314, 0.01
    %v5379 = vmul.f32 %v5315, 0.01
    %v5380 = vmul.f32 %v5316, 0.01
    %v5381 = vmul.f32 %v5317, 0.01
    %v5382 = vmul.f32 %v5318, 0.01
    %v5383 = vmul.f32 %v5319, 0.01
    %v5384 = vmul.f32 %v5320, 0.01
    %v5385 = vmul.f32 %v5321, 0.01
    %v5386 = vmul.f32 %v5322, 0.01
    %v5387 = vmul.f32 %v5323, 0.01
    %v5388 = vmul.f32 %v5324, 0.01
    %v5389 = vmul.f32 %v5325, 0.01
    %v5390 = vmul.f32 %v5326, 0.01
    %v5391 = vmul.f32 %v5327, 0.01
    %v5392 = vmul.f32 %v5328, 0.01
    %v5393 = vmul.f32 %v5329, 0.01
    %v5394 = vmul.f32 %v5330, 0.01
    %v5395 = vmul.f32 %v5331, 0.01
    %v5396 = vmul.f32 %v5332, 0.01
    %v5397 = vmul.f32 %v5333, 0.01
    %v5398 = vmul.f32 %v5334, 0.01
    %v5399 = vmul.f32 %v5335, 0.01
    %v5400 = vmul.f32 %v5336, 0.01
    %v5401 = vmul.f32 %v5337, 0.01
    %v5402 = vmul.f32 %v5338, 0.01
    %v5403 = vmul.f32 %v5339, 0.01
    %v5404 = vmul.f32 %v5340, 0.01
    %v5405 = vsel %vm5341, %v5309, %v5373
    %v5406 = vsel %vm5342, %v5310, %v5374
    %v5407 = vsel %vm5343, %v5311, %v5375
    %v5408 = vsel %vm5344, %v5312, %v5376
    %v5409 = vsel %vm5345, %v5313, %v5377
    %v5410 = vsel %vm5346, %v5314, %v5378
    %v5411 = vsel %vm5347, %v5315, %v5379
    %v5412 = vsel %vm5348, %v5316, %v5380
    %v5413 = vsel %vm5349, %v5317, %v5381
    %v5414 = vsel %vm5350, %v5318, %v5382
    %v5415 = vsel %vm5351, %v5319, %v5383
    %v5416 = vsel %vm5352, %v5320, %v5384
    %v5417 = vsel %vm5353, %v5321, %v5385
    %v5418 = vsel %vm5354, %v5322, %v5386
    %v5419 = vsel %vm5355, %v5323, %v5387
    %v5420 = vsel %vm5356, %v5324, %v5388
    %v5421 = vsel %vm5357, %v5325, %v5389
    %v5422 = vsel %vm5358, %v5326, %v5390
    %v5423 = vsel %vm5359, %v5327, %v5391
    %v5424 = vsel %vm5360, %v5328, %v5392
    %v5425 = vsel %vm5361, %v5329, %v5393
    %v5426 = vsel %vm5362, %v5330, %v5394
    %v5427 = vsel %vm5363, %v5331, %v5395
    %v5428 = vsel %vm5364, %v5332, %v5396
    %v5429 = vsel %vm5365, %v5333, %v5397
    %v5430 = vsel %vm5366, %v5334, %v5398
    %v5431 = vsel %vm5367, %v5335, %v5399
    %v5432 = vsel %vm5368, %v5336, %v5400
    %v5433 = vsel %vm5369, %v5337, %v5401
    %v5434 = vsel %vm5370, %v5338, %v5402
    %v5435 = vsel %vm5371, %v5339, %v5403
    %v5436 = vsel %vm5372, %v5340, %v5404
    %v5437 = vpack.c.bf16 %v5405, %v5405
    %v5438 = vpack.c.bf16 %v5406, %v5406
    %v5439 = vpack.c.bf16 %v5407, %v5407
    %v5440 = vpack.c.bf16 %v5408, %v5408
    %v5441 = vpack.c.bf16 %v5409, %v5409
    %v5442 = vpack.c.bf16 %v5410, %v5410
    %v5443 = vpack.c.bf16 %v5411, %v5411
    %v5444 = vpack.c.bf16 %v5412, %v5412
    %v5445 = vpack.c.bf16 %v5413, %v5413
    %v5446 = vpack.c.bf16 %v5414, %v5414
    %v5447 = vpack.c.bf16 %v5415, %v5415
    %v5448 = vpack.c.bf16 %v5416, %v5416
    %v5449 = vpack.c.bf16 %v5417, %v5417
    %v5450 = vpack.c.bf16 %v5418, %v5418
    %v5451 = vpack.c.bf16 %v5419, %v5419
    %v5452 = vpack.c.bf16 %v5420, %v5420
    %v5453 = vpack.c.bf16 %v5421, %v5421
    %v5454 = vpack.c.bf16 %v5422, %v5422
    %v5455 = vpack.c.bf16 %v5423, %v5423
    %v5456 = vpack.c.bf16 %v5424, %v5424
    %v5457 = vpack.c.bf16 %v5425, %v5425
    %v5458 = vpack.c.bf16 %v5426, %v5426
    %v5459 = vpack.c.bf16 %v5427, %v5427
    %v5460 = vpack.c.bf16 %v5428, %v5428
    %v5461 = vpack.c.bf16 %v5429, %v5429
    %v5462 = vpack.c.bf16 %v5430, %v5430
    %v5463 = vpack.c.bf16 %v5431, %v5431
    %v5464 = vpack.c.bf16 %v5432, %v5432
    %v5465 = vpack.c.bf16 %v5433, %v5433
    %v5466 = vpack.c.bf16 %v5434, %v5434
    %v5467 = vpack.c.bf16 %v5435, %v5435
    %v5468 = vpack.c.bf16 %v5436, %v5436
    %5469 = vst [vmem:[#allocation2 + $0x8] sm:$0xf] %v5437
    %5470 = vst [vmem:[#allocation2 + $0x14] sm:$0xf] %v5438
    %5471 = vst [vmem:[#allocation2 + $0x20] sm:$0xf] %v5439
    %5472 = vst [vmem:[#allocation2 + $0x2c] sm:$0xf] %v5440
    %5473 = vst [vmem:[#allocation2 + $0x38] sm:$0xf] %v5441
    %5474 = vst [vmem:[#allocation2 + $0x44] sm:$0xf] %v5442
    %5475 = vst [vmem:[#allocation2 + $0x50] sm:$0xf] %v5443
    %5476 = vst [vmem:[#allocation2 + $0x5c] sm:$0xf] %v5444
    %5477 = vst [vmem:[#allocation2 + $0x68] sm:$0xf] %v5445
    %5478 = vst [vmem:[#allocation2 + $0x74] sm:$0xf] %v5446
    %5479 = vst [vmem:[#allocation2 + $0x80] sm:$0xf] %v5447
    %5480 = vst [vmem:[#allocation2 + $0x8c] sm:$0xf] %v5448
    %5481 = vst [vmem:[#allocation2 + $0x98] sm:$0xf] %v5449
    %5482 = vst [vmem:[#allocation2 + $0xa4] sm:$0xf] %v5450
    %5483 = vst [vmem:[#allocation2 + $0xb0] sm:$0xf] %v5451
    %5484 = vst [vmem:[#allocation2 + $0xbc] sm:$0xf] %v5452
    %5485 = vst [vmem:[#allocation2 + $0xc8] sm:$0xf] %v5453
    %5486 = vst [vmem:[#allocation2 + $0xd4] sm:$0xf] %v5454
    %5487 = vst [vmem:[#allocation2 + $0xe0] sm:$0xf] %v5455
    %5488 = vst [vmem:[#allocation2 + $0xec] sm:$0xf] %v5456
    %5489 = vst [vmem:[#allocation2 + $0xf8] sm:$0xf] %v5457
    %5490 = vst [vmem:[#allocation2 + $0x104] sm:$0xf] %v5458
    %5491 = vst [vmem:[#allocation2 + $0x110] sm:$0xf] %v5459
    %5492 = vst [vmem:[#allocation2 + $0x11c] sm:$0xf] %v5460
    %5493 = vst [vmem:[#allocation2 + $0x128] sm:$0xf] %v5461
    %5494 = vst [vmem:[#allocation2 + $0x134] sm:$0xf] %v5462
    %5495 = vst [vmem:[#allocation2 + $0x140] sm:$0xf] %v5463
    %5496 = vst [vmem:[#allocation2 + $0x14c] sm:$0xf] %v5464
    %5497 = vst [vmem:[#allocation2 + $0x158] sm:$0xf] %v5465
    %5498 = vst [vmem:[#allocation2 + $0x164] sm:$0xf] %v5466
    %5499 = vst [vmem:[#allocation2 + $0x170] sm:$0xf] %v5467
    %5500 = vst [vmem:[#allocation2 + $0x17c] sm:$0xf] %v5468
    %v5501 = vld [vmem:[#allocation2] sm:$0xff]
    %v5502 = vld [vmem:[#allocation2 + $0x8] sm:$0xf]
    %v5503 = vld [vmem:[#allocation2 + $0xc] sm:$0xff]
    %v5504 = vld [vmem:[#allocation2 + $0x14] sm:$0xf]
    %v5505 = vld [vmem:[#allocation2 + $0x18] sm:$0xff]
    %v5506 = vld [vmem:[#allocation2 + $0x20] sm:$0xf]
    %v5507 = vld [vmem:[#allocation2 + $0x24] sm:$0xff]
    %v5508 = vld [vmem:[#allocation2 + $0x2c] sm:$0xf]
    %v5509 = vld [vmem:[#allocation2 + $0x30] sm:$0xff]
    %v5510 = vld [vmem:[#allocation2 + $0x38] sm:$0xf]
    %v5511 = vld [vmem:[#allocation2 + $0x3c] sm:$0xff]
    %v5512 = vld [vmem:[#allocation2 + $0x44] sm:$0xf]
    %v5513 = vld [vmem:[#allocation2 + $0x48] sm:$0xff]
    %v5514 = vld [vmem:[#allocation2 + $0x50] sm:$0xf]
    %v5515 = vld [vmem:[#allocation2 + $0x54] sm:$0xff]
    %v5516 = vld [vmem:[#allocation2 + $0x5c] sm:$0xf]
    %v5517 = vld [vmem:[#allocation2 + $0x60] sm:$0xff]
    %v5518 = vld [vmem:[#allocation2 + $0x68] sm:$0xf]
    %v5519 = vld [vmem:[#allocation2 + $0x6c] sm:$0xff]
    %v5520 = vld [vmem:[#allocation2 + $0x74] sm:$0xf]
    %v5521 = vld [vmem:[#allocation2 + $0x78] sm:$0xff]
    %v5522 = vld [vmem:[#allocation2 + $0x80] sm:$0xf]
    %v5523 = vld [vmem:[#allocation2 + $0x84] sm:$0xff]
    %v5524 = vld [vmem:[#allocation2 + $0x8c] sm:$0xf]
    %v5525 = vld [vmem:[#allocation2 + $0x90] sm:$0xff]
    %v5526 = vld [vmem:[#allocation2 + $0x98] sm:$0xf]
    %v5527 = vld [vmem:[#allocation2 + $0x9c] sm:$0xff]
    %v5528 = vld [vmem:[#allocation2 + $0xa4] sm:$0xf]
    %v5529 = vld [vmem:[#allocation2 + $0xa8] sm:$0xff]
    %v5530 = vld [vmem:[#allocation2 + $0xb0] sm:$0xf]
    %v5531 = vld [vmem:[#allocation2 + $0xb4] sm:$0xff]
    %v5532 = vld [vmem:[#allocation2 + $0xbc] sm:$0xf]
    %v5533 = vld [vmem:[#allocation2 + $0xc0] sm:$0xff]
    %v5534 = vld [vmem:[#allocation2 + $0xc8] sm:$0xf]
    %v5535 = vld [vmem:[#allocation2 + $0xcc] sm:$0xff]
    %v5536 = vld [vmem:[#allocation2 + $0xd4] sm:$0xf]
    %v5537 = vld [vmem:[#allocation2 + $0xd8] sm:$0xff]
    %v5538 = vld [vmem:[#allocation2 + $0xe0] sm:$0xf]
    %v5539 = vld [vmem:[#allocation2 + $0xe4] sm:$0xff]
    %v5540 = vld [vmem:[#allocation2 + $0xec] sm:$0xf]
    %v5541 = vld [vmem:[#allocation2 + $0xf0] sm:$0xff]
    %v5542 = vld [vmem:[#allocation2 + $0xf8] sm:$0xf]
    %v5543 = vld [vmem:[#allocation2 + $0xfc] sm:$0xff]
    %v5544 = vld [vmem:[#allocation2 + $0x104] sm:$0xf]
    %v5545 = vld [vmem:[#allocation2 + $0x108] sm:$0xff]
    %v5546 = vld [vmem:[#allocation2 + $0x110] sm:$0xf]
    %v5547 = vld [vmem:[#allocation2 + $0x114] sm:$0xff]
    %v5548 = vld [vmem:[#allocation2 + $0x11c] sm:$0xf]
    %v5549 = vld [vmem:[#allocation2 + $0x120] sm:$0xff]
    %v5550 = vld [vmem:[#allocation2 + $0x128] sm:$0xf]
    %v5551 = vld [vmem:[#allocation2 + $0x12c] sm:$0xff]
    %v5552 = vld [vmem:[#allocation2 + $0x134] sm:$0xf]
    %v5553 = vld [vmem:[#allocation2 + $0x138] sm:$0xff]
    %v5554 = vld [vmem:[#allocation2 + $0x140] sm:$0xf]
    %v5555 = vld [vmem:[#allocation2 + $0x144] sm:$0xff]
    %v5556 = vld [vmem:[#allocation2 + $0x14c] sm:$0xf]
    %v5557 = vld [vmem:[#allocation2 + $0x150] sm:$0xff]
    %v5558 = vld [vmem:[#allocation2 + $0x158] sm:$0xf]
    %v5559 = vld [vmem:[#allocation2 + $0x15c] sm:$0xff]
    %v5560 = vld [vmem:[#allocation2 + $0x164] sm:$0xf]
    %v5561 = vld [vmem:[#allocation2 + $0x168] sm:$0xff]
    %v5562 = vld [vmem:[#allocation2 + $0x170] sm:$0xf]
    %v5563 = vld [vmem:[#allocation2 + $0x174] sm:$0xff]
    %v5564 = vld [vmem:[#allocation2 + $0x17c] sm:$0xf]
    %v5565 = vld [vmem:[%s8] sm:$0x3]
    %5567 = vst [vmem:[#allocation1] ss:$9 sm:$0xff] %v5565
    %v5568 = vld [vmem:[#allocation1] sm:$0xff]
    %v5569 = vld [vmem:[#allocation1 + $0x9] sm:$0xff]
    %v5636 = vunpack.c.l.b16 %v5501
    %v5637 = vunpack.c.h.b16 %v5501
    %v5638 = vunpack.c.l.b16 %v5502
    %v5639 = vunpack.c.l.b16 %v5503
    %v5640 = vunpack.c.h.b16 %v5503
    %v5641 = vunpack.c.l.b16 %v5504
    %v5642 = vunpack.c.l.b16 %v5505
    %v5643 = vunpack.c.h.b16 %v5505
    %v5644 = vunpack.c.l.b16 %v5506
    %v5645 = vunpack.c.l.b16 %v5507
    %v5646 = vunpack.c.h.b16 %v5507
    %v5647 = vunpack.c.l.b16 %v5508
    %v5648 = vunpack.c.l.b16 %v5509
    %v5649 = vunpack.c.h.b16 %v5509
    %v5650 = vunpack.c.l.b16 %v5510
    %v5651 = vunpack.c.l.b16 %v5511
    %v5652 = vunpack.c.h.b16 %v5511
    %v5653 = vunpack.c.l.b16 %v5512
    %v5654 = vunpack.c.l.b16 %v5513
    %v5655 = vunpack.c.h.b16 %v5513
    %v5656 = vunpack.c.l.b16 %v5514
    %v5657 = vunpack.c.l.b16 %v5515
    %v5658 = vunpack.c.h.b16 %v5515
    %v5659 = vunpack.c.l.b16 %v5516
    %v5660 = vunpack.c.l.b16 %v5517
    %v5661 = vunpack.c.h.b16 %v5517
    %v5662 = vunpack.c.l.b16 %v5518
    %v5663 = vunpack.c.l.b16 %v5519
    %v5664 = vunpack.c.h.b16 %v5519
    %v5665 = vunpack.c.l.b16 %v5520
    %v5666 = vunpack.c.l.b16 %v5521
    %v5667 = vunpack.c.h.b16 %v5521
    %v5668 = vunpack.c.l.b16 %v5522
    %v5669 = vunpack.c.l.b16 %v5523
    %v5670 = vunpack.c.h.b16 %v5523
    %v5671 = vunpack.c.l.b16 %v5524
    %v5672 = vunpack.c.l.b16 %v5525
    %v5673 = vunpack.c.h.b16 %v5525
    %v5674 = vunpack.c.l.b16 %v5526
    %v5675 = vunpack.c.l.b16 %v5527
    %v5676 = vunpack.c.h.b16 %v5527
    %v5677 = vunpack.c.l.b16 %v5528
    %v5678 = vunpack.c.l.b16 %v5529
    %v5679 = vunpack.c.h.b16 %v5529
    %v5680 = vunpack.c.l.b16 %v5530
    %v5681 = vunpack.c.l.b16 %v5531
    %v5682 = vunpack.c.h.b16 %v5531
    %v5683 = vunpack.c.l.b16 %v5532
    %v5684 = vunpack.c.l.b16 %v5533
    %v5685 = vunpack.c.h.b16 %v5533
    %v5686 = vunpack.c.l.b16 %v5534
    %v5687 = vunpack.c.l.b16 %v5535
    %v5688 = vunpack.c.h.b16 %v5535
    %v5689 = vunpack.c.l.b16 %v5536
    %v5690 = vunpack.c.l.b16 %v5537
    %v5691 = vunpack.c.h.b16 %v5537
    %v5692 = vunpack.c.l.b16 %v5538
    %v5693 = vunpack.c.l.b16 %v5539
    %v5694 = vunpack.c.h.b16 %v5539
    %v5695 = vunpack.c.l.b16 %v5540
    %v5696 = vunpack.c.l.b16 %v5541
    %v5697 = vunpack.c.h.b16 %v5541
    %v5698 = vunpack.c.l.b16 %v5542
    %v5699 = vunpack.c.l.b16 %v5543
    %v5700 = vunpack.c.h.b16 %v5543
    %v5701 = vunpack.c.l.b16 %v5544
    %v5702 = vunpack.c.l.b16 %v5545
    %v5703 = vunpack.c.h.b16 %v5545
    %v5704 = vunpack.c.l.b16 %v5546
    %v5705 = vunpack.c.l.b16 %v5547
    %v5706 = vunpack.c.h.b16 %v5547
    %v5707 = vunpack.c.l.b16 %v5548
    %v5708 = vunpack.c.l.b16 %v5549
    %v5709 = vunpack.c.h.b16 %v5549
    %v5710 = vunpack.c.l.b16 %v5550
    %v5711 = vunpack.c.l.b16 %v5551
    %v5712 = vunpack.c.h.b16 %v5551
    %v5713 = vunpack.c.l.b16 %v5552
    %v5714 = vunpack.c.l.b16 %v5553
    %v5715 = vunpack.c.h.b16 %v5553
    %v5716 = vunpack.c.l.b16 %v5554
    %v5717 = vunpack.c.l.b16 %v5555
    %v5718 = vunpack.c.h.b16 %v5555
    %v5719 = vunpack.c.l.b16 %v5556
    %v5720 = vunpack.c.l.b16 %v5557
    %v5721 = vunpack.c.h.b16 %v5557
    %v5722 = vunpack.c.l.b16 %v5558
    %v5723 = vunpack.c.l.b16 %v5559
    %v5724 = vunpack.c.h.b16 %v5559
    %v5725 = vunpack.c.l.b16 %v5560
    %v5726 = vunpack.c.l.b16 %v5561
    %v5727 = vunpack.c.h.b16 %v5561
    %v5728 = vunpack.c.l.b16 %v5562
    %v5729 = vunpack.c.l.b16 %v5563
    %v5730 = vunpack.c.h.b16 %v5563
    %v5731 = vunpack.c.l.b16 %v5564
    %v5732 = vpack.c.b16 %v5639, %v5636
    %v5733 = vpack.c.b16 %v5640, %v5637
    %v5734 = vpack.c.b16 %v5641, %v5638
    %v5735 = vpack.c.b16 %v5645, %v5642
    %v5736 = vpack.c.b16 %v5646, %v5643
    %v5737 = vpack.c.b16 %v5647, %v5644
    %v5738 = vpack.c.b16 %v5651, %v5648
    %v5739 = vpack.c.b16 %v5652, %v5649
    %v5740 = vpack.c.b16 %v5653, %v5650
    %v5741 = vpack.c.b16 %v5657, %v5654
    %v5742 = vpack.c.b16 %v5658, %v5655
    %v5743 = vpack.c.b16 %v5659, %v5656
    %v5744 = vpack.c.b16 %v5663, %v5660
    %v5745 = vpack.c.b16 %v5664, %v5661
    %v5746 = vpack.c.b16 %v5665, %v5662
    %v5747 = vpack.c.b16 %v5669, %v5666
    %v5748 = vpack.c.b16 %v5670, %v5667
    %v5749 = vpack.c.b16 %v5671, %v5668
    %v5750 = vpack.c.b16 %v5675, %v5672
    %v5751 = vpack.c.b16 %v5676, %v5673
    %v5752 = vpack.c.b16 %v5677, %v5674
    %v5753 = vpack.c.b16 %v5681, %v5678
    %v5754 = vpack.c.b16 %v5682, %v5679
    %v5755 = vpack.c.b16 %v5683, %v5680
    %v5756 = vpack.c.b16 %v5687, %v5684
    %v5757 = vpack.c.b16 %v5688, %v5685
    %v5758 = vpack.c.b16 %v5689, %v5686
    %v5759 = vpack.c.b16 %v5693, %v5690
    %v5760 = vpack.c.b16 %v5694, %v5691
    %v5761 = vpack.c.b16 %v5695, %v5692
    %v5762 = vpack.c.b16 %v5699, %v5696
    %v5763 = vpack.c.b16 %v5700, %v5697
    %v5764 = vpack.c.b16 %v5701, %v5698
    %v5765 = vpack.c.b16 %v5705, %v5702
    %v5766 = vpack.c.b16 %v5706, %v5703
    %v5767 = vpack.c.b16 %v5707, %v5704
    %v5768 = vpack.c.b16 %v5711, %v5708
    %v5769 = vpack.c.b16 %v5712, %v5709
    %v5770 = vpack.c.b16 %v5713, %v5710
    %v5771 = vpack.c.b16 %v5717, %v5714
    %v5772 = vpack.c.b16 %v5718, %v5715
    %v5773 = vpack.c.b16 %v5719, %v5716
    %v5774 = vpack.c.b16 %v5723, %v5720
    %v5775 = vpack.c.b16 %v5724, %v5721
    %v5776 = vpack.c.b16 %v5725, %v5722
    %v5777 = vpack.c.b16 %v5729, %v5726
    %v5778 = vpack.c.b16 %v5730, %v5727
    %v5779 = vpack.c.b16 %v5731, %v5728
    %5828 = vmatpush.bf16.msra.mxu0 %v5753
    %5829 = vmatpush.bf16.msra.mxu0 %v5750
    %5830 = vmatpush.bf16.msra.mxu0 %v5747
    %5831 = vmatpush.bf16.msra.mxu0 %v5744
    %5832 = vmatpush.bf16.msra.mxu0 %v5741
    %5833 = vmatpush.bf16.msra.mxu0 %v5738
    %5834 = vmatpush.bf16.msra.mxu0 %v5735
    %5835 = vmatpush.bf16.msra.mxu0 %v5732
    %5836 = vmatmul.bf16.gmra.mxu0 %v5568
    %v5837 = vpop.f32.mrf.mxu0
    %v5838 = vadd.f32 0.0, %v5837
    %v5839 = vpop.f32.mrf.mxu0
    %5840 = vdwg.mxu0
    %5841 = vmatpush.bf16.msra.mxu0 %v5777
    %5842 = vmatpush.bf16.msra.mxu0 %v5774
    %5843 = vmatpush.bf16.msra.mxu0 %v5771
    %5844 = vmatpush.bf16.msra.mxu0 %v5768
    %5845 = vmatpush.bf16.msra.mxu0 %v5765
    %5846 = vmatpush.bf16.msra.mxu0 %v5762
    %5847 = vmatpush.bf16.msra.mxu0 %v5759
    %5848 = vmatpush.bf16.msra.mxu0 %v5756
    %5849 = vmatmul.bf16.gmra.mxu0 %v5569
    %v5850 = vpop.f32.mrf.mxu0
    %v5851 = vadd.f32 %v5838, %v5850
    %v5852 = vpop.f32.mrf.mxu0
    %5853 = vdwg.mxu0
    %5854 = vmatpush.bf16.msra.mxu0 %v5754
    %5855 = vmatpush.bf16.msra.mxu0 %v5751
    %5856 = vmatpush.bf16.msra.mxu0 %v5748
    %5857 = vmatpush.bf16.msra.mxu0 %v5745
    %5858 = vmatpush.bf16.msra.mxu0 %v5742
    %5859 = vmatpush.bf16.msra.mxu0 %v5739
    %5860 = vmatpush.bf16.msra.mxu0 %v5736
    %5861 = vmatpush.bf16.msra.mxu0 %v5733
    %5862 = vmatmul.bf16.gmra.mxu0 %v5568
    %v5863 = vpop.f32.mrf.mxu0
    %v5864 = vadd.f32 0.0, %v5863
    %v5865 = vpop.f32.mrf.mxu0
    %5866 = vdwg.mxu0
    %5867 = vmatpush.bf16.msra.mxu0 %v5778
    %5868 = vmatpush.bf16.msra.mxu0 %v5775
    %5869 = vmatpush.bf16.msra.mxu0 %v5772
    %5870 = vmatpush.bf16.msra.mxu0 %v5769
    %5871 = vmatpush.bf16.msra.mxu0 %v5766
    %5872 = vmatpush.bf16.msra.mxu0 %v5763
    %5873 = vmatpush.bf16.msra.mxu0 %v5760
    %5874 = vmatpush.bf16.msra.mxu0 %v5757
    %5875 = vmatmul.bf16.gmra.mxu0 %v5569
    %v5876 = vpop.f32.mrf.mxu0
    %v5877 = vadd.f32 %v5864, %v5876
    %v5878 = vpop.f32.mrf.mxu0
    %5879 = vdwg.mxu0
    %5880 = vmatpush.bf16.msra.mxu0 %v5755
    %5881 = vmatpush.bf16.msra.mxu0 %v5752
    %5882 = vmatpush.bf16.msra.mxu0 %v5749
    %5883 = vmatpush.bf16.msra.mxu0 %v5746
    %5884 = vmatpush.bf16.msra.mxu0 %v5743
    %5885 = vmatpush.bf16.msra.mxu0 %v5740
    %5886 = vmatpush.bf16.msra.mxu0 %v5737
    %5887 = vmatpush.bf16.msra.mxu0 %v5734
    %5888 = vmatmul.bf16.gmra.mxu0 %v5568
    %v5889 = vpop.f32.mrf.mxu0
    %v5890 = vadd.f32 0.0, %v5889
    %v5891 = vpop.f32.mrf.mxu0
    %5892 = vdwg.mxu0
    %5893 = vmatpush.bf16.msra.mxu0 %v5779
    %5894 = vmatpush.bf16.msra.mxu0 %v5776
    %5895 = vmatpush.bf16.msra.mxu0 %v5773
    %5896 = vmatpush.bf16.msra.mxu0 %v5770
    %5897 = vmatpush.bf16.msra.mxu0 %v5767
    %5898 = vmatpush.bf16.msra.mxu0 %v5764
    %5899 = vmatpush.bf16.msra.mxu0 %v5761
    %5900 = vmatpush.bf16.msra.mxu0 %v5758
    %5901 = vmatmul.bf16.gmra.mxu0 %v5569
    %v5902 = vpop.f32.mrf.mxu0
    %v5903 = vadd.f32 %v5890, %v5902
    %v5904 = vpop.f32.mrf.mxu0
    %5905 = vdwg.mxu0
    %v5906 = vpack.c.bf16 %v5851, %v5851
    %v5907 = vpack.c.bf16 %v5877, %v5877
    %v5908 = vpack.c.bf16 %v5903, %v5903
    %v5909 = vld [vmem:[#allocation14] sm:$0xf]
    %v5910 = vld [vmem:[#allocation14 + $0x4] sm:$0xf]
    %v5911 = vld [vmem:[#allocation14 + $0x8] sm:$0xf]
    %v5912 = vld [vmem:[#allocation14 + $0xc] sm:$0xf]
    %v5913 = vld [vmem:[#allocation14 + $0x10] sm:$0xf]
    %v5914 = vld [vmem:[#allocation14 + $0x14] sm:$0xf]
    %v5915 = vld [vmem:[#allocation14 + $0x18] sm:$0xf]
    %v5916 = vld [vmem:[#allocation14 + $0x1c] sm:$0xf]
    %v5917 = vld [vmem:[#allocation14 + $0x20] sm:$0xf]
    %v5918 = vld [vmem:[#allocation14 + $0x24] sm:$0xf]
    %v5919 = vld [vmem:[#allocation14 + $0x28] sm:$0xf]
    %v5920 = vld [vmem:[#allocation14 + $0x2c] sm:$0xf]
    %v5921 = vld [vmem:[#allocation14 + $0x30] sm:$0xf]
    %v5922 = vld [vmem:[#allocation14 + $0x34] sm:$0xf]
    %v5923 = vld [vmem:[#allocation14 + $0x38] sm:$0xf]
    %v5924 = vld [vmem:[#allocation14 + $0x3c] sm:$0xf]
    %v5925 = vld [vmem:[#allocation14 + $0x40] sm:$0xf]
    %v5926 = vld [vmem:[#allocation14 + $0x44] sm:$0xf]
    %v5927 = vld [vmem:[#allocation14 + $0x48] sm:$0xf]
    %v5928 = vld [vmem:[#allocation14 + $0x4c] sm:$0xf]
    %v5929 = vld [vmem:[#allocation14 + $0x50] sm:$0xf]
    %v5930 = vld [vmem:[#allocation14 + $0x54] sm:$0xf]
    %v5931 = vld [vmem:[#allocation14 + $0x58] sm:$0xf]
    %v5932 = vld [vmem:[#allocation14 + $0x5c] sm:$0xf]
    %v5933 = vld [vmem:[#allocation14 + $0x60] sm:$0xf]
    %v5934 = vld [vmem:[#allocation14 + $0x64] sm:$0xf]
    %v5935 = vld [vmem:[#allocation14 + $0x68] sm:$0xf]
    %v5936 = vld [vmem:[#allocation14 + $0x6c] sm:$0xf]
    %v5937 = vld [vmem:[#allocation14 + $0x70] sm:$0xf]
    %v5938 = vld [vmem:[#allocation14 + $0x74] sm:$0xf]
    %v5939 = vld [vmem:[#allocation14 + $0x78] sm:$0xf]
    %v5940 = vld [vmem:[#allocation14 + $0x7c] sm:$0xf]
    %v5941 = vld [vmem:[#allocation14 + $0x80] sm:$0xf]
    %v5942 = vld [vmem:[#allocation14 + $0x84] sm:$0xf]
    %v5943 = vld [vmem:[#allocation14 + $0x88] sm:$0xf]
    %v5944 = vld [vmem:[#allocation14 + $0x8c] sm:$0xf]
    %v5945 = vld [vmem:[#allocation14 + $0x90] sm:$0xf]
    %v5946 = vld [vmem:[#allocation14 + $0x94] sm:$0xf]
    %v5947 = vld [vmem:[#allocation14 + $0x98] sm:$0xf]
    %v5948 = vld [vmem:[#allocation14 + $0x9c] sm:$0xf]
    %v5949 = vld [vmem:[#allocation14 + $0xa0] sm:$0xf]
    %v5950 = vld [vmem:[#allocation14 + $0xa4] sm:$0xf]
    %v5951 = vld [vmem:[#allocation14 + $0xa8] sm:$0xf]
    %v5952 = vld [vmem:[#allocation14 + $0xac] sm:$0xf]
    %v5953 = vld [vmem:[#allocation14 + $0xb0] sm:$0xf]
    %v5954 = vld [vmem:[#allocation14 + $0xb4] sm:$0xf]
    %v5955 = vld [vmem:[#allocation14 + $0xb8] sm:$0xf]
    %v5956 = vld [vmem:[#allocation14 + $0xbc] sm:$0xf]
    %v5957 = vld [vmem:[%s9] sm:$0x3]
    %v5958 = vld [vmem:[%s11] sm:$0x1]
    %5960 = vset.pattern.permute.xlu0 0
    %5961 = vperm.xlu0 %5960, %v5957
    %v5962 = vpop.permute.xlu0 %5961
    %v5965 = vperm.slane %v5958, 0
    %v5967 = vmul.f32 %v5962, %v5965
    %v6016 = vunpack.c.l.b16 %v5909
    %v6017 = vunpack.c.l.b16 %v5910
    %v6018 = vunpack.c.l.b16 %v5911
    %v6019 = vunpack.c.l.b16 %v5912
    %v6020 = vunpack.c.l.b16 %v5913
    %v6021 = vunpack.c.l.b16 %v5914
    %v6022 = vunpack.c.l.b16 %v5915
    %v6023 = vunpack.c.l.b16 %v5916
    %v6024 = vunpack.c.l.b16 %v5917
    %v6025 = vunpack.c.l.b16 %v5918
    %v6026 = vunpack.c.l.b16 %v5919
    %v6027 = vunpack.c.l.b16 %v5920
    %v6028 = vunpack.c.l.b16 %v5921
    %v6029 = vunpack.c.l.b16 %v5922
    %v6030 = vunpack.c.l.b16 %v5923
    %v6031 = vunpack.c.l.b16 %v5924
    %v6032 = vunpack.c.l.b16 %v5925
    %v6033 = vunpack.c.l.b16 %v5926
    %v6034 = vunpack.c.l.b16 %v5927
    %v6035 = vunpack.c.l.b16 %v5928
    %v6036 = vunpack.c.l.b16 %v5929
    %v6037 = vunpack.c.l.b16 %v5930
    %v6038 = vunpack.c.l.b16 %v5931
    %v6039 = vunpack.c.l.b16 %v5932
    %v6040 = vunpack.c.l.b16 %v5933
    %v6041 = vunpack.c.l.b16 %v5934
    %v6042 = vunpack.c.l.b16 %v5935
    %v6043 = vunpack.c.l.b16 %v5936
    %v6044 = vunpack.c.l.b16 %v5937
    %v6045 = vunpack.c.l.b16 %v5938
    %v6046 = vunpack.c.l.b16 %v5939
    %v6047 = vunpack.c.l.b16 %v5940
    %v6048 = vunpack.c.l.b16 %v5941
    %v6049 = vunpack.c.l.b16 %v5942
    %v6050 = vunpack.c.l.b16 %v5943
    %v6051 = vunpack.c.l.b16 %v5944
    %v6052 = vunpack.c.l.b16 %v5945
    %v6053 = vunpack.c.l.b16 %v5946
    %v6054 = vunpack.c.l.b16 %v5947
    %v6055 = vunpack.c.l.b16 %v5948
    %v6056 = vunpack.c.l.b16 %v5949
    %v6057 = vunpack.c.l.b16 %v5950
    %v6058 = vunpack.c.l.b16 %v5951
    %v6059 = vunpack.c.l.b16 %v5952
    %v6060 = vunpack.c.l.b16 %v5953
    %v6061 = vunpack.c.l.b16 %v5954
    %v6062 = vunpack.c.l.b16 %v5955
    %v6063 = vunpack.c.l.b16 %v5956
    %v6064 = vpack.c.b16 %v6017, %v6016
    %v6065 = vpack.c.b16 %v6019, %v6018
    %v6066 = vpack.c.b16 %v6021, %v6020
    %v6067 = vpack.c.b16 %v6023, %v6022
    %v6068 = vpack.c.b16 %v6025, %v6024
    %v6069 = vpack.c.b16 %v6027, %v6026
    %v6070 = vpack.c.b16 %v6029, %v6028
    %v6071 = vpack.c.b16 %v6031, %v6030
    %v6072 = vpack.c.b16 %v6033, %v6032
    %v6073 = vpack.c.b16 %v6035, %v6034
    %v6074 = vpack.c.b16 %v6037, %v6036
    %v6075 = vpack.c.b16 %v6039, %v6038
    %v6076 = vpack.c.b16 %v6041, %v6040
    %v6077 = vpack.c.b16 %v6043, %v6042
    %v6078 = vpack.c.b16 %v6045, %v6044
    %v6079 = vpack.c.b16 %v6047, %v6046
    %v6080 = vpack.c.b16 %v6049, %v6048
    %v6081 = vpack.c.b16 %v6051, %v6050
    %v6082 = vpack.c.b16 %v6053, %v6052
    %v6083 = vpack.c.b16 %v6055, %v6054
    %v6084 = vpack.c.b16 %v6057, %v6056
    %v6085 = vpack.c.b16 %v6059, %v6058
    %v6086 = vpack.c.b16 %v6061, %v6060
    %v6087 = vpack.c.b16 %v6063, %v6062
    %6112 = vmatpush.bf16.msra.mxu0 %v6071
    %6113 = vmatpush.bf16.msra.mxu0 %v6070
    %6114 = vmatpush.bf16.msra.mxu0 %v6069
    %6115 = vmatpush.bf16.msra.mxu0 %v6068
    %6116 = vmatpush.bf16.msra.mxu0 %v6067
    %6117 = vmatpush.bf16.msra.mxu0 %v6066
    %6118 = vmatpush.bf16.msra.mxu0 %v6065
    %6119 = vmatpush.bf16.msra.mxu0 %v6064
    %6120 = vmatmul.bf16.gmra.mxu0 %v5906
    %v6121 = vpop.f32.mrf.mxu0
    %v6122 = vadd.f32 %v5967, %v6121
    %v6123 = vpop.f32.mrf.mxu0
    %6124 = vdwg.mxu0
    %6125 = vmatpush.bf16.msra.mxu0 %v6079
    %6126 = vmatpush.bf16.msra.mxu0 %v6078
    %6127 = vmatpush.bf16.msra.mxu0 %v6077
    %6128 = vmatpush.bf16.msra.mxu0 %v6076
    %6129 = vmatpush.bf16.msra.mxu0 %v6075
    %6130 = vmatpush.bf16.msra.mxu0 %v6074
    %6131 = vmatpush.bf16.msra.mxu0 %v6073
    %6132 = vmatpush.bf16.msra.mxu0 %v6072
    %6133 = vmatmul.bf16.gmra.mxu0 %v5907
    %v6134 = vpop.f32.mrf.mxu0
    %v6135 = vadd.f32 %v6122, %v6134
    %v6136 = vpop.f32.mrf.mxu0
    %6137 = vdwg.mxu0
    %6138 = vmatpush.bf16.msra.mxu0 %v6087
    %6139 = vmatpush.bf16.msra.mxu0 %v6086
    %6140 = vmatpush.bf16.msra.mxu0 %v6085
    %6141 = vmatpush.bf16.msra.mxu0 %v6084
    %6142 = vmatpush.bf16.msra.mxu0 %v6083
    %6143 = vmatpush.bf16.msra.mxu0 %v6082
    %6144 = vmatpush.bf16.msra.mxu0 %v6081
    %6145 = vmatpush.bf16.msra.mxu0 %v6080
    %6146 = vmatmul.bf16.gmra.mxu0 %v5908
    %v6147 = vpop.f32.mrf.mxu0
    %v6148 = vadd.f32 %v6135, %v6147
    %v6149 = vpop.f32.mrf.mxu0
    %6150 = vdwg.mxu0
    %v6151 = vld [vmem:[%s12] sm:$0x1]
    %v6153 = vperm.slane %v6151, 0
    %v6155 = vadd.f32 %v6148, %v6153
    %vm6156 = vcmp.ge.f32.partialorder %v6155, 0.0
    %v6157 = vmul.f32 %v6155, 0.01
    %v6158 = vsel %vm6156, %v6155, %v6157
    %v6159 = vpack.c.bf16 %v6158, %v6158
    %v6160 = vld [vmem:[#allocation15] sm:$0xf]
    %v6161 = vld [vmem:[#allocation15 + $0x4] sm:$0xf]
    %v6162 = vld [vmem:[#allocation15 + $0x8] sm:$0xf]
    %v6163 = vld [vmem:[#allocation15 + $0xc] sm:$0xf]
    %v6164 = vld [vmem:[#allocation15 + $0x10] sm:$0xf]
    %v6165 = vld [vmem:[#allocation15 + $0x14] sm:$0xf]
    %v6166 = vld [vmem:[#allocation15 + $0x18] sm:$0xf]
    %v6167 = vld [vmem:[#allocation15 + $0x1c] sm:$0xf]
    %v6168 = vld [vmem:[#allocation15 + $0x20] sm:$0xf]
    %v6169 = vld [vmem:[#allocation15 + $0x24] sm:$0xf]
    %v6170 = vld [vmem:[#allocation15 + $0x28] sm:$0xf]
    %v6171 = vld [vmem:[#allocation15 + $0x2c] sm:$0xf]
    %v6172 = vld [vmem:[#allocation15 + $0x30] sm:$0xf]
    %v6173 = vld [vmem:[#allocation15 + $0x34] sm:$0xf]
    %v6174 = vld [vmem:[#allocation15 + $0x38] sm:$0xf]
    %v6175 = vld [vmem:[#allocation15 + $0x3c] sm:$0xf]
    %v6176 = vld [vmem:[%s14] sm:$0x1]
    %v6178 = vperm.slane %v6176, 0
    %v6196 = vunpack.c.l.b16 %v6160
    %v6197 = vunpack.c.l.b16 %v6161
    %v6198 = vunpack.c.l.b16 %v6162
    %v6199 = vunpack.c.l.b16 %v6163
    %v6200 = vunpack.c.l.b16 %v6164
    %v6201 = vunpack.c.l.b16 %v6165
    %v6202 = vunpack.c.l.b16 %v6166
    %v6203 = vunpack.c.l.b16 %v6167
    %v6204 = vunpack.c.l.b16 %v6168
    %v6205 = vunpack.c.l.b16 %v6169
    %v6206 = vunpack.c.l.b16 %v6170
    %v6207 = vunpack.c.l.b16 %v6171
    %v6208 = vunpack.c.l.b16 %v6172
    %v6209 = vunpack.c.l.b16 %v6173
    %v6210 = vunpack.c.l.b16 %v6174
    %v6211 = vunpack.c.l.b16 %v6175
    %v6212 = vpack.c.b16 %v6197, %v6196
    %v6213 = vpack.c.b16 %v6199, %v6198
    %v6214 = vpack.c.b16 %v6201, %v6200
    %v6215 = vpack.c.b16 %v6203, %v6202
    %v6216 = vpack.c.b16 %v6205, %v6204
    %v6217 = vpack.c.b16 %v6207, %v6206
    %v6218 = vpack.c.b16 %v6209, %v6208
    %v6219 = vpack.c.b16 %v6211, %v6210
    %6228 = vmatpush.bf16.msra.mxu0 %v6219
    %6229 = vmatpush.bf16.msra.mxu0 %v6218
    %6230 = vmatpush.bf16.msra.mxu0 %v6217
    %6231 = vmatpush.bf16.msra.mxu0 %v6216
    %6232 = vmatpush.bf16.msra.mxu0 %v6215
    %6233 = vmatpush.bf16.msra.mxu0 %v6214
    %6234 = vmatpush.bf16.msra.mxu0 %v6213
    %6235 = vmatpush.bf16.msra.mxu0 %v6212
    %6236 = vmatmul.bf16.gmra.mxu0 %v6159
    %v6237 = vpop.f32.mrf.mxu0
    %v6238 = vadd.f32 %v6178, %v6237
    %v6239 = vpop.f32.mrf.mxu0
    %6240 = vdwg.mxu0
    %vm6241 = vcmp.ge.f32.partialorder %v6238, 0.0
    %v6242 = vmul.f32 %v6238, 0.01
    %v6243 = vsel %vm6241, %v6238, %v6242
    %v6244 = vpack.c.bf16 %v6243, %v6243
    %v6245 = vld [vmem:[#allocation17] sm:$0xf]
    %v6246 = vld [vmem:[#allocation17 + $0x4] sm:$0xf]
    %v6247 = vld [vmem:[#allocation17 + $0x8] sm:$0xf]
    %v6248 = vld [vmem:[#allocation17 + $0xc] sm:$0xf]
    %v6249 = vld [vmem:[#allocation17 + $0x10] sm:$0xf]
    %v6250 = vld [vmem:[#allocation17 + $0x14] sm:$0xf]
    %v6251 = vld [vmem:[#allocation17 + $0x18] sm:$0xf]
    %v6252 = vld [vmem:[#allocation17 + $0x1c] sm:$0xf]
    %v6253 = vld [vmem:[#allocation17 + $0x20] sm:$0xf]
    %v6254 = vld [vmem:[#allocation17 + $0x24] sm:$0xf]
    %v6255 = vld [vmem:[#allocation17 + $0x28] sm:$0xf]
    %v6256 = vld [vmem:[#allocation17 + $0x2c] sm:$0xf]
    %v6257 = vld [vmem:[#allocation17 + $0x30] sm:$0xf]
    %v6258 = vld [vmem:[#allocation17 + $0x34] sm:$0xf]
    %v6259 = vld [vmem:[#allocation17 + $0x38] sm:$0xf]
    %v6260 = vld [vmem:[#allocation17 + $0x3c] sm:$0xf]
    %v6261 = vld [vmem:[%s16] sm:$0x1]
    %v6263 = vperm.slane %v6261, 0
    %v6281 = vunpack.c.l.b16 %v6245
    %v6282 = vunpack.c.l.b16 %v6246
    %v6283 = vunpack.c.l.b16 %v6247
    %v6284 = vunpack.c.l.b16 %v6248
    %v6285 = vunpack.c.l.b16 %v6249
    %v6286 = vunpack.c.l.b16 %v6250
    %v6287 = vunpack.c.l.b16 %v6251
    %v6288 = vunpack.c.l.b16 %v6252
    %v6289 = vunpack.c.l.b16 %v6253
    %v6290 = vunpack.c.l.b16 %v6254
    %v6291 = vunpack.c.l.b16 %v6255
    %v6292 = vunpack.c.l.b16 %v6256
    %v6293 = vunpack.c.l.b16 %v6257
    %v6294 = vunpack.c.l.b16 %v6258
    %v6295 = vunpack.c.l.b16 %v6259
    %v6296 = vunpack.c.l.b16 %v6260
    %v6297 = vpack.c.b16 %v6282, %v6281
    %v6298 = vpack.c.b16 %v6284, %v6283
    %v6299 = vpack.c.b16 %v6286, %v6285
    %v6300 = vpack.c.b16 %v6288, %v6287
    %v6301 = vpack.c.b16 %v6290, %v6289
    %v6302 = vpack.c.b16 %v6292, %v6291
    %v6303 = vpack.c.b16 %v6294, %v6293
    %v6304 = vpack.c.b16 %v6296, %v6295
    %6313 = vmatpush.bf16.msra.mxu0 %v6304
    %6314 = vmatpush.bf16.msra.mxu0 %v6303
    %6315 = vmatpush.bf16.msra.mxu0 %v6302
    %6316 = vmatpush.bf16.msra.mxu0 %v6301
    %6317 = vmatpush.bf16.msra.mxu0 %v6300
    %6318 = vmatpush.bf16.msra.mxu0 %v6299
    %6319 = vmatpush.bf16.msra.mxu0 %v6298
    %6320 = vmatpush.bf16.msra.mxu0 %v6297
    %6321 = vmatmul.bf16.gmra.mxu0 %v6244
    %v6322 = vpop.f32.mrf.mxu0
    %v6323 = vadd.f32 %v6263, %v6322
    %v6324 = vpop.f32.mrf.mxu0
    %6325 = vdwg.mxu0
    %6326 = vst [vmem:[#allocation18] sm:$0x3] %v6323
    // Predicated region
    $region106: #{tpu_custom_call.1} parent=1 // pred_check
      _
    $region107: #{tpu_custom_call.1} parent=1 // pred_check_branch
      %6328 = sbr.rel (0) target = $region109
    $region108: #{tpu_custom_call.1} parent=1 // pred_region
      %6330 = vsyncadd [#allocation5], 0
      %s6332 = sshll.u32 [#allocation18], 4
      %s6333 = int_to_ptr.vmem [resolvable:$true] %s6332
      %s6334 = sshll.u32 %s17, 4
      %s6335 = int_to_ptr.hbm [resolvable:$true] %s6334
      %6337 = dma.vmem_to_hbm [thread:$0]  %s6333, 32, %s6335, [#allocation5]
    $region109: #{tpu_custom_call.1} parent=1 // pred_fallthru
      _
    // Predicated region
    $region110: #{tpu_custom_call.1} parent=1 // pred_check
      _
    $region111: #{tpu_custom_call.1} parent=1 // pred_check_branch
      %6339 = sbr.rel (0) target = $region113
    $region112: #{tpu_custom_call.1} parent=1 // pred_region
      %6341 = dma.done [#allocation5], 32
    $region113: #{tpu_custom_call.1} parent=1 // pred_fallthru
      _
    %6342 = vsyncpa [#allocation4], 1
    %6343 = vsyncpa [#allocation7], 1
    %6344 = vsyncpa [#allocation10], 1
    %6345 = vsyncpa [#allocation13], 1
    %6346 = vsyncpa [#allocation16], 1
    %6347 = vsyncpa [#allocation5], 1

</llo_original>
